<compile_context>
chip_gen: v7x
topology: tpu7x:2x2x1
jax: 0.10.0
libtpu: 0.0.40
codegen_flags: <defaults>
</compile_context>

<pallas_src>
import jax
import jax.numpy as jnp
from jax import lax
from jax.experimental import pallas as pl
from jax.experimental.pallas import tpu as pltpu

L, N, E = 10, 2, 24          # seq, batch, d_model  (post-view (10, 2, 24))
R = N * L                    # 20 working rows (batch-major)
FF = 2048                    # TransformerEncoderLayer default dim_feedforward
C = 2                        # conv channels
D = 20                       # dense size
EPS = 1e-5                   # LayerNorm default eps

_ARG_ORDER = ("dft_cos", "dft_sin",
              "wq_t", "bq", "wk_t", "bk", "wv_t", "bv", "wo_t", "bo",
              "g1", "be1", "g2", "be2",
              "w1_t", "b1", "w2_t", "b2",
              "wd_pad", "bd", "wc", "bc")
_SMEM_ARGS = ("wc", "bc")    # tiny conv scalars -> SMEM (scalar reads feed vector FMA)

# Host-side constant row gather making the kernel batch-major (row = n*L + l):
#   rows  0:5  <- src[0,2,4,6,8]  (n=0, l=0..4, abs branch)
#   rows  5:10 <- src[0,2,4,6,8]  (n=0, l=5..9, |fft| branch)
#   rows 10:15 <- src[1,3,5,7,9]  (n=1, l=0..4, abs branch)
#   rows 15:20 <- src[1,3,5,7,9]  (n=1, l=5..9, |fft| branch)
_ROW_GATHER = (0, 2, 4, 6, 8, 0, 2, 4, 6, 8, 1, 3, 5, 7, 9, 1, 3, 5, 7, 9)


def _layer_norm(h, g, b):
    mu = jnp.mean(h, axis=-1, keepdims=True)
    var = jnp.mean(jnp.square(h - mu), axis=-1, keepdims=True)
    return (h - mu) * lax.rsqrt(var + EPS) * g + b


def fused_forward_kernel(src20_ref, dftc_ref, dfts_ref,
                         wq_ref, bq_ref, wk_ref, bk_ref, wv_ref, bv_ref,
                         wo_ref, bo_ref,
                         g1_ref, be1_ref, g2_ref, be2_ref,
                         w1_ref, b1_ref, w2_ref, b2_ref,
                         wd_ref, bd_ref,
                         wc_ref, bc_ref,
                         o_ref):
    src20 = src20_ref[...]                                       # (20, 24) f32

    # |FFT| along the last axis via an exact 24-point DFT (two constant matmuls).
    re = jnp.dot(src20, dftc_ref[...], preferred_element_type=jnp.float32)
    im = jnp.dot(src20, dfts_ref[...], preferred_element_type=jnp.float32)
    mag = jnp.sqrt(re * re + im * im)

    # Encoder input: batch-major rows; rows 0:5 / 10:15 take |src|, rows 5:10 / 15:20
    # take |fft(src)|.  torch.relu on an absolute value is a no-op -> folded away.
    row_id = lax.broadcasted_iota(jnp.int32, (R, E), 0)
    use_abs = (row_id < 5) | ((row_id >= 10) & (row_id < 15))
    x = jnp.where(use_abs, jnp.abs(src20), mag)                  # (20, 24)

    # ---- self-attention: nhead = 24 -> head_dim = 1 -> scale = 1 ----
    q = jnp.dot(x, wq_ref[...], preferred_element_type=jnp.float32) + bq_ref[...]
    k = jnp.dot(x, wk_ref[...], preferred_element_type=jnp.float32) + bk_ref[...]
    v = jnp.dot(x, wv_ref[...], preferred_element_type=jnp.float32) + bv_ref[...]

    ctx_parts = []
    for n in range(N):                       # unrolled: one (10,10,24) softmax / batch
        r0 = n * L
        qn = q[r0:r0 + L, :]
        kn = k[r0:r0 + L, :]
        vn = v[r0:r0 + L, :]
        s = qn[:, None, :] * kn[None, :, :]                      # scores[i, j, h]
        s = s - jnp.max(s, axis=1, keepdims=True)
        p = jnp.exp(s)
        a = p / jnp.sum(p, axis=1, keepdims=True)                # softmax over keys j
        ctx_parts.append(jnp.sum(a * vn[None, :, :], axis=1))    # (10, 24)
    ctx = jnp.concatenate(ctx_parts, axis=0)                     # (20, 24)

    attn_out = jnp.dot(ctx, wo_ref[...],
                       preferred_element_type=jnp.float32) + bo_ref[...]

    # residual + LayerNorm1  (dropout = identity in eval mode)
    h = _layer_norm(x + attn_out, g1_ref[...], be1_ref[...])

    # ---- feed-forward 24 -> 2048 -> 24 (f32; tiny, precision-first) ----
    f = jnp.dot(h, w1_ref[...], preferred_element_type=jnp.float32) + b1_ref[...]
    f = jnp.maximum(f, 0.0)
    f = jnp.dot(f, w2_ref[...], preferred_element_type=jnp.float32) + b2_ref[...]
    h = _layer_norm(h + f, g2_ref[...], be2_ref[...])            # (20, 24)

    # ---- relu -> Conv1d(2,2,1) -> relu -> view(24,20) -> Linear(20,20) -> [-1] -> relu
    # Only row 23 of the (24,20) view reaches the output; it equals
    # conv[b=9, out_ch=1, pos=4:24], whose inputs are relu(h) at (l=9, n=0)=row 9 and
    # (l=9, n=1)=row 19.  dense(x)[-1] == dense(x[-1]).  The dense weight is padded with
    # 4 leading zero rows host-side, so lanes 0..3 of `row` contribute nothing.
    hA = jnp.maximum(h[L - 1:L, :], 0.0)                         # (1, 24)
    hB = jnp.maximum(h[R - 1:R, :], 0.0)                         # (1, 24)
    row = wc_ref[1, 0] * hA + wc_ref[1, 1] * hB + bc_ref[1]      # conv out-channel 1
    row = jnp.maximum(row, 0.0)
    y = jnp.dot(row, wd_ref[...], preferred_element_type=jnp.float32) + bd_ref[...]
    o_ref[...] = jnp.maximum(y, 0.0)                             # (1, 20)


@jax.jit
def transformer_forward(src, s_current_estimated, params):
    """JAX/Pallas equivalent of TransformerModel.forward(src, s_current_estimated)."""
    del s_current_estimated                  # unused by the reference forward()
    src = src.astype(jnp.float32)
    src20 = src[jnp.asarray(_ROW_GATHER, dtype=jnp.int32), :]    # (20, 24), batch-major

    args = (src20,) + tuple(params[k] for k in _ARG_ORDER)
    in_specs = [pl.BlockSpec(memory_space=pltpu.MemorySpace.VMEM)]       # src20
    for k in _ARG_ORDER:
        space = (pltpu.MemorySpace.SMEM if k in _SMEM_ARGS
                 else pltpu.MemorySpace.VMEM)
        in_specs.append(pl.BlockSpec(memory_space=space))

    out = pl.pallas_call(
        fused_forward_kernel,
        out_shape=jax.ShapeDtypeStruct((1, D), jnp.float32),
        in_specs=in_specs,
        out_specs=pl.BlockSpec(memory_space=pltpu.MemorySpace.VMEM),
    )(*args)
    return out.reshape(D)


def init_torch_params(seed: int = 42):
    """Random parameters in PyTorch's native layouts (as exported from the module)."""
    ks = jax.random.split(jax.random.PRNGKey(seed), 12)

    def w(k, shape, fan_in):
        return jax.random.normal(k, shape, jnp.float32) / jnp.sqrt(jnp.float32(fan_in))

    return dict(
        in_proj_w=w(ks[0], (3 * E, E), E), in_proj_b=w(ks[1], (3 * E,), E),
        out_proj_w=w(ks[2], (E, E), E), out_proj_b=w(ks[3], (E,), E),
        ln1_g=jnp.ones((E,), jnp.float32), ln1_b=jnp.zeros((E,), jnp.float32),
        ln2_g=jnp.ones((E,), jnp.float32), ln2_b=jnp.zeros((E,), jnp.float32),
        lin1_w=w(ks[4], (FF, E), E), lin1_b=w(ks[5], (FF,), E),
        lin2_w=w(ks[6], (E, FF), FF), lin2_b=w(ks[7], (E,), FF),
        conv_w=w(ks[8], (C, C, 1), C), conv_b=w(ks[9], (C,), C),
        dense_w=w(ks[10], (D, D), D), dense_b=w(ks[11], (D,), D),
    )


def prepare_params(tp):
    """One-time host-side repack: (in,out) transposes, split q/k/v, zero-padded dense
    weight, constant 24-point DFT matrices, conv scalars for SMEM."""
    t = jnp.arange(E)
    ang = (2.0 * jnp.pi / E) * ((t[:, None] * t[None, :]) % E).astype(jnp.float32)
    wq = tp["in_proj_w"][0:E]
    wk = tp["in_proj_w"][E:2 * E]
    wv = tp["in_proj_w"][2 * E:3 * E]
    bq = tp["in_proj_b"][0:E]
    bk = tp["in_proj_b"][E:2 * E]
    bv = tp["in_proj_b"][2 * E:3 * E]
    wd_pad = jnp.concatenate(
        [jnp.zeros((E - D, D), jnp.float32), tp["dense_w"].T], axis=0)   # (24, 20)
    return dict(
        dft_cos=jnp.cos(ang),
        dft_sin=-jnp.sin(ang),
        wq_t=wq.T, bq=bq.reshape(1, E),
        wk_t=wk.T, bk=bk.reshape(1, E),
        wv_t=wv.T, bv=bv.reshape(1, E),
        wo_t=tp["out_proj_w"].T, bo=tp["out_proj_b"].reshape(1, E),
        g1=tp["ln1_g"].reshape(1, E), be1=tp["ln1_b"].reshape(1, E),
        g2=tp["ln2_g"].reshape(1, E), be2=tp["ln2_b"].reshape(1, E),
        w1_t=tp["lin1_w"].T, b1=tp["lin1_b"].reshape(1, FF),
        w2_t=tp["lin2_w"].T, b2=tp["lin2_b"].reshape(1, E),
        wd_pad=wd_pad, bd=tp["dense_b"].reshape(1, D),
        wc=tp["conv_w"][:, :, 0],                       # (2, 2) -> SMEM scalars
        bc=tp["conv_b"],                                # (2,)   -> SMEM scalars
    )


def reference_forward(src, tp):
    """Pure-JAX f32 mirror of the PyTorch forward (validation only)."""
    x = jnp.concatenate([jnp.abs(src), jnp.abs(jnp.fft.fft(src))], axis=0)  # (20, 24)
    x = jnp.maximum(x, 0.0)

    def lin(z, w, b):
        return z @ w.T + b

    def ln(z, g, b):
        mu = z.mean(-1, keepdims=True)
        var = jnp.square(z - mu).mean(-1, keepdims=True)
        return (z - mu) / jnp.sqrt(var + EPS) * g + b

    qkv = lin(x, tp["in_proj_w"], tp["in_proj_b"])
    q3 = qkv[:, 0:E].reshape(L, N, E)
    k3 = qkv[:, E:2 * E].reshape(L, N, E)
    v3 = qkv[:, 2 * E:3 * E].reshape(L, N, E)
    s = jnp.einsum("inh,jnh->ijnh", q3, k3)             # head_dim = 1, scale = 1
    a = jax.nn.softmax(s, axis=1)
    ctx = jnp.einsum("ijnh,jnh->inh", a, v3).reshape(L * N, E)
    h = ln(x + lin(ctx, tp["out_proj_w"], tp["out_proj_b"]), tp["ln1_g"], tp["ln1_b"])
    f = jnp.maximum(lin(h, tp["lin1_w"], tp["lin1_b"]), 0.0)
    h = ln(h + lin(f, tp["lin2_w"], tp["lin2_b"]), tp["ln2_g"], tp["ln2_b"])
    h3 = jnp.maximum(h, 0.0).reshape(L, N, E)
    conv = jnp.einsum("oi,bip->bop", tp["conv_w"][:, :, 0], h3) + tp["conv_b"][None, :, None]
    y = lin(jnp.maximum(conv, 0.0).reshape(24, 20), tp["dense_w"], tp["dense_b"])
    return jnp.maximum(y[-1], 0.0)


if __name__ == "__main__":
    key = jax.random.PRNGKey(0)
    k_src, k_s = jax.random.split(key)
    src = jax.random.normal(k_src, (L, E), dtype=jnp.float32)                 # (10, 24)
    s_current_estimated = jax.random.normal(k_s, (2,), dtype=jnp.float32)     # unused

    torch_params = init_torch_params(seed=42)
    params = prepare_params(torch_params)

    out = jax.block_until_ready(transformer_forward(src, s_current_estimated, params))
    assert out.shape == (D,) and out.dtype == jnp.float32
    assert bool(jnp.all(jnp.isfinite(out))) and bool(jnp.all(out >= 0.0))

    # Cross-check against a pure-JAX f32 reference (loose tol: TPU matmul rounding).
    ref = reference_forward(src, torch_params)
    assert bool(jnp.allclose(out, ref, rtol=5e-2, atol=5e-2)), (out, ref)
    print("KERNEL_OK")
</pallas_src>

<mosaic_0001>
module attributes {stable_mosaic.version = 11 : i64} {
  func.func @fused_forward_kernel(%arg0: memref<20x24xf32, #tpu.memory_space<vmem>>, %arg1: memref<24x24xf32, #tpu.memory_space<vmem>>, %arg2: memref<24x24xf32, #tpu.memory_space<vmem>>, %arg3: memref<24x24xf32, #tpu.memory_space<vmem>>, %arg4: memref<1x24xf32, #tpu.memory_space<vmem>>, %arg5: memref<24x24xf32, #tpu.memory_space<vmem>>, %arg6: memref<1x24xf32, #tpu.memory_space<vmem>>, %arg7: memref<24x24xf32, #tpu.memory_space<vmem>>, %arg8: memref<1x24xf32, #tpu.memory_space<vmem>>, %arg9: memref<24x24xf32, #tpu.memory_space<vmem>>, %arg10: memref<1x24xf32, #tpu.memory_space<vmem>>, %arg11: memref<1x24xf32, #tpu.memory_space<vmem>>, %arg12: memref<1x24xf32, #tpu.memory_space<vmem>>, %arg13: memref<1x24xf32, #tpu.memory_space<vmem>>, %arg14: memref<1x24xf32, #tpu.memory_space<vmem>>, %arg15: memref<24x2048xf32, #tpu.memory_space<vmem>>, %arg16: memref<1x2048xf32, #tpu.memory_space<vmem>>, %arg17: memref<2048x24xf32, #tpu.memory_space<vmem>>, %arg18: memref<1x24xf32, #tpu.memory_space<vmem>>, %arg19: memref<24x20xf32, #tpu.memory_space<vmem>>, %arg20: memref<1x20xf32, #tpu.memory_space<vmem>>, %arg21: memref<2x2xf32, #tpu.memory_space<smem>>, %arg22: memref<2xf32, #tpu.memory_space<smem>>, %arg23: memref<1x20xf32, #tpu.memory_space<vmem>>) attributes {dimension_semantics = [], scalar_prefetch = 0 : i64, scratch_operands = 0 : i64, tpu.core_type = #tpu.core_type<tc>} {
    %c0 = arith.constant 0 : index
    %c0_0 = arith.constant 0 : index
    %0 = vector.load %arg0[%c0, %c0_0] : memref<20x24xf32, #tpu.memory_space<vmem>>, vector<20x24xf32>
    %c0_1 = arith.constant 0 : index
    %c0_2 = arith.constant 0 : index
    %1 = vector.load %arg1[%c0_1, %c0_2] : memref<24x24xf32, #tpu.memory_space<vmem>>, vector<24x24xf32>
    %cst = arith.constant dense<0.000000e+00> : vector<20x24xf32>
    %2 = tpu.matmul %0, %1, %cst {dimension_numbers = #tpu.dot_dimension_numbers<[1], [0], [0], [1], [0, 0, 1, 1], [], []>} : vector<20x24xf32>, vector<24x24xf32>, vector<20x24xf32> -> vector<20x24xf32>
    %c0_3 = arith.constant 0 : index
    %c0_4 = arith.constant 0 : index
    %3 = vector.load %arg2[%c0_3, %c0_4] : memref<24x24xf32, #tpu.memory_space<vmem>>, vector<24x24xf32>
    %cst_5 = arith.constant dense<0.000000e+00> : vector<20x24xf32>
    %4 = tpu.matmul %0, %3, %cst_5 {dimension_numbers = #tpu.dot_dimension_numbers<[1], [0], [0], [1], [0, 0, 1, 1], [], []>} : vector<20x24xf32>, vector<24x24xf32>, vector<20x24xf32> -> vector<20x24xf32>
    %5 = arith.mulf %2, %2 : vector<20x24xf32>
    %6 = arith.mulf %4, %4 : vector<20x24xf32>
    %7 = arith.addf %5, %6 : vector<20x24xf32>
    %8 = math.sqrt %7 : vector<20x24xf32>
    %9 = tpu.iota {dimensions = array<i32: 0>} : vector<20x24xi32>
    %c5_i32 = arith.constant 5 : i32
    %10 = vector.broadcast %c5_i32 : i32 to vector<20x24xi32>
    %11 = arith.cmpi slt, %9, %10 : vector<20x24xi32>
    %c10_i32 = arith.constant 10 : i32
    %12 = vector.broadcast %c10_i32 : i32 to vector<20x24xi32>
    %13 = arith.cmpi sge, %9, %12 : vector<20x24xi32>
    %c15_i32 = arith.constant 15 : i32
    %14 = vector.broadcast %c15_i32 : i32 to vector<20x24xi32>
    %15 = arith.cmpi slt, %9, %14 : vector<20x24xi32>
    %16 = arith.andi %13, %15 : vector<20x24xi1>
    %17 = arith.ori %11, %16 : vector<20x24xi1>
    %18 = math.absf %0 : vector<20x24xf32>
    %19 = arith.select %17, %18, %8 : vector<20x24xi1>, vector<20x24xf32>
    %c0_6 = arith.constant 0 : index
    %c0_7 = arith.constant 0 : index
    %20 = vector.load %arg3[%c0_6, %c0_7] : memref<24x24xf32, #tpu.memory_space<vmem>>, vector<24x24xf32>
    %cst_8 = arith.constant dense<0.000000e+00> : vector<20x24xf32>
    %21 = tpu.matmul %19, %20, %cst_8 {dimension_numbers = #tpu.dot_dimension_numbers<[1], [0], [0], [1], [0, 0, 1, 1], [], []>} : vector<20x24xf32>, vector<24x24xf32>, vector<20x24xf32> -> vector<20x24xf32>
    %c0_9 = arith.constant 0 : index
    %c0_10 = arith.constant 0 : index
    %22 = vector.load %arg4[%c0_9, %c0_10] : memref<1x24xf32, #tpu.memory_space<vmem>>, vector<1x24xf32>
    %23 = vector.broadcast %22 : vector<1x24xf32> to vector<20x24xf32>
    %24 = arith.addf %21, %23 : vector<20x24xf32>
    %c0_11 = arith.constant 0 : index
    %c0_12 = arith.constant 0 : index
    %25 = vector.load %arg5[%c0_11, %c0_12] : memref<24x24xf32, #tpu.memory_space<vmem>>, vector<24x24xf32>
    %cst_13 = arith.constant dense<0.000000e+00> : vector<20x24xf32>
    %26 = tpu.matmul %19, %25, %cst_13 {dimension_numbers = #tpu.dot_dimension_numbers<[1], [0], [0], [1], [0, 0, 1, 1], [], []>} : vector<20x24xf32>, vector<24x24xf32>, vector<20x24xf32> -> vector<20x24xf32>
    %c0_14 = arith.constant 0 : index
    %c0_15 = arith.constant 0 : index
    %27 = vector.load %arg6[%c0_14, %c0_15] : memref<1x24xf32, #tpu.memory_space<vmem>>, vector<1x24xf32>
    %28 = vector.broadcast %27 : vector<1x24xf32> to vector<20x24xf32>
    %29 = arith.addf %26, %28 : vector<20x24xf32>
    %c0_16 = arith.constant 0 : index
    %c0_17 = arith.constant 0 : index
    %30 = vector.load %arg7[%c0_16, %c0_17] : memref<24x24xf32, #tpu.memory_space<vmem>>, vector<24x24xf32>
    %cst_18 = arith.constant dense<0.000000e+00> : vector<20x24xf32>
    %31 = tpu.matmul %19, %30, %cst_18 {dimension_numbers = #tpu.dot_dimension_numbers<[1], [0], [0], [1], [0, 0, 1, 1], [], []>} : vector<20x24xf32>, vector<24x24xf32>, vector<20x24xf32> -> vector<20x24xf32>
    %c0_19 = arith.constant 0 : index
    %c0_20 = arith.constant 0 : index
    %32 = vector.load %arg8[%c0_19, %c0_20] : memref<1x24xf32, #tpu.memory_space<vmem>>, vector<1x24xf32>
    %33 = vector.broadcast %32 : vector<1x24xf32> to vector<20x24xf32>
    %34 = arith.addf %31, %33 : vector<20x24xf32>
    %35 = vector.extract_strided_slice %24 {offsets = [0, 0], sizes = [10, 24], strides = [1, 1]} : vector<20x24xf32> to vector<10x24xf32>
    %36 = vector.extract_strided_slice %29 {offsets = [0, 0], sizes = [10, 24], strides = [1, 1]} : vector<20x24xf32> to vector<10x24xf32>
    %37 = vector.extract_strided_slice %34 {offsets = [0, 0], sizes = [10, 24], strides = [1, 1]} : vector<20x24xf32> to vector<10x24xf32>
    %38 = vector.shape_cast %35 : vector<10x24xf32> to vector<10x1x24xf32>
    %39 = vector.shape_cast %36 : vector<10x24xf32> to vector<1x10x24xf32>
    %40 = vector.broadcast %38 : vector<10x1x24xf32> to vector<10x10x24xf32>
    %41 = vector.broadcast %39 : vector<1x10x24xf32> to vector<10x10x24xf32>
    %42 = arith.mulf %40, %41 : vector<10x10x24xf32>
    %cst_21 = arith.constant dense<0xFF800000> : vector<10x24xf32>
    %43 = vector.multi_reduction <maximumf>, %42, %cst_21 [1] : vector<10x10x24xf32> to vector<10x24xf32>
    %44 = vector.shape_cast %43 : vector<10x24xf32> to vector<10x1x24xf32>
    %45 = vector.broadcast %44 : vector<10x1x24xf32> to vector<10x10x24xf32>
    %46 = arith.subf %42, %45 : vector<10x10x24xf32>
    %47 = math.exp %46 : vector<10x10x24xf32>
    %cst_22 = arith.constant dense<0.000000e+00> : vector<10x24xf32>
    %48 = vector.multi_reduction <add>, %47, %cst_22 [1] : vector<10x10x24xf32> to vector<10x24xf32>
    %49 = vector.shape_cast %48 : vector<10x24xf32> to vector<10x1x24xf32>
    %50 = vector.broadcast %49 : vector<10x1x24xf32> to vector<10x10x24xf32>
    %51 = arith.divf %47, %50 : vector<10x10x24xf32>
    %52 = vector.shape_cast %37 : vector<10x24xf32> to vector<1x10x24xf32>
    %53 = vector.broadcast %52 : vector<1x10x24xf32> to vector<10x10x24xf32>
    %54 = arith.mulf %51, %53 : vector<10x10x24xf32>
    %cst_23 = arith.constant dense<0.000000e+00> : vector<10x24xf32>
    %55 = vector.multi_reduction <add>, %54, %cst_23 [1] : vector<10x10x24xf32> to vector<10x24xf32>
    %56 = vector.extract_strided_slice %24 {offsets = [10, 0], sizes = [10, 24], strides = [1, 1]} : vector<20x24xf32> to vector<10x24xf32>
    %57 = vector.extract_strided_slice %29 {offsets = [10, 0], sizes = [10, 24], strides = [1, 1]} : vector<20x24xf32> to vector<10x24xf32>
    %58 = vector.extract_strided_slice %34 {offsets = [10, 0], sizes = [10, 24], strides = [1, 1]} : vector<20x24xf32> to vector<10x24xf32>
    %59 = vector.shape_cast %56 : vector<10x24xf32> to vector<10x1x24xf32>
    %60 = vector.shape_cast %57 : vector<10x24xf32> to vector<1x10x24xf32>
    %61 = vector.broadcast %59 : vector<10x1x24xf32> to vector<10x10x24xf32>
    %62 = vector.broadcast %60 : vector<1x10x24xf32> to vector<10x10x24xf32>
    %63 = arith.mulf %61, %62 : vector<10x10x24xf32>
    %cst_24 = arith.constant dense<0xFF800000> : vector<10x24xf32>
    %64 = vector.multi_reduction <maximumf>, %63, %cst_24 [1] : vector<10x10x24xf32> to vector<10x24xf32>
    %65 = vector.shape_cast %64 : vector<10x24xf32> to vector<10x1x24xf32>
    %66 = vector.broadcast %65 : vector<10x1x24xf32> to vector<10x10x24xf32>
    %67 = arith.subf %63, %66 : vector<10x10x24xf32>
    %68 = math.exp %67 : vector<10x10x24xf32>
    %cst_25 = arith.constant dense<0.000000e+00> : vector<10x24xf32>
    %69 = vector.multi_reduction <add>, %68, %cst_25 [1] : vector<10x10x24xf32> to vector<10x24xf32>
    %70 = vector.shape_cast %69 : vector<10x24xf32> to vector<10x1x24xf32>
    %71 = vector.broadcast %70 : vector<10x1x24xf32> to vector<10x10x24xf32>
    %72 = arith.divf %68, %71 : vector<10x10x24xf32>
    %73 = vector.shape_cast %58 : vector<10x24xf32> to vector<1x10x24xf32>
    %74 = vector.broadcast %73 : vector<1x10x24xf32> to vector<10x10x24xf32>
    %75 = arith.mulf %72, %74 : vector<10x10x24xf32>
    %cst_26 = arith.constant dense<0.000000e+00> : vector<10x24xf32>
    %76 = vector.multi_reduction <add>, %75, %cst_26 [1] : vector<10x10x24xf32> to vector<10x24xf32>
    %77 = tpu.concatenate %55, %76 in 0 : vector<10x24xf32>, vector<10x24xf32> -> vector<20x24xf32>
    %c0_27 = arith.constant 0 : index
    %c0_28 = arith.constant 0 : index
    %78 = vector.load %arg9[%c0_27, %c0_28] : memref<24x24xf32, #tpu.memory_space<vmem>>, vector<24x24xf32>
    %cst_29 = arith.constant dense<0.000000e+00> : vector<20x24xf32>
    %79 = tpu.matmul %77, %78, %cst_29 {dimension_numbers = #tpu.dot_dimension_numbers<[1], [0], [0], [1], [0, 0, 1, 1], [], []>} : vector<20x24xf32>, vector<24x24xf32>, vector<20x24xf32> -> vector<20x24xf32>
    %c0_30 = arith.constant 0 : index
    %c0_31 = arith.constant 0 : index
    %80 = vector.load %arg10[%c0_30, %c0_31] : memref<1x24xf32, #tpu.memory_space<vmem>>, vector<1x24xf32>
    %81 = vector.broadcast %80 : vector<1x24xf32> to vector<20x24xf32>
    %82 = arith.addf %79, %81 : vector<20x24xf32>
    %83 = arith.addf %19, %82 : vector<20x24xf32>
    %c0_32 = arith.constant 0 : index
    %c0_33 = arith.constant 0 : index
    %84 = vector.load %arg11[%c0_32, %c0_33] : memref<1x24xf32, #tpu.memory_space<vmem>>, vector<1x24xf32>
    %c0_34 = arith.constant 0 : index
    %c0_35 = arith.constant 0 : index
    %85 = vector.load %arg12[%c0_34, %c0_35] : memref<1x24xf32, #tpu.memory_space<vmem>>, vector<1x24xf32>
    %cst_36 = arith.constant dense<0.000000e+00> : vector<20xf32>
    %86 = vector.multi_reduction <add>, %83, %cst_36 [1] : vector<20x24xf32> to vector<20xf32>
    %87 = vector.shape_cast %86 : vector<20xf32> to vector<20x1xf32>
    %cst_37 = arith.constant 2.400000e+01 : f32
    %88 = vector.broadcast %cst_37 : f32 to vector<20x1xf32>
    %89 = arith.divf %87, %88 : vector<20x1xf32>
    %90 = vector.broadcast %89 : vector<20x1xf32> to vector<20x24xf32>
    %91 = arith.subf %83, %90 : vector<20x24xf32>
    %92 = arith.mulf %91, %91 : vector<20x24xf32>
    %cst_38 = arith.constant dense<0.000000e+00> : vector<20xf32>
    %93 = vector.multi_reduction <add>, %92, %cst_38 [1] : vector<20x24xf32> to vector<20xf32>
    %94 = vector.shape_cast %93 : vector<20xf32> to vector<20x1xf32>
    %cst_39 = arith.constant 2.400000e+01 : f32
    %95 = vector.broadcast %cst_39 : f32 to vector<20x1xf32>
    %96 = arith.divf %94, %95 : vector<20x1xf32>
    %97 = vector.broadcast %89 : vector<20x1xf32> to vector<20x24xf32>
    %98 = arith.subf %83, %97 : vector<20x24xf32>
    %cst_40 = arith.constant 9.99999974E-6 : f32
    %99 = vector.broadcast %cst_40 : f32 to vector<20x1xf32>
    %100 = arith.addf %96, %99 : vector<20x1xf32>
    %101 = math.rsqrt %100 : vector<20x1xf32>
    %102 = vector.broadcast %101 : vector<20x1xf32> to vector<20x24xf32>
    %103 = arith.mulf %98, %102 : vector<20x24xf32>
    %104 = vector.broadcast %84 : vector<1x24xf32> to vector<20x24xf32>
    %105 = arith.mulf %103, %104 : vector<20x24xf32>
    %106 = vector.broadcast %85 : vector<1x24xf32> to vector<20x24xf32>
    %107 = arith.addf %105, %106 : vector<20x24xf32>
    %c0_41 = arith.constant 0 : index
    %c0_42 = arith.constant 0 : index
    %108 = vector.load %arg15[%c0_41, %c0_42] : memref<24x2048xf32, #tpu.memory_space<vmem>>, vector<24x2048xf32>
    %cst_43 = arith.constant dense<0.000000e+00> : vector<20x2048xf32>
    %109 = tpu.matmul %107, %108, %cst_43 {dimension_numbers = #tpu.dot_dimension_numbers<[1], [0], [0], [1], [0, 0, 1, 1], [], []>} : vector<20x24xf32>, vector<24x2048xf32>, vector<20x2048xf32> -> vector<20x2048xf32>
    %c0_44 = arith.constant 0 : index
    %c0_45 = arith.constant 0 : index
    %110 = vector.load %arg16[%c0_44, %c0_45] : memref<1x2048xf32, #tpu.memory_space<vmem>>, vector<1x2048xf32>
    %111 = vector.broadcast %110 : vector<1x2048xf32> to vector<20x2048xf32>
    %112 = arith.addf %109, %111 : vector<20x2048xf32>
    %cst_46 = arith.constant 0.000000e+00 : f32
    %113 = vector.broadcast %cst_46 : f32 to vector<20x2048xf32>
    %114 = arith.maximumf %112, %113 : vector<20x2048xf32>
    %c0_47 = arith.constant 0 : index
    %c0_48 = arith.constant 0 : index
    %115 = vector.load %arg17[%c0_47, %c0_48] : memref<2048x24xf32, #tpu.memory_space<vmem>>, vector<2048x24xf32>
    %cst_49 = arith.constant dense<0.000000e+00> : vector<20x24xf32>
    %116 = tpu.matmul %114, %115, %cst_49 {dimension_numbers = #tpu.dot_dimension_numbers<[1], [0], [0], [1], [0, 0, 1, 1], [], []>} : vector<20x2048xf32>, vector<2048x24xf32>, vector<20x24xf32> -> vector<20x24xf32>
    %c0_50 = arith.constant 0 : index
    %c0_51 = arith.constant 0 : index
    %117 = vector.load %arg18[%c0_50, %c0_51] : memref<1x24xf32, #tpu.memory_space<vmem>>, vector<1x24xf32>
    %118 = vector.broadcast %117 : vector<1x24xf32> to vector<20x24xf32>
    %119 = arith.addf %116, %118 : vector<20x24xf32>
    %120 = arith.addf %107, %119 : vector<20x24xf32>
    %c0_52 = arith.constant 0 : index
    %c0_53 = arith.constant 0 : index
    %121 = vector.load %arg13[%c0_52, %c0_53] : memref<1x24xf32, #tpu.memory_space<vmem>>, vector<1x24xf32>
    %c0_54 = arith.constant 0 : index
    %c0_55 = arith.constant 0 : index
    %122 = vector.load %arg14[%c0_54, %c0_55] : memref<1x24xf32, #tpu.memory_space<vmem>>, vector<1x24xf32>
    %cst_56 = arith.constant dense<0.000000e+00> : vector<20xf32>
    %123 = vector.multi_reduction <add>, %120, %cst_56 [1] : vector<20x24xf32> to vector<20xf32>
    %124 = vector.shape_cast %123 : vector<20xf32> to vector<20x1xf32>
    %cst_57 = arith.constant 2.400000e+01 : f32
    %125 = vector.broadcast %cst_57 : f32 to vector<20x1xf32>
    %126 = arith.divf %124, %125 : vector<20x1xf32>
    %127 = vector.broadcast %126 : vector<20x1xf32> to vector<20x24xf32>
    %128 = arith.subf %120, %127 : vector<20x24xf32>
    %129 = arith.mulf %128, %128 : vector<20x24xf32>
    %cst_58 = arith.constant dense<0.000000e+00> : vector<20xf32>
    %130 = vector.multi_reduction <add>, %129, %cst_58 [1] : vector<20x24xf32> to vector<20xf32>
    %131 = vector.shape_cast %130 : vector<20xf32> to vector<20x1xf32>
    %cst_59 = arith.constant 2.400000e+01 : f32
    %132 = vector.broadcast %cst_59 : f32 to vector<20x1xf32>
    %133 = arith.divf %131, %132 : vector<20x1xf32>
    %134 = vector.broadcast %126 : vector<20x1xf32> to vector<20x24xf32>
    %135 = arith.subf %120, %134 : vector<20x24xf32>
    %cst_60 = arith.constant 9.99999974E-6 : f32
    %136 = vector.broadcast %cst_60 : f32 to vector<20x1xf32>
    %137 = arith.addf %133, %136 : vector<20x1xf32>
    %138 = math.rsqrt %137 : vector<20x1xf32>
    %139 = vector.broadcast %138 : vector<20x1xf32> to vector<20x24xf32>
    %140 = arith.mulf %135, %139 : vector<20x24xf32>
    %141 = vector.broadcast %121 : vector<1x24xf32> to vector<20x24xf32>
    %142 = arith.mulf %140, %141 : vector<20x24xf32>
    %143 = vector.broadcast %122 : vector<1x24xf32> to vector<20x24xf32>
    %144 = arith.addf %142, %143 : vector<20x24xf32>
    %145 = vector.extract_strided_slice %144 {offsets = [9, 0], sizes = [1, 24], strides = [1, 1]} : vector<20x24xf32> to vector<1x24xf32>
    %cst_61 = arith.constant 0.000000e+00 : f32
    %146 = vector.broadcast %cst_61 : f32 to vector<1x24xf32>
    %147 = arith.maximumf %145, %146 : vector<1x24xf32>
    %148 = vector.extract_strided_slice %144 {offsets = [19, 0], sizes = [1, 24], strides = [1, 1]} : vector<20x24xf32> to vector<1x24xf32>
    %cst_62 = arith.constant 0.000000e+00 : f32
    %149 = vector.broadcast %cst_62 : f32 to vector<1x24xf32>
    %150 = arith.maximumf %148, %149 : vector<1x24xf32>
    %c1 = arith.constant 1 : index
    %c0_63 = arith.constant 0 : index
    %151 = memref.load %arg21[%c1, %c0_63] : memref<2x2xf32, #tpu.memory_space<smem>>
    %152 = vector.broadcast %151 : f32 to vector<1x24xf32>
    %153 = arith.mulf %152, %147 : vector<1x24xf32>
    %c1_64 = arith.constant 1 : index
    %c1_65 = arith.constant 1 : index
    %154 = memref.load %arg21[%c1_64, %c1_65] : memref<2x2xf32, #tpu.memory_space<smem>>
    %155 = vector.broadcast %154 : f32 to vector<1x24xf32>
    %156 = arith.mulf %155, %150 : vector<1x24xf32>
    %157 = arith.addf %153, %156 : vector<1x24xf32>
    %c1_66 = arith.constant 1 : index
    %158 = memref.load %arg22[%c1_66] : memref<2xf32, #tpu.memory_space<smem>>
    %159 = vector.broadcast %158 : f32 to vector<1x24xf32>
    %160 = arith.addf %157, %159 : vector<1x24xf32>
    %cst_67 = arith.constant 0.000000e+00 : f32
    %161 = vector.broadcast %cst_67 : f32 to vector<1x24xf32>
    %162 = arith.maximumf %160, %161 : vector<1x24xf32>
    %c0_68 = arith.constant 0 : index
    %c0_69 = arith.constant 0 : index
    %163 = vector.load %arg19[%c0_68, %c0_69] : memref<24x20xf32, #tpu.memory_space<vmem>>, vector<24x20xf32>
    %cst_70 = arith.constant dense<0.000000e+00> : vector<1x20xf32>
    %164 = tpu.matmul %162, %163, %cst_70 {dimension_numbers = #tpu.dot_dimension_numbers<[1], [0], [0], [1], [0, 0, 1, 1], [], []>} : vector<1x24xf32>, vector<24x20xf32>, vector<1x20xf32> -> vector<1x20xf32>
    %c0_71 = arith.constant 0 : index
    %c0_72 = arith.constant 0 : index
    %165 = vector.load %arg20[%c0_71, %c0_72] : memref<1x20xf32, #tpu.memory_space<vmem>>, vector<1x20xf32>
    %166 = arith.addf %164, %165 : vector<1x20xf32>
    %cst_73 = arith.constant 0.000000e+00 : f32
    %167 = vector.broadcast %cst_73 : f32 to vector<1x20xf32>
    %168 = arith.maximumf %166, %167 : vector<1x20xf32>
    %c0_74 = arith.constant 0 : index
    %c0_75 = arith.constant 0 : index
    %169 = vector.load %arg23[%c0_74, %c0_75] : memref<1x20xf32, #tpu.memory_space<vmem>>, vector<1x20xf32>
    tpu.vector_store %arg23[%c0_74, %c0_75], %168 {strides = array<i32>} : memref<1x20xf32, #tpu.memory_space<vmem>>, vector<1x20xf32>,
    return
  }
}

</mosaic_0001>

<llo_original>
// kernel: transformer_forward.1
$region0: #{transformer_forward.1}
  #allocation0 [shape = 'u32[]', space=smem, size = 0x4, offset = 0x4, fixed_abs, tag = 'smem constant byte address 0x4 - core index']
  #allocation1 [shape = 'u32[144,128]{1,0:T(1,128)}', space=vmem, size = 0x12000, scoped, tag = 'internal scratch']
  %s0 = inlined_call_operand.vmem [shape: f32[20,24], index: 0, kind: input, shape index: {}]
  %s1 = inlined_call_operand.vmem [shape: f32[24,24], index: 1, kind: input, shape index: {}]
  %s2 = inlined_call_operand.vmem [shape: f32[24,24], index: 2, kind: input, shape index: {}]
  %s3 = inlined_call_operand.vmem [shape: f32[24,24], index: 3, kind: input, shape index: {}]
  %s4 = inlined_call_operand.vmem [shape: f32[1,24], index: 4, kind: input, shape index: {}]
  %s5 = inlined_call_operand.vmem [shape: f32[24,24], index: 5, kind: input, shape index: {}]
  %s6 = inlined_call_operand.vmem [shape: f32[1,24], index: 6, kind: input, shape index: {}]
  %s7 = inlined_call_operand.vmem [shape: f32[24,24], index: 7, kind: input, shape index: {}]
  %s8 = inlined_call_operand.vmem [shape: f32[1,24], index: 8, kind: input, shape index: {}]
  %s9 = inlined_call_operand.vmem [shape: f32[24,24], index: 9, kind: input, shape index: {}]
  %s10 = inlined_call_operand.vmem [shape: f32[1,24], index: 10, kind: input, shape index: {}]
  %s11 = inlined_call_operand.vmem [shape: f32[1,24], index: 11, kind: input, shape index: {}]
  %s12 = inlined_call_operand.vmem [shape: f32[1,24], index: 12, kind: input, shape index: {}]
  %s13 = inlined_call_operand.vmem [shape: f32[1,24], index: 13, kind: input, shape index: {}]
  %s14 = inlined_call_operand.vmem [shape: f32[1,24], index: 14, kind: input, shape index: {}]
  %s15 = inlined_call_operand.vmem [shape: f32[24,2048], index: 15, kind: input, shape index: {}]
  %s16 = inlined_call_operand.vmem [shape: f32[1,2048], index: 16, kind: input, shape index: {}]
  %s17 = inlined_call_operand.vmem [shape: f32[2048,24], index: 17, kind: input, shape index: {}]
  %s18 = inlined_call_operand.vmem [shape: f32[1,24], index: 18, kind: input, shape index: {}]
  %s19 = inlined_call_operand.vmem [shape: f32[24,20], index: 19, kind: input, shape index: {}]
  %s20 = inlined_call_operand.vmem [shape: f32[1,20], index: 20, kind: input, shape index: {}]
  %s21 = inlined_call_operand.vmem [shape: f32[2,2], index: 21, kind: input, shape index: {}]
  %s22 = inlined_call_operand.vmem [shape: f32[2], index: 22, kind: input, shape index: {}]
  %s23 = inlined_call_operand.hbm [shape: f32[1,20], index: 23, kind: output, shape index: {}]
  %s24 = sld [smem:[#allocation0]]
  $region110: #{transformer_forward.1} parent=0
    _
  %s26 = ssub.s32 1, %s24
  %s27 = scalar_select 0, %s26, %s24
  $region1: #{transformer_forward.1} parent=0
    #allocation2 [shape = 'u8[1024]{0}', space=smem, size = 0x400, scoped, tag = 'input window, operand 21, single buffered']
    #allocation3 [shape = 's32[1]{0}', space=sflag, size = 0x4, scoped, tag = 'scoped memory for transformer_forward.1']
    #allocation4 [shape = 's32[1]{0}', space=sflag, size = 0x4, scoped, tag = 'scoped memory for transformer_forward.1']
    #allocation5 [shape = 'u8[512]{0}', space=smem, size = 0x200, scoped, tag = 'input window, operand 22, single buffered']
    #allocation6 [shape = 's32[1]{0}', space=sflag, size = 0x4, scoped, tag = 'scoped memory for transformer_forward.1']
    #allocation7 [shape = 'u8[512]{0}', space=vmem, size = 0x400, scoped, tag = 'output window, operand 0, single buffered']
    %28 = vsyncpa [#allocation4], 0
    %29 = vsyncpa [#allocation6], 0
    %30 = vsyncpa [#allocation3], 0
    // Predicated region
    $region2: #{transformer_forward.1} parent=1 // pred_check
      _
    $region3: #{transformer_forward.1} parent=1 // pred_check_branch
      %32 = sbr.rel (0) target = $region5
    $region4: #{transformer_forward.1} parent=1 // pred_region
      _
    $region5: #{transformer_forward.1} parent=1 // pred_fallthru
      _
    // Predicated region
    $region6: #{transformer_forward.1} parent=1 // pred_check
      _
    $region7: #{transformer_forward.1} parent=1 // pred_check_branch
      %34 = sbr.rel (0) target = $region9
    $region8: #{transformer_forward.1} parent=1 // pred_region
      _
    $region9: #{transformer_forward.1} parent=1 // pred_fallthru
      _
    // Predicated region
    $region10: #{transformer_forward.1} parent=1 // pred_check
      _
    $region11: #{transformer_forward.1} parent=1 // pred_check_branch
      %36 = sbr.rel (0) target = $region13
    $region12: #{transformer_forward.1} parent=1 // pred_region
      _
    $region13: #{transformer_forward.1} parent=1 // pred_fallthru
      _
    // Predicated region
    $region14: #{transformer_forward.1} parent=1 // pred_check
      _
    $region15: #{transformer_forward.1} parent=1 // pred_check_branch
      %38 = sbr.rel (0) target = $region17
    $region16: #{transformer_forward.1} parent=1 // pred_region
      _
    $region17: #{transformer_forward.1} parent=1 // pred_fallthru
      _
    // Predicated region
    $region18: #{transformer_forward.1} parent=1 // pred_check
      _
    $region19: #{transformer_forward.1} parent=1 // pred_check_branch
      %40 = sbr.rel (0) target = $region21
    $region20: #{transformer_forward.1} parent=1 // pred_region
      _
    $region21: #{transformer_forward.1} parent=1 // pred_fallthru
      _
    // Predicated region
    $region22: #{transformer_forward.1} parent=1 // pred_check
      _
    $region23: #{transformer_forward.1} parent=1 // pred_check_branch
      %42 = sbr.rel (0) target = $region25
    $region24: #{transformer_forward.1} parent=1 // pred_region
      _
    $region25: #{transformer_forward.1} parent=1 // pred_fallthru
      _
    // Predicated region
    $region26: #{transformer_forward.1} parent=1 // pred_check
      _
    $region27: #{transformer_forward.1} parent=1 // pred_check_branch
      %44 = sbr.rel (0) target = $region29
    $region28: #{transformer_forward.1} parent=1 // pred_region
      _
    $region29: #{transformer_forward.1} parent=1 // pred_fallthru
      _
    // Predicated region
    $region30: #{transformer_forward.1} parent=1 // pred_check
      _
    $region31: #{transformer_forward.1} parent=1 // pred_check_branch
      %46 = sbr.rel (0) target = $region33
    $region32: #{transformer_forward.1} parent=1 // pred_region
      _
    $region33: #{transformer_forward.1} parent=1 // pred_fallthru
      _
    // Predicated region
    $region34: #{transformer_forward.1} parent=1 // pred_check
      _
    $region35: #{transformer_forward.1} parent=1 // pred_check_branch
      %48 = sbr.rel (0) target = $region37
    $region36: #{transformer_forward.1} parent=1 // pred_region
      _
    $region37: #{transformer_forward.1} parent=1 // pred_fallthru
      _
    // Predicated region
    $region38: #{transformer_forward.1} parent=1 // pred_check
      _
    $region39: #{transformer_forward.1} parent=1 // pred_check_branch
      %50 = sbr.rel (0) target = $region41
    $region40: #{transformer_forward.1} parent=1 // pred_region
      _
    $region41: #{transformer_forward.1} parent=1 // pred_fallthru
      _
    // Predicated region
    $region42: #{transformer_forward.1} parent=1 // pred_check
      _
    $region43: #{transformer_forward.1} parent=1 // pred_check_branch
      %52 = sbr.rel (0) target = $region45
    $region44: #{transformer_forward.1} parent=1 // pred_region
      _
    $region45: #{transformer_forward.1} parent=1 // pred_fallthru
      _
    // Predicated region
    $region46: #{transformer_forward.1} parent=1 // pred_check
      _
    $region47: #{transformer_forward.1} parent=1 // pred_check_branch
      %54 = sbr.rel (0) target = $region49
    $region48: #{transformer_forward.1} parent=1 // pred_region
      _
    $region49: #{transformer_forward.1} parent=1 // pred_fallthru
      _
    // Predicated region
    $region50: #{transformer_forward.1} parent=1 // pred_check
      _
    $region51: #{transformer_forward.1} parent=1 // pred_check_branch
      %56 = sbr.rel (0) target = $region53
    $region52: #{transformer_forward.1} parent=1 // pred_region
      _
    $region53: #{transformer_forward.1} parent=1 // pred_fallthru
      _
    // Predicated region
    $region54: #{transformer_forward.1} parent=1 // pred_check
      _
    $region55: #{transformer_forward.1} parent=1 // pred_check_branch
      %58 = sbr.rel (0) target = $region57
    $region56: #{transformer_forward.1} parent=1 // pred_region
      _
    $region57: #{transformer_forward.1} parent=1 // pred_fallthru
      _
    // Predicated region
    $region58: #{transformer_forward.1} parent=1 // pred_check
      _
    $region59: #{transformer_forward.1} parent=1 // pred_check_branch
      %60 = sbr.rel (0) target = $region61
    $region60: #{transformer_forward.1} parent=1 // pred_region
      _
    $region61: #{transformer_forward.1} parent=1 // pred_fallthru
      _
    // Predicated region
    $region62: #{transformer_forward.1} parent=1 // pred_check
      _
    $region63: #{transformer_forward.1} parent=1 // pred_check_branch
      %62 = sbr.rel (0) target = $region65
    $region64: #{transformer_forward.1} parent=1 // pred_region
      _
    $region65: #{transformer_forward.1} parent=1 // pred_fallthru
      _
    // Predicated region
    $region66: #{transformer_forward.1} parent=1 // pred_check
      _
    $region67: #{transformer_forward.1} parent=1 // pred_check_branch
      %64 = sbr.rel (0) target = $region69
    $region68: #{transformer_forward.1} parent=1 // pred_region
      _
    $region69: #{transformer_forward.1} parent=1 // pred_fallthru
      _
    // Predicated region
    $region70: #{transformer_forward.1} parent=1 // pred_check
      _
    $region71: #{transformer_forward.1} parent=1 // pred_check_branch
      %66 = sbr.rel (0) target = $region73
    $region72: #{transformer_forward.1} parent=1 // pred_region
      _
    $region73: #{transformer_forward.1} parent=1 // pred_fallthru
      _
    // Predicated region
    $region74: #{transformer_forward.1} parent=1 // pred_check
      _
    $region75: #{transformer_forward.1} parent=1 // pred_check_branch
      %68 = sbr.rel (0) target = $region77
    $region76: #{transformer_forward.1} parent=1 // pred_region
      _
    $region77: #{transformer_forward.1} parent=1 // pred_fallthru
      _
    // Predicated region
    $region78: #{transformer_forward.1} parent=1 // pred_check
      _
    $region79: #{transformer_forward.1} parent=1 // pred_check_branch
      %70 = sbr.rel (0) target = $region81
    $region80: #{transformer_forward.1} parent=1 // pred_region
      _
    $region81: #{transformer_forward.1} parent=1 // pred_fallthru
      _
    // Predicated region
    $region82: #{transformer_forward.1} parent=1 // pred_check
      _
    $region83: #{transformer_forward.1} parent=1 // pred_check_branch
      %72 = sbr.rel (0) target = $region85
    $region84: #{transformer_forward.1} parent=1 // pred_region
      _
    $region85: #{transformer_forward.1} parent=1 // pred_fallthru
      _
    // Predicated region
    $region86: #{transformer_forward.1} parent=1 // pred_check
      _
    $region87: #{transformer_forward.1} parent=1 // pred_check_branch
      %74 = sbr.rel (0) target = $region89
    $region88: #{transformer_forward.1} parent=1 // pred_region
      %s76 = ssub.s32 32, 32
      %77 = vsyncadd [#allocation4], %s76
      %s79 = sshll.u32 %s21, 4
      %s80 = int_to_ptr.vmem [resolvable:$true] %s79
      %82 = dma.vmem_to_smem %s80, 32, [#allocation2], [#allocation4]
    $region89: #{transformer_forward.1} parent=1 // pred_fallthru
      _
    // Predicated region
    $region90: #{transformer_forward.1} parent=1 // pred_check
      _
    $region91: #{transformer_forward.1} parent=1 // pred_check_branch
      %84 = sbr.rel (0) target = $region93
    $region92: #{transformer_forward.1} parent=1 // pred_region
      %s86 = ssub.s32 16, 16
      %87 = vsyncadd [#allocation6], %s86
      %s89 = sshll.u32 %s22, 4
      %s90 = int_to_ptr.vmem [resolvable:$true] %s89
      %92 = dma.vmem_to_smem %s90, 16, [#allocation5], [#allocation6]
    $region93: #{transformer_forward.1} parent=1 // pred_fallthru
      _
    // Predicated region
    $region94: #{transformer_forward.1} parent=1 // pred_check
      _
    $region95: #{transformer_forward.1} parent=1 // pred_check_branch
      %94 = sbr.rel (0) target = $region97
    $region96: #{transformer_forward.1} parent=1 // pred_region
      %95 = dma.done [#allocation4], 32
    $region97: #{transformer_forward.1} parent=1 // pred_fallthru
      _
    // Predicated region
    $region98: #{transformer_forward.1} parent=1 // pred_check
      _
    $region99: #{transformer_forward.1} parent=1 // pred_check_branch
      %97 = sbr.rel (0) target = $region101
    $region100: #{transformer_forward.1} parent=1 // pred_region
      %98 = dma.done [#allocation6], 16
    $region101: #{transformer_forward.1} parent=1 // pred_fallthru
      _
    %99 = sfence
    %v100 = vld [vmem:[%s0] sm:$0xff]
    %v101 = vld [vmem:[%s0 + $0x8] sm:$0xff]
    %v102 = vld [vmem:[%s0 + $0x10] sm:$0xf]
    %v103 = vld [vmem:[%s1] sm:$0xff]
    %v104 = vld [vmem:[%s1 + $0x8] sm:$0xff]
    %v105 = vld [vmem:[%s1 + $0x10] sm:$0xff]
    %vm106 = vcmask 195584
    %v108 = vsel %vm106, %v100, 0
    %v111 = vsel %vm106, %v101, 0
    %v114 = vsel %vm106, %v102, 0
    %116 = vmatprep.subr.mxu0 0.0
    %117 = vmatpush1.msra.mxu0 %v103
    %118 = vmatprep.subr.mxu0 0.0
    %119 = vmatpush1.msra.mxu0 %v104
    %120 = vmatprep.subr.mxu0 0.0
    %121 = vmatpush1.msra.mxu0 %v105
    %122 = vmatprep.subr.mxu0 0.0
    %123 = vmatpush1.msra.mxu0 0.0
    %124 = vmatprep.subr.mxu0 0.0
    %125 = vmatpush1.msra.mxu0 0.0
    %126 = vmatprep.subr.mxu0 0.0
    %127 = vmatpush1.msra.mxu0 0.0
    %128 = vmatprep.subr.mxu0 0.0
    %129 = vmatpush1.msra.mxu0 0.0
    %130 = vmatprep.subr.mxu0 0.0
    %131 = vmatpush1.msra.mxu0 0.0
    %132 = vmatprep.subr.mxu0 0.0
    %133 = vmatpush1.msra.mxu0 0.0
    %134 = vmatprep.subr.mxu0 0.0
    %135 = vmatpush1.msra.mxu0 0.0
    %136 = vmatprep.subr.mxu0 0.0
    %137 = vmatpush1.msra.mxu0 0.0
    %138 = vmatprep.subr.mxu0 0.0
    %139 = vmatpush1.msra.mxu0 0.0
    %140 = vmatprep.subr.mxu0 0.0
    %141 = vmatpush1.msra.mxu0 0.0
    %142 = vmatprep.subr.mxu0 0.0
    %143 = vmatpush1.msra.mxu0 0.0
    %144 = vmatprep.subr.mxu0 0.0
    %145 = vmatpush1.msra.mxu0 0.0
    %146 = vmatprep.subr.mxu0 0.0
    %147 = vmatpush1.msra.mxu0 0.0
    %148 = vmatprep.subr.mxu0 0.0
    %149 = vmatpush1.msra.mxu0 0.0
    %150 = vmatprep.subr.mxu0 0.0
    %151 = vmatpush1.msra.mxu0 0.0
    %152 = vmatprep.subr.mxu0 0.0
    %153 = vmatpush1.msra.mxu0 0.0
    %154 = vmatprep.subr.mxu0 0.0
    %155 = vmatpush1.msra.mxu0 0.0
    %156 = vmatprep.subr.mxu0 0.0
    %157 = vmatpush1.msra.mxu0 0.0
    %158 = vmatprep.subr.mxu0 0.0
    %159 = vmatpush1.msra.mxu0 0.0
    %160 = vmatprep.subr.mxu0 0.0
    %161 = vmatpush1.msra.mxu0 0.0
    %162 = vmatprep.subr.mxu0 0.0
    %163 = vmatpush1.msra.mxu0 0.0
    %164 = vmatprep.subr.mxu0 0.0
    %165 = vmatpush1.msra.mxu0 0.0
    %166 = vmatprep.subr.mxu0 0.0
    %167 = vmatpush1.msra.mxu0 0.0
    %168 = vmatprep.subr.mxu0 0.0
    %169 = vmatpush1.msra.mxu0 0.0
    %170 = vmatprep.subr.mxu0 0.0
    %171 = vmatpush1.msra.mxu0 0.0
    %172 = vmatprep.subr.mxu0 0.0
    %173 = vmatpush1.msra.mxu0 0.0
    %174 = vmatprep.subr.mxu0 0.0
    %175 = vmatpush1.msra.mxu0 0.0
    %176 = vmatprep.subr.mxu0 0.0
    %177 = vmatpush1.msra.mxu0 0.0
    %178 = vmatprep.subr.mxu0 0.0
    %179 = vmatpush1.msra.mxu0 0.0
    %180 = vmatprep.mubr.f32.mxu0 0.0
    %181 = vmatmul.mubr.f32.gmra.mrb[0].mxu0 %v108
    %v182 = vpop.f32.mrb[0].mxu0
    %v183 = vadd.f32 0.0, %v182
    %v184 = vpop.f32.mrb[0].mxu0
    %185 = vmatprep.mubr.f32.mxu0 0.0
    %186 = vmatmul.mubr.f32.gmra.mrb[0].mxu0 %v111
    %v187 = vpop.f32.mrb[0].mxu0
    %v188 = vadd.f32 0.0, %v187
    %v189 = vpop.f32.mrb[0].mxu0
    %190 = vmatprep.mubr.f32.mxu0 0.0
    %191 = vmatmul.mubr.f32.gmra.mrb[0].mxu0 %v114
    %v192 = vpop.f32.mrb[0].mxu0
    %v193 = vadd.f32 0.0, %v192
    %v194 = vpop.f32.mrb[0].mxu0
    %195 = vdwg.mxu0
    %v196 = vld [vmem:[%s2] sm:$0xff]
    %v197 = vld [vmem:[%s2 + $0x8] sm:$0xff]
    %v198 = vld [vmem:[%s2 + $0x10] sm:$0xff]
    %199 = vmatprep.subr.mxu0 0.0
    %200 = vmatpush1.msra.mxu0 %v196
    %201 = vmatprep.subr.mxu0 0.0
    %202 = vmatpush1.msra.mxu0 %v197
    %203 = vmatprep.subr.mxu0 0.0
    %204 = vmatpush1.msra.mxu0 %v198
    %205 = vmatprep.subr.mxu0 0.0
    %206 = vmatpush1.msra.mxu0 0.0
    %207 = vmatprep.subr.mxu0 0.0
    %208 = vmatpush1.msra.mxu0 0.0
    %209 = vmatprep.subr.mxu0 0.0
    %210 = vmatpush1.msra.mxu0 0.0
    %211 = vmatprep.subr.mxu0 0.0
    %212 = vmatpush1.msra.mxu0 0.0
    %213 = vmatprep.subr.mxu0 0.0
    %214 = vmatpush1.msra.mxu0 0.0
    %215 = vmatprep.subr.mxu0 0.0
    %216 = vmatpush1.msra.mxu0 0.0
    %217 = vmatprep.subr.mxu0 0.0
    %218 = vmatpush1.msra.mxu0 0.0
    %219 = vmatprep.subr.mxu0 0.0
    %220 = vmatpush1.msra.mxu0 0.0
    %221 = vmatprep.subr.mxu0 0.0
    %222 = vmatpush1.msra.mxu0 0.0
    %223 = vmatprep.subr.mxu0 0.0
    %224 = vmatpush1.msra.mxu0 0.0
    %225 = vmatprep.subr.mxu0 0.0
    %226 = vmatpush1.msra.mxu0 0.0
    %227 = vmatprep.subr.mxu0 0.0
    %228 = vmatpush1.msra.mxu0 0.0
    %229 = vmatprep.subr.mxu0 0.0
    %230 = vmatpush1.msra.mxu0 0.0
    %231 = vmatprep.subr.mxu0 0.0
    %232 = vmatpush1.msra.mxu0 0.0
    %233 = vmatprep.subr.mxu0 0.0
    %234 = vmatpush1.msra.mxu0 0.0
    %235 = vmatprep.subr.mxu0 0.0
    %236 = vmatpush1.msra.mxu0 0.0
    %237 = vmatprep.subr.mxu0 0.0
    %238 = vmatpush1.msra.mxu0 0.0
    %239 = vmatprep.subr.mxu0 0.0
    %240 = vmatpush1.msra.mxu0 0.0
    %241 = vmatprep.subr.mxu0 0.0
    %242 = vmatpush1.msra.mxu0 0.0
    %243 = vmatprep.subr.mxu0 0.0
    %244 = vmatpush1.msra.mxu0 0.0
    %245 = vmatprep.subr.mxu0 0.0
    %246 = vmatpush1.msra.mxu0 0.0
    %247 = vmatprep.subr.mxu0 0.0
    %248 = vmatpush1.msra.mxu0 0.0
    %249 = vmatprep.subr.mxu0 0.0
    %250 = vmatpush1.msra.mxu0 0.0
    %251 = vmatprep.subr.mxu0 0.0
    %252 = vmatpush1.msra.mxu0 0.0
    %253 = vmatprep.subr.mxu0 0.0
    %254 = vmatpush1.msra.mxu0 0.0
    %255 = vmatprep.subr.mxu0 0.0
    %256 = vmatpush1.msra.mxu0 0.0
    %257 = vmatprep.subr.mxu0 0.0
    %258 = vmatpush1.msra.mxu0 0.0
    %259 = vmatprep.subr.mxu0 0.0
    %260 = vmatpush1.msra.mxu0 0.0
    %261 = vmatprep.subr.mxu0 0.0
    %262 = vmatpush1.msra.mxu0 0.0
    %263 = vmatprep.mubr.f32.mxu0 0.0
    %264 = vmatmul.mubr.f32.gmra.mrb[0].mxu0 %v108
    %v265 = vpop.f32.mrb[0].mxu0
    %v266 = vadd.f32 0.0, %v265
    %v267 = vpop.f32.mrb[0].mxu0
    %268 = vmatprep.mubr.f32.mxu0 0.0
    %269 = vmatmul.mubr.f32.gmra.mrb[0].mxu0 %v111
    %v270 = vpop.f32.mrb[0].mxu0
    %v271 = vadd.f32 0.0, %v270
    %v272 = vpop.f32.mrb[0].mxu0
    %273 = vmatprep.mubr.f32.mxu0 0.0
    %274 = vmatmul.mubr.f32.gmra.mrb[0].mxu0 %v114
    %v275 = vpop.f32.mrb[0].mxu0
    %v276 = vadd.f32 0.0, %v275
    %v277 = vpop.f32.mrb[0].mxu0
    %278 = vdwg.mxu0
    %v279 = vmul.f32 %v183, %v183
    %v280 = vmul.f32 %v188, %v188
    %v281 = vmul.f32 %v193, %v193
    %v282 = vmul.f32 %v266, %v266
    %v283 = vmul.f32 %v271, %v271
    %v284 = vmul.f32 %v276, %v276
    %v285 = vadd.f32 %v279, %v282
    %v286 = vadd.f32 %v280, %v283
    %v287 = vadd.f32 %v281, %v284
    %v288 = vrsqrt.pop %v285
    %v289 = vmul.f32 %v285, %v288
    %vm290 = vcmp.eq.f32.partialorder %v285, inf
    %v291 = vsel %vm290, %v285, %v289
    %vm292 = vcmp.eq.f32.partialorder %v285, 0.0
    %v293 = vand.u32 %v285, 2147483648
    %v294 = vsel %vm292, %v293, %v291
    %v295 = vrsqrt.pop %v286
    %v296 = vmul.f32 %v286, %v295
    %vm297 = vcmp.eq.f32.partialorder %v286, inf
    %v298 = vsel %vm297, %v286, %v296
    %vm299 = vcmp.eq.f32.partialorder %v286, 0.0
    %v300 = vand.u32 %v286, 2147483648
    %v301 = vsel %vm299, %v300, %v298
    %v302 = vrsqrt.pop %v287
    %v303 = vmul.f32 %v287, %v302
    %vm304 = vcmp.eq.f32.partialorder %v287, inf
    %v305 = vsel %vm304, %v287, %v303
    %vm306 = vcmp.eq.f32.partialorder %v287, 0.0
    %v307 = vand.u32 %v287, 2147483648
    %v308 = vsel %vm306, %v307, %v305
    %v309 = vlaneseq
    %v310 = vshrl.u32 %v309, 7
    %v311 = vadd.s32 %v310, 8
    %v312 = vadd.s32 %v310, 16
    %vm313 = vcmp.lt.s32.totalorder %v310, 5
    %vm314 = vcmp.lt.s32.totalorder %v311, 5
    %vm315 = vcmp.lt.s32.totalorder %v312, 5
    %vm316 = vcmp.ge.s32.totalorder %v310, 10
    %vm317 = vcmp.ge.s32.totalorder %v311, 10
    %vm318 = vcmp.ge.s32.totalorder %v312, 10
    %vm319 = vcmp.lt.s32.totalorder %v310, 15
    %vm320 = vcmp.lt.s32.totalorder %v311, 15
    %vm321 = vcmp.lt.s32.totalorder %v312, 15
    %vm322 = vmand %vm316, %vm319
    %vm323 = vmand %vm317, %vm320
    %vm324 = vmand %vm318, %vm321
    %vm325 = vmor %vm313, %vm322
    %vm326 = vmor %vm314, %vm323
    %vm327 = vmor %vm315, %vm324
    %v328 = vand.u32 2147483647, %v100
    %v329 = vand.u32 2147483647, %v101
    %v330 = vand.u32 2147483647, %v102
    %v331 = vsel %vm325, %v328, %v294
    %v332 = vsel %vm326, %v329, %v301
    %v333 = vsel %vm327, %v330, %v308
    %v334 = vld [vmem:[%s3] sm:$0xff]
    %v335 = vld [vmem:[%s3 + $0x8] sm:$0xff]
    %v336 = vld [vmem:[%s3 + $0x10] sm:$0xff]
    %v337 = vld [vmem:[%s4] sm:$0x1]
    %v339 = vlaneseq
    %v340 = vshrl.u32 %v339, 7
    %v341 = vsub.s32 0, %v340
    %v342 = vrot.slane %v337, %v341
    %v345 = vsel %vm106, %v331, 0
    %v348 = vsel %vm106, %v332, 0
    %v351 = vsel %vm106, %v333, 0
    %353 = vmatprep.subr.mxu0 0.0
    %354 = vmatpush1.msra.mxu0 %v334
    %355 = vmatprep.subr.mxu0 0.0
    %356 = vmatpush1.msra.mxu0 %v335
    %357 = vmatprep.subr.mxu0 0.0
    %358 = vmatpush1.msra.mxu0 %v336
    %359 = vmatprep.subr.mxu0 0.0
    %360 = vmatpush1.msra.mxu0 0.0
    %361 = vmatprep.subr.mxu0 0.0
    %362 = vmatpush1.msra.mxu0 0.0
    %363 = vmatprep.subr.mxu0 0.0
    %364 = vmatpush1.msra.mxu0 0.0
    %365 = vmatprep.subr.mxu0 0.0
    %366 = vmatpush1.msra.mxu0 0.0
    %367 = vmatprep.subr.mxu0 0.0
    %368 = vmatpush1.msra.mxu0 0.0
    %369 = vmatprep.subr.mxu0 0.0
    %370 = vmatpush1.msra.mxu0 0.0
    %371 = vmatprep.subr.mxu0 0.0
    %372 = vmatpush1.msra.mxu0 0.0
    %373 = vmatprep.subr.mxu0 0.0
    %374 = vmatpush1.msra.mxu0 0.0
    %375 = vmatprep.subr.mxu0 0.0
    %376 = vmatpush1.msra.mxu0 0.0
    %377 = vmatprep.subr.mxu0 0.0
    %378 = vmatpush1.msra.mxu0 0.0
    %379 = vmatprep.subr.mxu0 0.0
    %380 = vmatpush1.msra.mxu0 0.0
    %381 = vmatprep.subr.mxu0 0.0
    %382 = vmatpush1.msra.mxu0 0.0
    %383 = vmatprep.subr.mxu0 0.0
    %384 = vmatpush1.msra.mxu0 0.0
    %385 = vmatprep.subr.mxu0 0.0
    %386 = vmatpush1.msra.mxu0 0.0
    %387 = vmatprep.subr.mxu0 0.0
    %388 = vmatpush1.msra.mxu0 0.0
    %389 = vmatprep.subr.mxu0 0.0
    %390 = vmatpush1.msra.mxu0 0.0
    %391 = vmatprep.subr.mxu0 0.0
    %392 = vmatpush1.msra.mxu0 0.0
    %393 = vmatprep.subr.mxu0 0.0
    %394 = vmatpush1.msra.mxu0 0.0
    %395 = vmatprep.subr.mxu0 0.0
    %396 = vmatpush1.msra.mxu0 0.0
    %397 = vmatprep.subr.mxu0 0.0
    %398 = vmatpush1.msra.mxu0 0.0
    %399 = vmatprep.subr.mxu0 0.0
    %400 = vmatpush1.msra.mxu0 0.0
    %401 = vmatprep.subr.mxu0 0.0
    %402 = vmatpush1.msra.mxu0 0.0
    %403 = vmatprep.subr.mxu0 0.0
    %404 = vmatpush1.msra.mxu0 0.0
    %405 = vmatprep.subr.mxu0 0.0
    %406 = vmatpush1.msra.mxu0 0.0
    %407 = vmatprep.subr.mxu0 0.0
    %408 = vmatpush1.msra.mxu0 0.0
    %409 = vmatprep.subr.mxu0 0.0
    %410 = vmatpush1.msra.mxu0 0.0
    %411 = vmatprep.subr.mxu0 0.0
    %412 = vmatpush1.msra.mxu0 0.0
    %413 = vmatprep.subr.mxu0 0.0
    %414 = vmatpush1.msra.mxu0 0.0
    %415 = vmatprep.subr.mxu0 0.0
    %416 = vmatpush1.msra.mxu0 0.0
    %417 = vmatprep.mubr.f32.mxu0 0.0
    %418 = vmatmul.mubr.f32.gmra.mrb[0].mxu0 %v345
    %v419 = vpop.f32.mrb[0].mxu0
    %v420 = vadd.f32 %v342, %v419
    %v421 = vpop.f32.mrb[0].mxu0
    %422 = vmatprep.mubr.f32.mxu0 0.0
    %423 = vmatmul.mubr.f32.gmra.mrb[0].mxu0 %v348
    %v424 = vpop.f32.mrb[0].mxu0
    %v425 = vadd.f32 %v342, %v424
    %v426 = vpop.f32.mrb[0].mxu0
    %427 = vmatprep.mubr.f32.mxu0 0.0
    %428 = vmatmul.mubr.f32.gmra.mrb[0].mxu0 %v351
    %v429 = vpop.f32.mrb[0].mxu0
    %v430 = vadd.f32 %v342, %v429
    %v431 = vpop.f32.mrb[0].mxu0
    %432 = vdwg.mxu0
    %v433 = vld [vmem:[%s5] sm:$0xff]
    %v434 = vld [vmem:[%s5 + $0x8] sm:$0xff]
    %v435 = vld [vmem:[%s5 + $0x10] sm:$0xff]
    %v436 = vld [vmem:[%s6] sm:$0x1]
    %v438 = vlaneseq
    %v439 = vshrl.u32 %v438, 7
    %v440 = vsub.s32 0, %v439
    %v441 = vrot.slane %v436, %v440
    %443 = vmatprep.subr.mxu0 0.0
    %444 = vmatpush1.msra.mxu0 %v433
    %445 = vmatprep.subr.mxu0 0.0
    %446 = vmatpush1.msra.mxu0 %v434
    %447 = vmatprep.subr.mxu0 0.0
    %448 = vmatpush1.msra.mxu0 %v435
    %449 = vmatprep.subr.mxu0 0.0
    %450 = vmatpush1.msra.mxu0 0.0
    %451 = vmatprep.subr.mxu0 0.0
    %452 = vmatpush1.msra.mxu0 0.0
    %453 = vmatprep.subr.mxu0 0.0
    %454 = vmatpush1.msra.mxu0 0.0
    %455 = vmatprep.subr.mxu0 0.0
    %456 = vmatpush1.msra.mxu0 0.0
    %457 = vmatprep.subr.mxu0 0.0
    %458 = vmatpush1.msra.mxu0 0.0
    %459 = vmatprep.subr.mxu0 0.0
    %460 = vmatpush1.msra.mxu0 0.0
    %461 = vmatprep.subr.mxu0 0.0
    %462 = vmatpush1.msra.mxu0 0.0
    %463 = vmatprep.subr.mxu0 0.0
    %464 = vmatpush1.msra.mxu0 0.0
    %465 = vmatprep.subr.mxu0 0.0
    %466 = vmatpush1.msra.mxu0 0.0
    %467 = vmatprep.subr.mxu0 0.0
    %468 = vmatpush1.msra.mxu0 0.0
    %469 = vmatprep.subr.mxu0 0.0
    %470 = vmatpush1.msra.mxu0 0.0
    %471 = vmatprep.subr.mxu0 0.0
    %472 = vmatpush1.msra.mxu0 0.0
    %473 = vmatprep.subr.mxu0 0.0
    %474 = vmatpush1.msra.mxu0 0.0
    %475 = vmatprep.subr.mxu0 0.0
    %476 = vmatpush1.msra.mxu0 0.0
    %477 = vmatprep.subr.mxu0 0.0
    %478 = vmatpush1.msra.mxu0 0.0
    %479 = vmatprep.subr.mxu0 0.0
    %480 = vmatpush1.msra.mxu0 0.0
    %481 = vmatprep.subr.mxu0 0.0
    %482 = vmatpush1.msra.mxu0 0.0
    %483 = vmatprep.subr.mxu0 0.0
    %484 = vmatpush1.msra.mxu0 0.0
    %485 = vmatprep.subr.mxu0 0.0
    %486 = vmatpush1.msra.mxu0 0.0
    %487 = vmatprep.subr.mxu0 0.0
    %488 = vmatpush1.msra.mxu0 0.0
    %489 = vmatprep.subr.mxu0 0.0
    %490 = vmatpush1.msra.mxu0 0.0
    %491 = vmatprep.subr.mxu0 0.0
    %492 = vmatpush1.msra.mxu0 0.0
    %493 = vmatprep.subr.mxu0 0.0
    %494 = vmatpush1.msra.mxu0 0.0
    %495 = vmatprep.subr.mxu0 0.0
    %496 = vmatpush1.msra.mxu0 0.0
    %497 = vmatprep.subr.mxu0 0.0
    %498 = vmatpush1.msra.mxu0 0.0
    %499 = vmatprep.subr.mxu0 0.0
    %500 = vmatpush1.msra.mxu0 0.0
    %501 = vmatprep.subr.mxu0 0.0
    %502 = vmatpush1.msra.mxu0 0.0
    %503 = vmatprep.subr.mxu0 0.0
    %504 = vmatpush1.msra.mxu0 0.0
    %505 = vmatprep.subr.mxu0 0.0
    %506 = vmatpush1.msra.mxu0 0.0
    %507 = vmatprep.mubr.f32.mxu0 0.0
    %508 = vmatmul.mubr.f32.gmra.mrb[0].mxu0 %v345
    %v509 = vpop.f32.mrb[0].mxu0
    %v510 = vadd.f32 %v441, %v509
    %v511 = vpop.f32.mrb[0].mxu0
    %512 = vmatprep.mubr.f32.mxu0 0.0
    %513 = vmatmul.mubr.f32.gmra.mrb[0].mxu0 %v348
    %v514 = vpop.f32.mrb[0].mxu0
    %v515 = vadd.f32 %v441, %v514
    %v516 = vpop.f32.mrb[0].mxu0
    %517 = vmatprep.mubr.f32.mxu0 0.0
    %518 = vmatmul.mubr.f32.gmra.mrb[0].mxu0 %v351
    %v519 = vpop.f32.mrb[0].mxu0
    %v520 = vadd.f32 %v441, %v519
    %v521 = vpop.f32.mrb[0].mxu0
    %522 = vdwg.mxu0
    %v523 = vld [vmem:[%s7] sm:$0xff]
    %v524 = vld [vmem:[%s7 + $0x8] sm:$0xff]
    %v525 = vld [vmem:[%s7 + $0x10] sm:$0xff]
    %v526 = vld [vmem:[%s8] sm:$0x1]
    %v528 = vlaneseq
    %v529 = vshrl.u32 %v528, 7
    %v530 = vsub.s32 0, %v529
    %v531 = vrot.slane %v526, %v530
    %533 = vmatprep.subr.mxu0 0.0
    %534 = vmatpush1.msra.mxu0 %v523
    %535 = vmatprep.subr.mxu0 0.0
    %536 = vmatpush1.msra.mxu0 %v524
    %537 = vmatprep.subr.mxu0 0.0
    %538 = vmatpush1.msra.mxu0 %v525
    %539 = vmatprep.subr.mxu0 0.0
    %540 = vmatpush1.msra.mxu0 0.0
    %541 = vmatprep.subr.mxu0 0.0
    %542 = vmatpush1.msra.mxu0 0.0
    %543 = vmatprep.subr.mxu0 0.0
    %544 = vmatpush1.msra.mxu0 0.0
    %545 = vmatprep.subr.mxu0 0.0
    %546 = vmatpush1.msra.mxu0 0.0
    %547 = vmatprep.subr.mxu0 0.0
    %548 = vmatpush1.msra.mxu0 0.0
    %549 = vmatprep.subr.mxu0 0.0
    %550 = vmatpush1.msra.mxu0 0.0
    %551 = vmatprep.subr.mxu0 0.0
    %552 = vmatpush1.msra.mxu0 0.0
    %553 = vmatprep.subr.mxu0 0.0
    %554 = vmatpush1.msra.mxu0 0.0
    %555 = vmatprep.subr.mxu0 0.0
    %556 = vmatpush1.msra.mxu0 0.0
    %557 = vmatprep.subr.mxu0 0.0
    %558 = vmatpush1.msra.mxu0 0.0
    %559 = vmatprep.subr.mxu0 0.0
    %560 = vmatpush1.msra.mxu0 0.0
    %561 = vmatprep.subr.mxu0 0.0
    %562 = vmatpush1.msra.mxu0 0.0
    %563 = vmatprep.subr.mxu0 0.0
    %564 = vmatpush1.msra.mxu0 0.0
    %565 = vmatprep.subr.mxu0 0.0
    %566 = vmatpush1.msra.mxu0 0.0
    %567 = vmatprep.subr.mxu0 0.0
    %568 = vmatpush1.msra.mxu0 0.0
    %569 = vmatprep.subr.mxu0 0.0
    %570 = vmatpush1.msra.mxu0 0.0
    %571 = vmatprep.subr.mxu0 0.0
    %572 = vmatpush1.msra.mxu0 0.0
    %573 = vmatprep.subr.mxu0 0.0
    %574 = vmatpush1.msra.mxu0 0.0
    %575 = vmatprep.subr.mxu0 0.0
    %576 = vmatpush1.msra.mxu0 0.0
    %577 = vmatprep.subr.mxu0 0.0
    %578 = vmatpush1.msra.mxu0 0.0
    %579 = vmatprep.subr.mxu0 0.0
    %580 = vmatpush1.msra.mxu0 0.0
    %581 = vmatprep.subr.mxu0 0.0
    %582 = vmatpush1.msra.mxu0 0.0
    %583 = vmatprep.subr.mxu0 0.0
    %584 = vmatpush1.msra.mxu0 0.0
    %585 = vmatprep.subr.mxu0 0.0
    %586 = vmatpush1.msra.mxu0 0.0
    %587 = vmatprep.subr.mxu0 0.0
    %588 = vmatpush1.msra.mxu0 0.0
    %589 = vmatprep.subr.mxu0 0.0
    %590 = vmatpush1.msra.mxu0 0.0
    %591 = vmatprep.subr.mxu0 0.0
    %592 = vmatpush1.msra.mxu0 0.0
    %593 = vmatprep.subr.mxu0 0.0
    %594 = vmatpush1.msra.mxu0 0.0
    %595 = vmatprep.subr.mxu0 0.0
    %596 = vmatpush1.msra.mxu0 0.0
    %597 = vmatprep.mubr.f32.mxu0 0.0
    %598 = vmatmul.mubr.f32.gmra.mrb[0].mxu0 %v345
    %v599 = vpop.f32.mrb[0].mxu0
    %v600 = vadd.f32 %v531, %v599
    %v601 = vpop.f32.mrb[0].mxu0
    %602 = vmatprep.mubr.f32.mxu0 0.0
    %603 = vmatmul.mubr.f32.gmra.mrb[0].mxu0 %v348
    %v604 = vpop.f32.mrb[0].mxu0
    %v605 = vadd.f32 %v531, %v604
    %v606 = vpop.f32.mrb[0].mxu0
    %607 = vmatprep.mubr.f32.mxu0 0.0
    %608 = vmatmul.mubr.f32.gmra.mrb[0].mxu0 %v351
    %v609 = vpop.f32.mrb[0].mxu0
    %v610 = vadd.f32 %v531, %v609
    %v611 = vpop.f32.mrb[0].mxu0
    %612 = vdwg.mxu0
    %v615 = vcombine.high %v420, %v420
    %v617 = vunpack.c.l.s4 1966171168
    %v618 = vunpack.c.0.s8 %v617
    %v619 = vlaneseq
    %v620 = vshrl.u32 %v619, 7
    %v621 = vsub.s32 %v618, %v620
    %v622 = vrot.slane %v420, %v621
    %v624 = vunpack.c.l.s4 1966171168
    %v625 = vunpack.c.0.s8 %v624
    %v626 = vlaneseq
    %v627 = vshrl.u32 %v626, 7
    %v628 = vsub.s32 %v625, %v627
    %v629 = vrot.slane %v615, %v628
    %v630 = vcombine.high %v622, %v622
    %v631 = vcombine.high %v629, %v629
    %v633 = vunpack.c.l.s4 1966171168
    %v634 = vunpack.c.0.s8 %v633
    %v635 = vlaneseq
    %v636 = vshrl.u32 %v635, 7
    %v637 = vsub.s32 %v634, %v636
    %v638 = vrot.slane %v622, %v637
    %v640 = vunpack.c.l.s4 1966171168
    %v641 = vunpack.c.0.s8 %v640
    %v642 = vlaneseq
    %v643 = vshrl.u32 %v642, 7
    %v644 = vsub.s32 %v641, %v643
    %v645 = vrot.slane %v629, %v644
    %v647 = vunpack.c.l.s4 1966171168
    %v648 = vunpack.c.0.s8 %v647
    %v649 = vlaneseq
    %v650 = vshrl.u32 %v649, 7
    %v651 = vsub.s32 %v648, %v650
    %v652 = vrot.slane %v630, %v651
    %v654 = vunpack.c.l.s4 1966171168
    %v655 = vunpack.c.0.s8 %v654
    %v656 = vlaneseq
    %v657 = vshrl.u32 %v656, 7
    %v658 = vsub.s32 %v655, %v657
    %v659 = vrot.slane %v631, %v658
    %v660 = vcombine.high %v638, %v638
    %v661 = vcombine.high %v645, %v645
    %v662 = vcombine.high %v652, %v652
    %v663 = vcombine.high %v659, %v659
    %v665 = vunpack.c.l.s4 1966171168
    %v666 = vunpack.c.0.s8 %v665
    %v667 = vlaneseq
    %v668 = vshrl.u32 %v667, 7
    %v669 = vsub.s32 %v666, %v668
    %v670 = vrot.slane %v425, %v669
    %v671 = vcombine.high %v670, %v670
    %v673 = vunpack.c.l.s4 1966171168
    %v674 = vunpack.c.0.s8 %v673
    %v675 = vlaneseq
    %v676 = vshrl.u32 %v675, 7
    %v677 = vsub.s32 %v674, %v676
    %v678 = vrot.slane %v670, %v677
    %v680 = vunpack.c.l.s4 1966171168
    %v681 = vunpack.c.0.s8 %v680
    %v682 = vlaneseq
    %v683 = vshrl.u32 %v682, 7
    %v684 = vsub.s32 %v681, %v683
    %v685 = vrot.slane %v671, %v684
    %v686 = vlaneseq
    %v687 = vshrl.u32 %v686, 7
    %v688 = vsub.s32 0, %v687
    %v689 = vrot.slane %v638, %v688
    %v690 = vlaneseq
    %v691 = vshrl.u32 %v690, 7
    %v692 = vsub.s32 0, %v691
    %v693 = vrot.slane %v652, %v692
    %v694 = vlaneseq
    %v695 = vshrl.u32 %v694, 7
    %v696 = vsub.s32 0, %v695
    %v697 = vrot.slane %v660, %v696
    %v698 = vlaneseq
    %v699 = vshrl.u32 %v698, 7
    %v700 = vsub.s32 0, %v699
    %v701 = vrot.slane %v662, %v700
    %v702 = vlaneseq
    %v703 = vshrl.u32 %v702, 7
    %v704 = vsub.s32 0, %v703
    %v705 = vrot.slane %v645, %v704
    %v706 = vlaneseq
    %v707 = vshrl.u32 %v706, 7
    %v708 = vsub.s32 0, %v707
    %v709 = vrot.slane %v659, %v708
    %v710 = vlaneseq
    %v711 = vshrl.u32 %v710, 7
    %v712 = vsub.s32 0, %v711
    %v713 = vrot.slane %v661, %v712
    %v714 = vlaneseq
    %v715 = vshrl.u32 %v714, 7
    %v716 = vsub.s32 0, %v715
    %v717 = vrot.slane %v663, %v716
    %v718 = vlaneseq
    %v719 = vshrl.u32 %v718, 7
    %v720 = vsub.s32 0, %v719
    %v721 = vrot.slane %v678, %v720
    %v722 = vlaneseq
    %v723 = vshrl.u32 %v722, 7
    %v724 = vsub.s32 0, %v723
    %v725 = vrot.slane %v685, %v724
    %v736 = vmul.f32 %v689, %v510
    %v737 = vmul.f32 %v689, %v515
    %v738 = vmul.f32 %v693, %v510
    %v739 = vmul.f32 %v693, %v515
    %v740 = vmul.f32 %v697, %v510
    %v741 = vmul.f32 %v697, %v515
    %v742 = vmul.f32 %v701, %v510
    %v743 = vmul.f32 %v701, %v515
    %v744 = vmul.f32 %v705, %v510
    %v745 = vmul.f32 %v705, %v515
    %v746 = vmul.f32 %v709, %v510
    %v747 = vmul.f32 %v709, %v515
    %v748 = vmul.f32 %v713, %v510
    %v749 = vmul.f32 %v713, %v515
    %v750 = vmul.f32 %v717, %v510
    %v751 = vmul.f32 %v717, %v515
    %v752 = vmul.f32 %v721, %v510
    %v753 = vmul.f32 %v721, %v515
    %v754 = vmul.f32 %v725, %v510
    %v755 = vmul.f32 %v725, %v515
    %v756 = vsel %vm106, %v736, -inf
    %vm757 = vcmask 189440
    %v758 = vsel %vm757, %v737, -inf
    %v759 = vmax.f32 %v756, %v758
    %v760 = vrot.slane %v759, 4
    %v761 = vmax.f32 %v759, %v760
    %v762 = vrot.slane %v761, 2
    %v763 = vmax.f32 %v761, %v762
    %v764 = vrot.slane %v763, 1
    %v765 = vmax.f32 %v763, %v764
    %v766 = vsel %vm106, %v738, -inf
    %v767 = vsel %vm757, %v739, -inf
    %v768 = vmax.f32 %v766, %v767
    %v769 = vrot.slane %v768, 4
    %v770 = vmax.f32 %v768, %v769
    %v771 = vrot.slane %v770, 2
    %v772 = vmax.f32 %v770, %v771
    %v773 = vrot.slane %v772, 1
    %v774 = vmax.f32 %v772, %v773
    %v775 = vsel %vm106, %v740, -inf
    %v776 = vsel %vm757, %v741, -inf
    %v777 = vmax.f32 %v775, %v776
    %v778 = vrot.slane %v777, 4
    %v779 = vmax.f32 %v777, %v778
    %v780 = vrot.slane %v779, 2
    %v781 = vmax.f32 %v779, %v780
    %v782 = vrot.slane %v781, 1
    %v783 = vmax.f32 %v781, %v782
    %v784 = vsel %vm106, %v742, -inf
    %v785 = vsel %vm757, %v743, -inf
    %v786 = vmax.f32 %v784, %v785
    %v787 = vrot.slane %v786, 4
    %v788 = vmax.f32 %v786, %v787
    %v789 = vrot.slane %v788, 2
    %v790 = vmax.f32 %v788, %v789
    %v791 = vrot.slane %v790, 1
    %v792 = vmax.f32 %v790, %v791
    %v793 = vsel %vm106, %v744, -inf
    %v794 = vsel %vm757, %v745, -inf
    %v795 = vmax.f32 %v793, %v794
    %v796 = vrot.slane %v795, 4
    %v797 = vmax.f32 %v795, %v796
    %v798 = vrot.slane %v797, 2
    %v799 = vmax.f32 %v797, %v798
    %v800 = vrot.slane %v799, 1
    %v801 = vmax.f32 %v799, %v800
    %v802 = vsel %vm106, %v746, -inf
    %v803 = vsel %vm757, %v747, -inf
    %v804 = vmax.f32 %v802, %v803
    %v805 = vrot.slane %v804, 4
    %v806 = vmax.f32 %v804, %v805
    %v807 = vrot.slane %v806, 2
    %v808 = vmax.f32 %v806, %v807
    %v809 = vrot.slane %v808, 1
    %v810 = vmax.f32 %v808, %v809
    %v811 = vsel %vm106, %v748, -inf
    %v812 = vsel %vm757, %v749, -inf
    %v813 = vmax.f32 %v811, %v812
    %v814 = vrot.slane %v813, 4
    %v815 = vmax.f32 %v813, %v814
    %v816 = vrot.slane %v815, 2
    %v817 = vmax.f32 %v815, %v816
    %v818 = vrot.slane %v817, 1
    %v819 = vmax.f32 %v817, %v818
    %v820 = vsel %vm106, %v750, -inf
    %v821 = vsel %vm757, %v751, -inf
    %v822 = vmax.f32 %v820, %v821
    %v823 = vrot.slane %v822, 4
    %v824 = vmax.f32 %v822, %v823
    %v825 = vrot.slane %v824, 2
    %v826 = vmax.f32 %v824, %v825
    %v827 = vrot.slane %v826, 1
    %v828 = vmax.f32 %v826, %v827
    %v829 = vsel %vm106, %v752, -inf
    %v830 = vsel %vm757, %v753, -inf
    %v831 = vmax.f32 %v829, %v830
    %v832 = vrot.slane %v831, 4
    %v833 = vmax.f32 %v831, %v832
    %v834 = vrot.slane %v833, 2
    %v835 = vmax.f32 %v833, %v834
    %v836 = vrot.slane %v835, 1
    %v837 = vmax.f32 %v835, %v836
    %v838 = vsel %vm106, %v754, -inf
    %v839 = vsel %vm757, %v755, -inf
    %v840 = vmax.f32 %v838, %v839
    %v841 = vrot.slane %v840, 4
    %v842 = vmax.f32 %v840, %v841
    %v843 = vrot.slane %v842, 2
    %v844 = vmax.f32 %v842, %v843
    %v845 = vrot.slane %v844, 1
    %v846 = vmax.f32 %v844, %v845
    %v847 = vsub.f32 %v736, %v765
    %v848 = vsub.f32 %v737, %v765
    %v849 = vsub.f32 %v738, %v774
    %v850 = vsub.f32 %v739, %v774
    %v851 = vsub.f32 %v740, %v783
    %v852 = vsub.f32 %v741, %v783
    %v853 = vsub.f32 %v742, %v792
    %v854 = vsub.f32 %v743, %v792
    %v855 = vsub.f32 %v744, %v801
    %v856 = vsub.f32 %v745, %v801
    %v857 = vsub.f32 %v746, %v810
    %v858 = vsub.f32 %v747, %v810
    %v859 = vsub.f32 %v748, %v819
    %v860 = vsub.f32 %v749, %v819
    %v861 = vsub.f32 %v750, %v828
    %v862 = vsub.f32 %v751, %v828
    %v863 = vsub.f32 %v752, %v837
    %v864 = vsub.f32 %v753, %v837
    %v865 = vsub.f32 %v754, %v846
    %v866 = vsub.f32 %v755, %v846
    %v867 = vmul.f32 %v847, 1.442695
    %v868 = vpow.pop %v867
    %v869 = vmul.f32 %v848, 1.442695
    %v870 = vpow.pop %v869
    %v871 = vmul.f32 %v849, 1.442695
    %v872 = vpow.pop %v871
    %v873 = vmul.f32 %v850, 1.442695
    %v874 = vpow.pop %v873
    %v875 = vmul.f32 %v851, 1.442695
    %v876 = vpow.pop %v875
    %v877 = vmul.f32 %v852, 1.442695
    %v878 = vpow.pop %v877
    %v879 = vmul.f32 %v853, 1.442695
    %v880 = vpow.pop %v879
    %v881 = vmul.f32 %v854, 1.442695
    %v882 = vpow.pop %v881
    %v883 = vmul.f32 %v855, 1.442695
    %v884 = vpow.pop %v883
    %v885 = vmul.f32 %v856, 1.442695
    %v886 = vpow.pop %v885
    %v887 = vmul.f32 %v857, 1.442695
    %v888 = vpow.pop %v887
    %v889 = vmul.f32 %v858, 1.442695
    %v890 = vpow.pop %v889
    %v891 = vmul.f32 %v859, 1.442695
    %v892 = vpow.pop %v891
    %v893 = vmul.f32 %v860, 1.442695
    %v894 = vpow.pop %v893
    %v895 = vmul.f32 %v861, 1.442695
    %v896 = vpow.pop %v895
    %v897 = vmul.f32 %v862, 1.442695
    %v898 = vpow.pop %v897
    %v899 = vmul.f32 %v863, 1.442695
    %v900 = vpow.pop %v899
    %v901 = vmul.f32 %v864, 1.442695
    %v902 = vpow.pop %v901
    %v903 = vmul.f32 %v865, 1.442695
    %v904 = vpow.pop %v903
    %v905 = vmul.f32 %v866, 1.442695
    %v906 = vpow.pop %v905
    %v907 = vsel %vm106, %v868, 0.0
    %v908 = vsel %vm757, %v870, 0.0
    %v909 = vadd.f32 %v907, %v908
    %v910 = vrot.slane %v909, 4
    %v911 = vadd.f32 %v909, %v910
    %v912 = vrot.slane %v911, 2
    %v913 = vadd.f32 %v911, %v912
    %v914 = vrot.slane %v913, 1
    %v915 = vadd.f32 %v913, %v914
    %v916 = vsel %vm106, %v872, 0.0
    %v917 = vsel %vm757, %v874, 0.0
    %v918 = vadd.f32 %v916, %v917
    %v919 = vrot.slane %v918, 4
    %v920 = vadd.f32 %v918, %v919
    %v921 = vrot.slane %v920, 2
    %v922 = vadd.f32 %v920, %v921
    %v923 = vrot.slane %v922, 1
    %v924 = vadd.f32 %v922, %v923
    %v925 = vsel %vm106, %v876, 0.0
    %v926 = vsel %vm757, %v878, 0.0
    %v927 = vadd.f32 %v925, %v926
    %v928 = vrot.slane %v927, 4
    %v929 = vadd.f32 %v927, %v928
    %v930 = vrot.slane %v929, 2
    %v931 = vadd.f32 %v929, %v930
    %v932 = vrot.slane %v931, 1
    %v933 = vadd.f32 %v931, %v932
    %v934 = vsel %vm106, %v880, 0.0
    %v935 = vsel %vm757, %v882, 0.0
    %v936 = vadd.f32 %v934, %v935
    %v937 = vrot.slane %v936, 4
    %v938 = vadd.f32 %v936, %v937
    %v939 = vrot.slane %v938, 2
    %v940 = vadd.f32 %v938, %v939
    %v941 = vrot.slane %v940, 1
    %v942 = vadd.f32 %v940, %v941
    %v943 = vsel %vm106, %v884, 0.0
    %v944 = vsel %vm757, %v886, 0.0
    %v945 = vadd.f32 %v943, %v944
    %v946 = vrot.slane %v945, 4
    %v947 = vadd.f32 %v945, %v946
    %v948 = vrot.slane %v947, 2
    %v949 = vadd.f32 %v947, %v948
    %v950 = vrot.slane %v949, 1
    %v951 = vadd.f32 %v949, %v950
    %v952 = vsel %vm106, %v888, 0.0
    %v953 = vsel %vm757, %v890, 0.0
    %v954 = vadd.f32 %v952, %v953
    %v955 = vrot.slane %v954, 4
    %v956 = vadd.f32 %v954, %v955
    %v957 = vrot.slane %v956, 2
    %v958 = vadd.f32 %v956, %v957
    %v959 = vrot.slane %v958, 1
    %v960 = vadd.f32 %v958, %v959
    %v961 = vsel %vm106, %v892, 0.0
    %v962 = vsel %vm757, %v894, 0.0
    %v963 = vadd.f32 %v961, %v962
    %v964 = vrot.slane %v963, 4
    %v965 = vadd.f32 %v963, %v964
    %v966 = vrot.slane %v965, 2
    %v967 = vadd.f32 %v965, %v966
    %v968 = vrot.slane %v967, 1
    %v969 = vadd.f32 %v967, %v968
    %v970 = vsel %vm106, %v896, 0.0
    %v971 = vsel %vm757, %v898, 0.0
    %v972 = vadd.f32 %v970, %v971
    %v973 = vrot.slane %v972, 4
    %v974 = vadd.f32 %v972, %v973
    %v975 = vrot.slane %v974, 2
    %v976 = vadd.f32 %v974, %v975
    %v977 = vrot.slane %v976, 1
    %v978 = vadd.f32 %v976, %v977
    %v979 = vsel %vm106, %v900, 0.0
    %v980 = vsel %vm757, %v902, 0.0
    %v981 = vadd.f32 %v979, %v980
    %v982 = vrot.slane %v981, 4
    %v983 = vadd.f32 %v981, %v982
    %v984 = vrot.slane %v983, 2
    %v985 = vadd.f32 %v983, %v984
    %v986 = vrot.slane %v985, 1
    %v987 = vadd.f32 %v985, %v986
    %v988 = vsel %vm106, %v904, 0.0
    %v989 = vsel %vm757, %v906, 0.0
    %v990 = vadd.f32 %v988, %v989
    %v991 = vrot.slane %v990, 4
    %v992 = vadd.f32 %v990, %v991
    %v993 = vrot.slane %v992, 2
    %v994 = vadd.f32 %v992, %v993
    %v995 = vrot.slane %v994, 1
    %v996 = vadd.f32 %v994, %v995
    %v997 = vrcp.pop %v915
    %v998 = vmul.f32 %v868, %v997
    %v999 = vmul.f32 %v870, %v997
    %v1000 = vrcp.pop %v924
    %v1001 = vmul.f32 %v872, %v1000
    %v1002 = vmul.f32 %v874, %v1000
    %v1003 = vrcp.pop %v933
    %v1004 = vmul.f32 %v876, %v1003
    %v1005 = vmul.f32 %v878, %v1003
    %v1006 = vrcp.pop %v942
    %v1007 = vmul.f32 %v880, %v1006
    %v1008 = vmul.f32 %v882, %v1006
    %v1009 = vrcp.pop %v951
    %v1010 = vmul.f32 %v884, %v1009
    %v1011 = vmul.f32 %v886, %v1009
    %v1012 = vrcp.pop %v960
    %v1013 = vmul.f32 %v888, %v1012
    %v1014 = vmul.f32 %v890, %v1012
    %v1015 = vrcp.pop %v969
    %v1016 = vmul.f32 %v892, %v1015
    %v1017 = vmul.f32 %v894, %v1015
    %v1018 = vrcp.pop %v978
    %v1019 = vmul.f32 %v896, %v1018
    %v1020 = vmul.f32 %v898, %v1018
    %v1021 = vrcp.pop %v987
    %v1022 = vmul.f32 %v900, %v1021
    %v1023 = vmul.f32 %v902, %v1021
    %v1024 = vrcp.pop %v996
    %v1025 = vmul.f32 %v904, %v1024
    %v1026 = vmul.f32 %v906, %v1024
    %v1027 = vmul.f32 %v998, %v600
    %v1028 = vmul.f32 %v999, %v605
    %v1029 = vmul.f32 %v1001, %v600
    %v1030 = vmul.f32 %v1002, %v605
    %v1031 = vmul.f32 %v1004, %v600
    %v1032 = vmul.f32 %v1005, %v605
    %v1033 = vmul.f32 %v1007, %v600
    %v1034 = vmul.f32 %v1008, %v605
    %v1035 = vmul.f32 %v1010, %v600
    %v1036 = vmul.f32 %v1011, %v605
    %v1037 = vmul.f32 %v1013, %v600
    %v1038 = vmul.f32 %v1014, %v605
    %v1039 = vmul.f32 %v1016, %v600
    %v1040 = vmul.f32 %v1017, %v605
    %v1041 = vmul.f32 %v1019, %v600
    %v1042 = vmul.f32 %v1020, %v605
    %v1043 = vmul.f32 %v1022, %v600
    %v1044 = vmul.f32 %v1023, %v605
    %v1045 = vmul.f32 %v1025, %v600
    %v1046 = vmul.f32 %v1026, %v605
    %v1047 = vsel %vm106, %v1027, 0.0
    %v1048 = vsel %vm757, %v1028, 0.0
    %v1049 = vadd.f32 %v1047, %v1048
    %v1050 = vrot.slane %v1049, 4
    %v1051 = vadd.f32 %v1049, %v1050
    %v1052 = vrot.slane %v1051, 2
    %v1053 = vadd.f32 %v1051, %v1052
    %v1054 = vrot.slane %v1053, 1
    %v1055 = vadd.f32 %v1053, %v1054
    %v1056 = vsel %vm106, %v1029, 0.0
    %v1057 = vsel %vm757, %v1030, 0.0
    %v1058 = vadd.f32 %v1056, %v1057
    %v1059 = vrot.slane %v1058, 4
    %v1060 = vadd.f32 %v1058, %v1059
    %v1061 = vrot.slane %v1060, 2
    %v1062 = vadd.f32 %v1060, %v1061
    %v1063 = vrot.slane %v1062, 1
    %v1064 = vadd.f32 %v1062, %v1063
    %v1065 = vsel %vm106, %v1031, 0.0
    %v1066 = vsel %vm757, %v1032, 0.0
    %v1067 = vadd.f32 %v1065, %v1066
    %v1068 = vrot.slane %v1067, 4
    %v1069 = vadd.f32 %v1067, %v1068
    %v1070 = vrot.slane %v1069, 2
    %v1071 = vadd.f32 %v1069, %v1070
    %v1072 = vrot.slane %v1071, 1
    %v1073 = vadd.f32 %v1071, %v1072
    %v1074 = vsel %vm106, %v1033, 0.0
    %v1075 = vsel %vm757, %v1034, 0.0
    %v1076 = vadd.f32 %v1074, %v1075
    %v1077 = vrot.slane %v1076, 4
    %v1078 = vadd.f32 %v1076, %v1077
    %v1079 = vrot.slane %v1078, 2
    %v1080 = vadd.f32 %v1078, %v1079
    %v1081 = vrot.slane %v1080, 1
    %v1082 = vadd.f32 %v1080, %v1081
    %v1083 = vsel %vm106, %v1035, 0.0
    %v1084 = vsel %vm757, %v1036, 0.0
    %v1085 = vadd.f32 %v1083, %v1084
    %v1086 = vrot.slane %v1085, 4
    %v1087 = vadd.f32 %v1085, %v1086
    %v1088 = vrot.slane %v1087, 2
    %v1089 = vadd.f32 %v1087, %v1088
    %v1090 = vrot.slane %v1089, 1
    %v1091 = vadd.f32 %v1089, %v1090
    %v1092 = vsel %vm106, %v1037, 0.0
    %v1093 = vsel %vm757, %v1038, 0.0
    %v1094 = vadd.f32 %v1092, %v1093
    %v1095 = vrot.slane %v1094, 4
    %v1096 = vadd.f32 %v1094, %v1095
    %v1097 = vrot.slane %v1096, 2
    %v1098 = vadd.f32 %v1096, %v1097
    %v1099 = vrot.slane %v1098, 1
    %v1100 = vadd.f32 %v1098, %v1099
    %v1101 = vsel %vm106, %v1039, 0.0
    %v1102 = vsel %vm757, %v1040, 0.0
    %v1103 = vadd.f32 %v1101, %v1102
    %v1104 = vrot.slane %v1103, 4
    %v1105 = vadd.f32 %v1103, %v1104
    %v1106 = vrot.slane %v1105, 2
    %v1107 = vadd.f32 %v1105, %v1106
    %v1108 = vrot.slane %v1107, 1
    %v1109 = vadd.f32 %v1107, %v1108
    %v1110 = vsel %vm106, %v1041, 0.0
    %v1111 = vsel %vm757, %v1042, 0.0
    %v1112 = vadd.f32 %v1110, %v1111
    %v1113 = vrot.slane %v1112, 4
    %v1114 = vadd.f32 %v1112, %v1113
    %v1115 = vrot.slane %v1114, 2
    %v1116 = vadd.f32 %v1114, %v1115
    %v1117 = vrot.slane %v1116, 1
    %v1118 = vadd.f32 %v1116, %v1117
    %v1119 = vsel %vm106, %v1043, 0.0
    %v1120 = vsel %vm757, %v1044, 0.0
    %v1121 = vadd.f32 %v1119, %v1120
    %v1122 = vrot.slane %v1121, 4
    %v1123 = vadd.f32 %v1121, %v1122
    %v1124 = vrot.slane %v1123, 2
    %v1125 = vadd.f32 %v1123, %v1124
    %v1126 = vrot.slane %v1125, 1
    %v1127 = vadd.f32 %v1125, %v1126
    %v1128 = vsel %vm106, %v1045, 0.0
    %v1129 = vsel %vm757, %v1046, 0.0
    %v1130 = vadd.f32 %v1128, %v1129
    %v1131 = vrot.slane %v1130, 4
    %v1132 = vadd.f32 %v1130, %v1131
    %v1133 = vrot.slane %v1132, 2
    %v1134 = vadd.f32 %v1132, %v1133
    %v1135 = vrot.slane %v1134, 1
    %v1136 = vadd.f32 %v1134, %v1135
    %v1138 = vcombine.high %v425, %v425
    %v1140 = vunpack.c.l.s4 1966171168
    %v1141 = vunpack.c.0.s8 %v1140
    %v1142 = vlaneseq
    %v1143 = vshrl.u32 %v1142, 7
    %v1144 = vsub.s32 %v1141, %v1143
    %v1145 = vrot.slane %v1138, %v1144
    %v1146 = vcombine.high %v1145, %v1145
    %v1148 = vunpack.c.l.s4 1966171168
    %v1149 = vunpack.c.0.s8 %v1148
    %v1150 = vlaneseq
    %v1151 = vshrl.u32 %v1150, 7
    %v1152 = vsub.s32 %v1149, %v1151
    %v1153 = vrot.slane %v1145, %v1152
    %v1155 = vunpack.c.l.s4 1966171168
    %v1156 = vunpack.c.0.s8 %v1155
    %v1157 = vlaneseq
    %v1158 = vshrl.u32 %v1157, 7
    %v1159 = vsub.s32 %v1156, %v1158
    %v1160 = vrot.slane %v1146, %v1159
    %v1161 = vcombine.high %v678, %v678
    %v1162 = vcombine.high %v1153, %v1153
    %v1163 = vcombine.high %v685, %v685
    %v1164 = vcombine.high %v1160, %v1160
    %v1166 = vunpack.c.l.s4 1966171168
    %v1167 = vunpack.c.0.s8 %v1166
    %v1168 = vlaneseq
    %v1169 = vshrl.u32 %v1168, 7
    %v1170 = vsub.s32 %v1167, %v1169
    %v1171 = vrot.slane %v430, %v1170
    %v1172 = vcombine.high %v1171, %v1171
    %v1174 = vunpack.c.l.s4 1966171168
    %v1175 = vunpack.c.0.s8 %v1174
    %v1176 = vlaneseq
    %v1177 = vshrl.u32 %v1176, 7
    %v1178 = vsub.s32 %v1175, %v1177
    %v1179 = vrot.slane %v1171, %v1178
    %v1181 = vunpack.c.l.s4 1966171168
    %v1182 = vunpack.c.0.s8 %v1181
    %v1183 = vlaneseq
    %v1184 = vshrl.u32 %v1183, 7
    %v1185 = vsub.s32 %v1182, %v1184
    %v1186 = vrot.slane %v1172, %v1185
    %v1187 = vcombine.high %v1179, %v1179
    %v1188 = vcombine.high %v1186, %v1186
    %v1189 = vlaneseq
    %v1190 = vshrl.u32 %v1189, 7
    %v1191 = vsub.s32 0, %v1190
    %v1192 = vrot.slane %v1161, %v1191
    %v1193 = vlaneseq
    %v1194 = vshrl.u32 %v1193, 7
    %v1195 = vsub.s32 0, %v1194
    %v1196 = vrot.slane %v1163, %v1195
    %v1197 = vlaneseq
    %v1198 = vshrl.u32 %v1197, 7
    %v1199 = vsub.s32 0, %v1198
    %v1200 = vrot.slane %v1153, %v1199
    %v1201 = vlaneseq
    %v1202 = vshrl.u32 %v1201, 7
    %v1203 = vsub.s32 0, %v1202
    %v1204 = vrot.slane %v1160, %v1203
    %v1205 = vlaneseq
    %v1206 = vshrl.u32 %v1205, 7
    %v1207 = vsub.s32 0, %v1206
    %v1208 = vrot.slane %v1162, %v1207
    %v1209 = vlaneseq
    %v1210 = vshrl.u32 %v1209, 7
    %v1211 = vsub.s32 0, %v1210
    %v1212 = vrot.slane %v1164, %v1211
    %v1213 = vlaneseq
    %v1214 = vshrl.u32 %v1213, 7
    %v1215 = vsub.s32 0, %v1214
    %v1216 = vrot.slane %v1179, %v1215
    %v1217 = vlaneseq
    %v1218 = vshrl.u32 %v1217, 7
    %v1219 = vsub.s32 0, %v1218
    %v1220 = vrot.slane %v1186, %v1219
    %v1221 = vlaneseq
    %v1222 = vshrl.u32 %v1221, 7
    %v1223 = vsub.s32 0, %v1222
    %v1224 = vrot.slane %v1187, %v1223
    %v1225 = vlaneseq
    %v1226 = vshrl.u32 %v1225, 7
    %v1227 = vsub.s32 0, %v1226
    %v1228 = vrot.slane %v1188, %v1227
    %v1239 = vmul.f32 %v1192, %v515
    %v1240 = vmul.f32 %v1192, %v520
    %v1241 = vmul.f32 %v1196, %v515
    %v1242 = vmul.f32 %v1196, %v520
    %v1243 = vmul.f32 %v1200, %v515
    %v1244 = vmul.f32 %v1200, %v520
    %v1245 = vmul.f32 %v1204, %v515
    %v1246 = vmul.f32 %v1204, %v520
    %v1247 = vmul.f32 %v1208, %v515
    %v1248 = vmul.f32 %v1208, %v520
    %v1249 = vmul.f32 %v1212, %v515
    %v1250 = vmul.f32 %v1212, %v520
    %v1251 = vmul.f32 %v1216, %v515
    %v1252 = vmul.f32 %v1216, %v520
    %v1253 = vmul.f32 %v1220, %v515
    %v1254 = vmul.f32 %v1220, %v520
    %v1255 = vmul.f32 %v1224, %v515
    %v1256 = vmul.f32 %v1224, %v520
    %v1257 = vmul.f32 %v1228, %v515
    %v1258 = vmul.f32 %v1228, %v520
    %vm1259 = vcmask 195586
    %v1260 = vsel %vm1259, %v1239, -inf
    %vm1261 = vcmask 191488
    %v1262 = vsel %vm1261, %v1240, -inf
    %v1263 = vmax.f32 %v1260, %v1262
    %v1264 = vrot.slane %v1263, 4
    %v1265 = vmax.f32 %v1263, %v1264
    %v1266 = vrot.slane %v1265, 2
    %v1267 = vmax.f32 %v1265, %v1266
    %v1268 = vrot.slane %v1267, 1
    %v1269 = vmax.f32 %v1267, %v1268
    %v1270 = vsel %vm1259, %v1241, -inf
    %v1271 = vsel %vm1261, %v1242, -inf
    %v1272 = vmax.f32 %v1270, %v1271
    %v1273 = vrot.slane %v1272, 4
    %v1274 = vmax.f32 %v1272, %v1273
    %v1275 = vrot.slane %v1274, 2
    %v1276 = vmax.f32 %v1274, %v1275
    %v1277 = vrot.slane %v1276, 1
    %v1278 = vmax.f32 %v1276, %v1277
    %v1279 = vsel %vm1259, %v1243, -inf
    %v1280 = vsel %vm1261, %v1244, -inf
    %v1281 = vmax.f32 %v1279, %v1280
    %v1282 = vrot.slane %v1281, 4
    %v1283 = vmax.f32 %v1281, %v1282
    %v1284 = vrot.slane %v1283, 2
    %v1285 = vmax.f32 %v1283, %v1284
    %v1286 = vrot.slane %v1285, 1
    %v1287 = vmax.f32 %v1285, %v1286
    %v1288 = vsel %vm1259, %v1245, -inf
    %v1289 = vsel %vm1261, %v1246, -inf
    %v1290 = vmax.f32 %v1288, %v1289
    %v1291 = vrot.slane %v1290, 4
    %v1292 = vmax.f32 %v1290, %v1291
    %v1293 = vrot.slane %v1292, 2
    %v1294 = vmax.f32 %v1292, %v1293
    %v1295 = vrot.slane %v1294, 1
    %v1296 = vmax.f32 %v1294, %v1295
    %v1297 = vsel %vm1259, %v1247, -inf
    %v1298 = vsel %vm1261, %v1248, -inf
    %v1299 = vmax.f32 %v1297, %v1298
    %v1300 = vrot.slane %v1299, 4
    %v1301 = vmax.f32 %v1299, %v1300
    %v1302 = vrot.slane %v1301, 2
    %v1303 = vmax.f32 %v1301, %v1302
    %v1304 = vrot.slane %v1303, 1
    %v1305 = vmax.f32 %v1303, %v1304
    %v1306 = vsel %vm1259, %v1249, -inf
    %v1307 = vsel %vm1261, %v1250, -inf
    %v1308 = vmax.f32 %v1306, %v1307
    %v1309 = vrot.slane %v1308, 4
    %v1310 = vmax.f32 %v1308, %v1309
    %v1311 = vrot.slane %v1310, 2
    %v1312 = vmax.f32 %v1310, %v1311
    %v1313 = vrot.slane %v1312, 1
    %v1314 = vmax.f32 %v1312, %v1313
    %v1315 = vsel %vm1259, %v1251, -inf
    %v1316 = vsel %vm1261, %v1252, -inf
    %v1317 = vmax.f32 %v1315, %v1316
    %v1318 = vrot.slane %v1317, 4
    %v1319 = vmax.f32 %v1317, %v1318
    %v1320 = vrot.slane %v1319, 2
    %v1321 = vmax.f32 %v1319, %v1320
    %v1322 = vrot.slane %v1321, 1
    %v1323 = vmax.f32 %v1321, %v1322
    %v1324 = vsel %vm1259, %v1253, -inf
    %v1325 = vsel %vm1261, %v1254, -inf
    %v1326 = vmax.f32 %v1324, %v1325
    %v1327 = vrot.slane %v1326, 4
    %v1328 = vmax.f32 %v1326, %v1327
    %v1329 = vrot.slane %v1328, 2
    %v1330 = vmax.f32 %v1328, %v1329
    %v1331 = vrot.slane %v1330, 1
    %v1332 = vmax.f32 %v1330, %v1331
    %v1333 = vsel %vm1259, %v1255, -inf
    %v1334 = vsel %vm1261, %v1256, -inf
    %v1335 = vmax.f32 %v1333, %v1334
    %v1336 = vrot.slane %v1335, 4
    %v1337 = vmax.f32 %v1335, %v1336
    %v1338 = vrot.slane %v1337, 2
    %v1339 = vmax.f32 %v1337, %v1338
    %v1340 = vrot.slane %v1339, 1
    %v1341 = vmax.f32 %v1339, %v1340
    %v1342 = vsel %vm1259, %v1257, -inf
    %v1343 = vsel %vm1261, %v1258, -inf
    %v1344 = vmax.f32 %v1342, %v1343
    %v1345 = vrot.slane %v1344, 4
    %v1346 = vmax.f32 %v1344, %v1345
    %v1347 = vrot.slane %v1346, 2
    %v1348 = vmax.f32 %v1346, %v1347
    %v1349 = vrot.slane %v1348, 1
    %v1350 = vmax.f32 %v1348, %v1349
    %v1351 = vsub.f32 %v1239, %v1269
    %v1352 = vsub.f32 %v1240, %v1269
    %v1353 = vsub.f32 %v1241, %v1278
    %v1354 = vsub.f32 %v1242, %v1278
    %v1355 = vsub.f32 %v1243, %v1287
    %v1356 = vsub.f32 %v1244, %v1287
    %v1357 = vsub.f32 %v1245, %v1296
    %v1358 = vsub.f32 %v1246, %v1296
    %v1359 = vsub.f32 %v1247, %v1305
    %v1360 = vsub.f32 %v1248, %v1305
    %v1361 = vsub.f32 %v1249, %v1314
    %v1362 = vsub.f32 %v1250, %v1314
    %v1363 = vsub.f32 %v1251, %v1323
    %v1364 = vsub.f32 %v1252, %v1323
    %v1365 = vsub.f32 %v1253, %v1332
    %v1366 = vsub.f32 %v1254, %v1332
    %v1367 = vsub.f32 %v1255, %v1341
    %v1368 = vsub.f32 %v1256, %v1341
    %v1369 = vsub.f32 %v1257, %v1350
    %v1370 = vsub.f32 %v1258, %v1350
    %v1371 = vmul.f32 %v1351, 1.442695
    %v1372 = vpow.pop %v1371
    %v1373 = vmul.f32 %v1352, 1.442695
    %v1374 = vpow.pop %v1373
    %v1375 = vmul.f32 %v1353, 1.442695
    %v1376 = vpow.pop %v1375
    %v1377 = vmul.f32 %v1354, 1.442695
    %v1378 = vpow.pop %v1377
    %v1379 = vmul.f32 %v1355, 1.442695
    %v1380 = vpow.pop %v1379
    %v1381 = vmul.f32 %v1356, 1.442695
    %v1382 = vpow.pop %v1381
    %v1383 = vmul.f32 %v1357, 1.442695
    %v1384 = vpow.pop %v1383
    %v1385 = vmul.f32 %v1358, 1.442695
    %v1386 = vpow.pop %v1385
    %v1387 = vmul.f32 %v1359, 1.442695
    %v1388 = vpow.pop %v1387
    %v1389 = vmul.f32 %v1360, 1.442695
    %v1390 = vpow.pop %v1389
    %v1391 = vmul.f32 %v1361, 1.442695
    %v1392 = vpow.pop %v1391
    %v1393 = vmul.f32 %v1362, 1.442695
    %v1394 = vpow.pop %v1393
    %v1395 = vmul.f32 %v1363, 1.442695
    %v1396 = vpow.pop %v1395
    %v1397 = vmul.f32 %v1364, 1.442695
    %v1398 = vpow.pop %v1397
    %v1399 = vmul.f32 %v1365, 1.442695
    %v1400 = vpow.pop %v1399
    %v1401 = vmul.f32 %v1366, 1.442695
    %v1402 = vpow.pop %v1401
    %v1403 = vmul.f32 %v1367, 1.442695
    %v1404 = vpow.pop %v1403
    %v1405 = vmul.f32 %v1368, 1.442695
    %v1406 = vpow.pop %v1405
    %v1407 = vmul.f32 %v1369, 1.442695
    %v1408 = vpow.pop %v1407
    %v1409 = vmul.f32 %v1370, 1.442695
    %v1410 = vpow.pop %v1409
    %vm1431 = vcmask 1045504
    %v1432 = vrot.slane %v1372, 2
    %v1433 = vrot.slane %v1374, 2
    %v1434 = vsel %vm1431, %v1432, %v1433
    %v1435 = vrot.slane %v1376, 2
    %v1436 = vrot.slane %v1378, 2
    %v1437 = vsel %vm1431, %v1435, %v1436
    %v1438 = vrot.slane %v1380, 2
    %v1439 = vrot.slane %v1382, 2
    %v1440 = vsel %vm1431, %v1438, %v1439
    %v1441 = vrot.slane %v1384, 2
    %v1442 = vrot.slane %v1386, 2
    %v1443 = vsel %vm1431, %v1441, %v1442
    %v1444 = vrot.slane %v1388, 2
    %v1445 = vrot.slane %v1390, 2
    %v1446 = vsel %vm1431, %v1444, %v1445
    %v1447 = vrot.slane %v1392, 2
    %v1448 = vrot.slane %v1394, 2
    %v1449 = vsel %vm1431, %v1447, %v1448
    %v1450 = vrot.slane %v1396, 2
    %v1451 = vrot.slane %v1398, 2
    %v1452 = vsel %vm1431, %v1450, %v1451
    %v1453 = vrot.slane %v1400, 2
    %v1454 = vrot.slane %v1402, 2
    %v1455 = vsel %vm1431, %v1453, %v1454
    %v1456 = vrot.slane %v1404, 2
    %v1457 = vrot.slane %v1406, 2
    %v1458 = vsel %vm1431, %v1456, %v1457
    %v1459 = vrot.slane %v1408, 2
    %v1460 = vrot.slane %v1410, 2
    %v1461 = vsel %vm1431, %v1459, %v1460
    %v1482 = vsel %vm106, %v1434, 0.0
    %v1483 = vsel %vm757, %v1433, 0.0
    %v1484 = vadd.f32 %v1482, %v1483
    %v1485 = vrot.slane %v1484, 4
    %v1486 = vadd.f32 %v1484, %v1485
    %v1487 = vrot.slane %v1486, 2
    %v1488 = vadd.f32 %v1486, %v1487
    %v1489 = vrot.slane %v1488, 1
    %v1490 = vadd.f32 %v1488, %v1489
    %v1491 = vsel %vm106, %v1437, 0.0
    %v1492 = vsel %vm757, %v1436, 0.0
    %v1493 = vadd.f32 %v1491, %v1492
    %v1494 = vrot.slane %v1493, 4
    %v1495 = vadd.f32 %v1493, %v1494
    %v1496 = vrot.slane %v1495, 2
    %v1497 = vadd.f32 %v1495, %v1496
    %v1498 = vrot.slane %v1497, 1
    %v1499 = vadd.f32 %v1497, %v1498
    %v1500 = vsel %vm106, %v1440, 0.0
    %v1501 = vsel %vm757, %v1439, 0.0
    %v1502 = vadd.f32 %v1500, %v1501
    %v1503 = vrot.slane %v1502, 4
    %v1504 = vadd.f32 %v1502, %v1503
    %v1505 = vrot.slane %v1504, 2
    %v1506 = vadd.f32 %v1504, %v1505
    %v1507 = vrot.slane %v1506, 1
    %v1508 = vadd.f32 %v1506, %v1507
    %v1509 = vsel %vm106, %v1443, 0.0
    %v1510 = vsel %vm757, %v1442, 0.0
    %v1511 = vadd.f32 %v1509, %v1510
    %v1512 = vrot.slane %v1511, 4
    %v1513 = vadd.f32 %v1511, %v1512
    %v1514 = vrot.slane %v1513, 2
    %v1515 = vadd.f32 %v1513, %v1514
    %v1516 = vrot.slane %v1515, 1
    %v1517 = vadd.f32 %v1515, %v1516
    %v1518 = vsel %vm106, %v1446, 0.0
    %v1519 = vsel %vm757, %v1445, 0.0
    %v1520 = vadd.f32 %v1518, %v1519
    %v1521 = vrot.slane %v1520, 4
    %v1522 = vadd.f32 %v1520, %v1521
    %v1523 = vrot.slane %v1522, 2
    %v1524 = vadd.f32 %v1522, %v1523
    %v1525 = vrot.slane %v1524, 1
    %v1526 = vadd.f32 %v1524, %v1525
    %v1527 = vsel %vm106, %v1449, 0.0
    %v1528 = vsel %vm757, %v1448, 0.0
    %v1529 = vadd.f32 %v1527, %v1528
    %v1530 = vrot.slane %v1529, 4
    %v1531 = vadd.f32 %v1529, %v1530
    %v1532 = vrot.slane %v1531, 2
    %v1533 = vadd.f32 %v1531, %v1532
    %v1534 = vrot.slane %v1533, 1
    %v1535 = vadd.f32 %v1533, %v1534
    %v1536 = vsel %vm106, %v1452, 0.0
    %v1537 = vsel %vm757, %v1451, 0.0
    %v1538 = vadd.f32 %v1536, %v1537
    %v1539 = vrot.slane %v1538, 4
    %v1540 = vadd.f32 %v1538, %v1539
    %v1541 = vrot.slane %v1540, 2
    %v1542 = vadd.f32 %v1540, %v1541
    %v1543 = vrot.slane %v1542, 1
    %v1544 = vadd.f32 %v1542, %v1543
    %v1545 = vsel %vm106, %v1455, 0.0
    %v1546 = vsel %vm757, %v1454, 0.0
    %v1547 = vadd.f32 %v1545, %v1546
    %v1548 = vrot.slane %v1547, 4
    %v1549 = vadd.f32 %v1547, %v1548
    %v1550 = vrot.slane %v1549, 2
    %v1551 = vadd.f32 %v1549, %v1550
    %v1552 = vrot.slane %v1551, 1
    %v1553 = vadd.f32 %v1551, %v1552
    %v1554 = vsel %vm106, %v1458, 0.0
    %v1555 = vsel %vm757, %v1457, 0.0
    %v1556 = vadd.f32 %v1554, %v1555
    %v1557 = vrot.slane %v1556, 4
    %v1558 = vadd.f32 %v1556, %v1557
    %v1559 = vrot.slane %v1558, 2
    %v1560 = vadd.f32 %v1558, %v1559
    %v1561 = vrot.slane %v1560, 1
    %v1562 = vadd.f32 %v1560, %v1561
    %v1563 = vsel %vm106, %v1461, 0.0
    %v1564 = vsel %vm757, %v1460, 0.0
    %v1565 = vadd.f32 %v1563, %v1564
    %v1566 = vrot.slane %v1565, 4
    %v1567 = vadd.f32 %v1565, %v1566
    %v1568 = vrot.slane %v1567, 2
    %v1569 = vadd.f32 %v1567, %v1568
    %v1570 = vrot.slane %v1569, 1
    %v1571 = vadd.f32 %v1569, %v1570
    %v1572 = vrcp.pop %v1490
    %v1573 = vmul.f32 %v1372, %v1572
    %v1574 = vmul.f32 %v1374, %v1572
    %v1575 = vrcp.pop %v1499
    %v1576 = vmul.f32 %v1376, %v1575
    %v1577 = vmul.f32 %v1378, %v1575
    %v1578 = vrcp.pop %v1508
    %v1579 = vmul.f32 %v1380, %v1578
    %v1580 = vmul.f32 %v1382, %v1578
    %v1581 = vrcp.pop %v1517
    %v1582 = vmul.f32 %v1384, %v1581
    %v1583 = vmul.f32 %v1386, %v1581
    %v1584 = vrcp.pop %v1526
    %v1585 = vmul.f32 %v1388, %v1584
    %v1586 = vmul.f32 %v1390, %v1584
    %v1587 = vrcp.pop %v1535
    %v1588 = vmul.f32 %v1392, %v1587
    %v1589 = vmul.f32 %v1394, %v1587
    %v1590 = vrcp.pop %v1544
    %v1591 = vmul.f32 %v1396, %v1590
    %v1592 = vmul.f32 %v1398, %v1590
    %v1593 = vrcp.pop %v1553
    %v1594 = vmul.f32 %v1400, %v1593
    %v1595 = vmul.f32 %v1402, %v1593
    %v1596 = vrcp.pop %v1562
    %v1597 = vmul.f32 %v1404, %v1596
    %v1598 = vmul.f32 %v1406, %v1596
    %v1599 = vrcp.pop %v1571
    %v1600 = vmul.f32 %v1408, %v1599
    %v1601 = vmul.f32 %v1410, %v1599
    %v1602 = vmul.f32 %v1573, %v605
    %v1603 = vmul.f32 %v1574, %v610
    %v1604 = vmul.f32 %v1576, %v605
    %v1605 = vmul.f32 %v1577, %v610
    %v1606 = vmul.f32 %v1579, %v605
    %v1607 = vmul.f32 %v1580, %v610
    %v1608 = vmul.f32 %v1582, %v605
    %v1609 = vmul.f32 %v1583, %v610
    %v1610 = vmul.f32 %v1585, %v605
    %v1611 = vmul.f32 %v1586, %v610
    %v1612 = vmul.f32 %v1588, %v605
    %v1613 = vmul.f32 %v1589, %v610
    %v1614 = vmul.f32 %v1591, %v605
    %v1615 = vmul.f32 %v1592, %v610
    %v1616 = vmul.f32 %v1594, %v605
    %v1617 = vmul.f32 %v1595, %v610
    %v1618 = vmul.f32 %v1597, %v605
    %v1619 = vmul.f32 %v1598, %v610
    %v1620 = vmul.f32 %v1600, %v605
    %v1621 = vmul.f32 %v1601, %v610
    %v1642 = vrot.slane %v1602, 2
    %v1643 = vrot.slane %v1603, 2
    %v1644 = vsel %vm1431, %v1642, %v1643
    %v1645 = vrot.slane %v1604, 2
    %v1646 = vrot.slane %v1605, 2
    %v1647 = vsel %vm1431, %v1645, %v1646
    %v1648 = vrot.slane %v1606, 2
    %v1649 = vrot.slane %v1607, 2
    %v1650 = vsel %vm1431, %v1648, %v1649
    %v1651 = vrot.slane %v1608, 2
    %v1652 = vrot.slane %v1609, 2
    %v1653 = vsel %vm1431, %v1651, %v1652
    %v1654 = vrot.slane %v1610, 2
    %v1655 = vrot.slane %v1611, 2
    %v1656 = vsel %vm1431, %v1654, %v1655
    %v1657 = vrot.slane %v1612, 2
    %v1658 = vrot.slane %v1613, 2
    %v1659 = vsel %vm1431, %v1657, %v1658
    %v1660 = vrot.slane %v1614, 2
    %v1661 = vrot.slane %v1615, 2
    %v1662 = vsel %vm1431, %v1660, %v1661
    %v1663 = vrot.slane %v1616, 2
    %v1664 = vrot.slane %v1617, 2
    %v1665 = vsel %vm1431, %v1663, %v1664
    %v1666 = vrot.slane %v1618, 2
    %v1667 = vrot.slane %v1619, 2
    %v1668 = vsel %vm1431, %v1666, %v1667
    %v1669 = vrot.slane %v1620, 2
    %v1670 = vrot.slane %v1621, 2
    %v1671 = vsel %vm1431, %v1669, %v1670
    %v1692 = vsel %vm106, %v1644, 0.0
    %v1693 = vsel %vm757, %v1643, 0.0
    %v1694 = vadd.f32 %v1692, %v1693
    %v1695 = vrot.slane %v1694, 4
    %v1696 = vadd.f32 %v1694, %v1695
    %v1697 = vrot.slane %v1696, 2
    %v1698 = vadd.f32 %v1696, %v1697
    %v1699 = vrot.slane %v1698, 1
    %v1700 = vadd.f32 %v1698, %v1699
    %v1701 = vsel %vm106, %v1647, 0.0
    %v1702 = vsel %vm757, %v1646, 0.0
    %v1703 = vadd.f32 %v1701, %v1702
    %v1704 = vrot.slane %v1703, 4
    %v1705 = vadd.f32 %v1703, %v1704
    %v1706 = vrot.slane %v1705, 2
    %v1707 = vadd.f32 %v1705, %v1706
    %v1708 = vrot.slane %v1707, 1
    %v1709 = vadd.f32 %v1707, %v1708
    %v1710 = vsel %vm106, %v1650, 0.0
    %v1711 = vsel %vm757, %v1649, 0.0
    %v1712 = vadd.f32 %v1710, %v1711
    %v1713 = vrot.slane %v1712, 4
    %v1714 = vadd.f32 %v1712, %v1713
    %v1715 = vrot.slane %v1714, 2
    %v1716 = vadd.f32 %v1714, %v1715
    %v1717 = vrot.slane %v1716, 1
    %v1718 = vadd.f32 %v1716, %v1717
    %v1719 = vsel %vm106, %v1653, 0.0
    %v1720 = vsel %vm757, %v1652, 0.0
    %v1721 = vadd.f32 %v1719, %v1720
    %v1722 = vrot.slane %v1721, 4
    %v1723 = vadd.f32 %v1721, %v1722
    %v1724 = vrot.slane %v1723, 2
    %v1725 = vadd.f32 %v1723, %v1724
    %v1726 = vrot.slane %v1725, 1
    %v1727 = vadd.f32 %v1725, %v1726
    %v1728 = vsel %vm106, %v1656, 0.0
    %v1729 = vsel %vm757, %v1655, 0.0
    %v1730 = vadd.f32 %v1728, %v1729
    %v1731 = vrot.slane %v1730, 4
    %v1732 = vadd.f32 %v1730, %v1731
    %v1733 = vrot.slane %v1732, 2
    %v1734 = vadd.f32 %v1732, %v1733
    %v1735 = vrot.slane %v1734, 1
    %v1736 = vadd.f32 %v1734, %v1735
    %v1737 = vsel %vm106, %v1659, 0.0
    %v1738 = vsel %vm757, %v1658, 0.0
    %v1739 = vadd.f32 %v1737, %v1738
    %v1740 = vrot.slane %v1739, 4
    %v1741 = vadd.f32 %v1739, %v1740
    %v1742 = vrot.slane %v1741, 2
    %v1743 = vadd.f32 %v1741, %v1742
    %v1744 = vrot.slane %v1743, 1
    %v1745 = vadd.f32 %v1743, %v1744
    %v1746 = vsel %vm106, %v1662, 0.0
    %v1747 = vsel %vm757, %v1661, 0.0
    %v1748 = vadd.f32 %v1746, %v1747
    %v1749 = vrot.slane %v1748, 4
    %v1750 = vadd.f32 %v1748, %v1749
    %v1751 = vrot.slane %v1750, 2
    %v1752 = vadd.f32 %v1750, %v1751
    %v1753 = vrot.slane %v1752, 1
    %v1754 = vadd.f32 %v1752, %v1753
    %v1755 = vsel %vm106, %v1665, 0.0
    %v1756 = vsel %vm757, %v1664, 0.0
    %v1757 = vadd.f32 %v1755, %v1756
    %v1758 = vrot.slane %v1757, 4
    %v1759 = vadd.f32 %v1757, %v1758
    %v1760 = vrot.slane %v1759, 2
    %v1761 = vadd.f32 %v1759, %v1760
    %v1762 = vrot.slane %v1761, 1
    %v1763 = vadd.f32 %v1761, %v1762
    %v1764 = vsel %vm106, %v1668, 0.0
    %v1765 = vsel %vm757, %v1667, 0.0
    %v1766 = vadd.f32 %v1764, %v1765
    %v1767 = vrot.slane %v1766, 4
    %v1768 = vadd.f32 %v1766, %v1767
    %v1769 = vrot.slane %v1768, 2
    %v1770 = vadd.f32 %v1768, %v1769
    %v1771 = vrot.slane %v1770, 1
    %v1772 = vadd.f32 %v1770, %v1771
    %v1773 = vsel %vm106, %v1671, 0.0
    %v1774 = vsel %vm757, %v1670, 0.0
    %v1775 = vadd.f32 %v1773, %v1774
    %v1776 = vrot.slane %v1775, 4
    %v1777 = vadd.f32 %v1775, %v1776
    %v1778 = vrot.slane %v1777, 2
    %v1779 = vadd.f32 %v1777, %v1778
    %v1780 = vrot.slane %v1779, 1
    %v1781 = vadd.f32 %v1779, %v1780
    %vm1792 = vcmask 1041409
    %v1793 = vsel %vm1792, %v1064, %v1055
    %vm1794 = vcmask 1042434
    %v1795 = vsel %vm1794, %v1073, %v1793
    %vm1796 = vcmask 1043459
    %v1797 = vsel %vm1796, %v1082, %v1795
    %vm1798 = vcmask 1044484
    %v1799 = vsel %vm1798, %v1091, %v1797
    %vm1800 = vcmask 1045509
    %v1801 = vsel %vm1800, %v1100, %v1799
    %vm1802 = vcmask 1046534
    %v1803 = vsel %vm1802, %v1109, %v1801
    %vm1804 = vcmask 1047559
    %v1805 = vsel %vm1804, %v1118, %v1803
    %v1806 = vsel %vm1792, %v1136, %v1127
    %v1818 = vsel %vm1796, %v1709, %v1700
    %v1819 = vsel %vm1798, %v1718, %v1818
    %v1820 = vsel %vm1800, %v1727, %v1819
    %v1821 = vsel %vm1802, %v1736, %v1820
    %v1822 = vsel %vm1804, %v1745, %v1821
    %v1823 = vsel %vm1792, %v1763, %v1754
    %v1824 = vsel %vm1794, %v1772, %v1823
    %v1825 = vsel %vm1796, %v1781, %v1824
    %vm1827 = vcmask 1041408
    %v1828 = vsel %vm1827, %v1806, %v1822
    %v1829 = vld [vmem:[%s9] sm:$0xff]
    %v1830 = vld [vmem:[%s9 + $0x8] sm:$0xff]
    %v1831 = vld [vmem:[%s9 + $0x10] sm:$0xff]
    %v1832 = vld [vmem:[%s10] sm:$0x1]
    %v1834 = vlaneseq
    %v1835 = vshrl.u32 %v1834, 7
    %v1836 = vsub.s32 0, %v1835
    %v1837 = vrot.slane %v1832, %v1836
    %v1839 = vsel %vm106, %v1805, 0
    %v1842 = vsel %vm106, %v1828, 0
    %v1844 = vsel %vm106, %v1825, 0
    %1846 = vmatprep.subr.mxu0 0.0
    %1847 = vmatpush1.msra.mxu0 %v1829
    %1848 = vmatprep.subr.mxu0 0.0
    %1849 = vmatpush1.msra.mxu0 %v1830
    %1850 = vmatprep.subr.mxu0 0.0
    %1851 = vmatpush1.msra.mxu0 %v1831
    %1852 = vmatprep.subr.mxu0 0.0
    %1853 = vmatpush1.msra.mxu0 0.0
    %1854 = vmatprep.subr.mxu0 0.0
    %1855 = vmatpush1.msra.mxu0 0.0
    %1856 = vmatprep.subr.mxu0 0.0
    %1857 = vmatpush1.msra.mxu0 0.0
    %1858 = vmatprep.subr.mxu0 0.0
    %1859 = vmatpush1.msra.mxu0 0.0
    %1860 = vmatprep.subr.mxu0 0.0
    %1861 = vmatpush1.msra.mxu0 0.0
    %1862 = vmatprep.subr.mxu0 0.0
    %1863 = vmatpush1.msra.mxu0 0.0
    %1864 = vmatprep.subr.mxu0 0.0
    %1865 = vmatpush1.msra.mxu0 0.0
    %1866 = vmatprep.subr.mxu0 0.0
    %1867 = vmatpush1.msra.mxu0 0.0
    %1868 = vmatprep.subr.mxu0 0.0
    %1869 = vmatpush1.msra.mxu0 0.0
    %1870 = vmatprep.subr.mxu0 0.0
    %1871 = vmatpush1.msra.mxu0 0.0
    %1872 = vmatprep.subr.mxu0 0.0
    %1873 = vmatpush1.msra.mxu0 0.0
    %1874 = vmatprep.subr.mxu0 0.0
    %1875 = vmatpush1.msra.mxu0 0.0
    %1876 = vmatprep.subr.mxu0 0.0
    %1877 = vmatpush1.msra.mxu0 0.0
    %1878 = vmatprep.subr.mxu0 0.0
    %1879 = vmatpush1.msra.mxu0 0.0
    %1880 = vmatprep.subr.mxu0 0.0
    %1881 = vmatpush1.msra.mxu0 0.0
    %1882 = vmatprep.subr.mxu0 0.0
    %1883 = vmatpush1.msra.mxu0 0.0
    %1884 = vmatprep.subr.mxu0 0.0
    %1885 = vmatpush1.msra.mxu0 0.0
    %1886 = vmatprep.subr.mxu0 0.0
    %1887 = vmatpush1.msra.mxu0 0.0
    %1888 = vmatprep.subr.mxu0 0.0
    %1889 = vmatpush1.msra.mxu0 0.0
    %1890 = vmatprep.subr.mxu0 0.0
    %1891 = vmatpush1.msra.mxu0 0.0
    %1892 = vmatprep.subr.mxu0 0.0
    %1893 = vmatpush1.msra.mxu0 0.0
    %1894 = vmatprep.subr.mxu0 0.0
    %1895 = vmatpush1.msra.mxu0 0.0
    %1896 = vmatprep.subr.mxu0 0.0
    %1897 = vmatpush1.msra.mxu0 0.0
    %1898 = vmatprep.subr.mxu0 0.0
    %1899 = vmatpush1.msra.mxu0 0.0
    %1900 = vmatprep.subr.mxu0 0.0
    %1901 = vmatpush1.msra.mxu0 0.0
    %1902 = vmatprep.subr.mxu0 0.0
    %1903 = vmatpush1.msra.mxu0 0.0
    %1904 = vmatprep.subr.mxu0 0.0
    %1905 = vmatpush1.msra.mxu0 0.0
    %1906 = vmatprep.subr.mxu0 0.0
    %1907 = vmatpush1.msra.mxu0 0.0
    %1908 = vmatprep.subr.mxu0 0.0
    %1909 = vmatpush1.msra.mxu0 0.0
    %1910 = vmatprep.mubr.f32.mxu0 0.0
    %1911 = vmatmul.mubr.f32.gmra.mrb[0].mxu0 %v1839
    %v1912 = vpop.f32.mrb[0].mxu0
    %v1913 = vadd.f32 %v1837, %v1912
    %v1914 = vpop.f32.mrb[0].mxu0
    %1915 = vmatprep.mubr.f32.mxu0 0.0
    %1916 = vmatmul.mubr.f32.gmra.mrb[0].mxu0 %v1842
    %v1917 = vpop.f32.mrb[0].mxu0
    %v1918 = vadd.f32 %v1837, %v1917
    %v1919 = vpop.f32.mrb[0].mxu0
    %1920 = vmatprep.mubr.f32.mxu0 0.0
    %1921 = vmatmul.mubr.f32.gmra.mrb[0].mxu0 %v1844
    %v1922 = vpop.f32.mrb[0].mxu0
    %v1923 = vadd.f32 %v1837, %v1922
    %v1924 = vpop.f32.mrb[0].mxu0
    %1925 = vdwg.mxu0
    %v1926 = vadd.f32 %v331, %v1913
    %v1927 = vadd.f32 %v332, %v1918
    %v1928 = vadd.f32 %v333, %v1923
    %v1929 = vld [vmem:[%s11] sm:$0x1]
    %v1930 = vld [vmem:[%s12] sm:$0x1]
    %v1931 = vsel %vm106, %v1926, 0.0
    %1932 = vadd.xlane.f32.xlu0 %v1931
    %v1933 = vpop.xlane.xlu0 %1932
    %v1934 = vsel %vm106, %v1927, 0.0
    %1935 = vadd.xlane.f32.xlu0 %v1934
    %v1936 = vpop.xlane.xlu0 %1935
    %v1937 = vsel %vm1261, %v1928, 0.0
    %1938 = vadd.xlane.f32.xlu0 %v1937
    %v1939 = vpop.xlane.xlu0 %1938
    %v1940 = vrcp.pop 24.0
    %v1941 = vmul.f32 %v1933, %v1940
    %v1942 = vmul.f32 %v1936, %v1940
    %v1943 = vmul.f32 %v1939, %v1940
    %v1944 = vsub.f32 %v1926, %v1941
    %v1945 = vsub.f32 %v1927, %v1942
    %v1946 = vsub.f32 %v1928, %v1943
    %v1947 = vmul.f32 %v1944, %v1944
    %v1948 = vmul.f32 %v1945, %v1945
    %v1949 = vmul.f32 %v1946, %v1946
    %v1950 = vsel %vm106, %v1947, 0.0
    %1951 = vadd.xlane.f32.xlu0 %v1950
    %v1952 = vpop.xlane.xlu0 %1951
    %v1953 = vsel %vm106, %v1948, 0.0
    %1954 = vadd.xlane.f32.xlu0 %v1953
    %v1955 = vpop.xlane.xlu0 %1954
    %v1956 = vsel %vm1261, %v1949, 0.0
    %1957 = vadd.xlane.f32.xlu0 %v1956
    %v1958 = vpop.xlane.xlu0 %1957
    %v1959 = vmul.f32 %v1952, %v1940
    %v1960 = vmul.f32 %v1955, %v1940
    %v1961 = vmul.f32 %v1958, %v1940
    %v1962 = vadd.f32 %v1959, 1e-05
    %v1963 = vadd.f32 %v1960, 1e-05
    %v1964 = vadd.f32 %v1961, 1e-05
    %v1965 = vrsqrt.pop %v1962
    %v1966 = vrsqrt.pop %v1963
    %v1967 = vrsqrt.pop %v1964
    %v1968 = vmul.f32 %v1944, %v1965
    %v1969 = vmul.f32 %v1945, %v1966
    %v1970 = vmul.f32 %v1946, %v1967
    %v1972 = vlaneseq
    %v1973 = vshrl.u32 %v1972, 7
    %v1974 = vsub.s32 0, %v1973
    %v1975 = vrot.slane %v1929, %v1974
    %v1977 = vmul.f32 %v1968, %v1975
    %v1978 = vmul.f32 %v1969, %v1975
    %v1979 = vmul.f32 %v1970, %v1975
    %v1981 = vlaneseq
    %v1982 = vshrl.u32 %v1981, 7
    %v1983 = vsub.s32 0, %v1982
    %v1984 = vrot.slane %v1930, %v1983
    %v1986 = vadd.f32 %v1977, %v1984
    %v1987 = vadd.f32 %v1978, %v1984
    %v1988 = vadd.f32 %v1979, %v1984
    %v1989 = vld [vmem:[%s15] sm:$0xff]
    %v1990 = vld [vmem:[%s15 + $0x8] sm:$0xff]
    %v1991 = vld [vmem:[%s15 + $0x10] sm:$0xff]
    %v1992 = vld [vmem:[%s15 + $0x18] sm:$0xff]
    %v1993 = vld [vmem:[%s15 + $0x20] sm:$0xff]
    %v1994 = vld [vmem:[%s15 + $0x28] sm:$0xff]
    %v1995 = vld [vmem:[%s15 + $0x30] sm:$0xff]
    %v1996 = vld [vmem:[%s15 + $0x38] sm:$0xff]
    %v1997 = vld [vmem:[%s15 + $0x40] sm:$0xff]
    %v1998 = vld [vmem:[%s15 + $0x48] sm:$0xff]
    %v1999 = vld [vmem:[%s15 + $0x50] sm:$0xff]
    %v2000 = vld [vmem:[%s15 + $0x58] sm:$0xff]
    %v2001 = vld [vmem:[%s15 + $0x60] sm:$0xff]
    %v2002 = vld [vmem:[%s15 + $0x68] sm:$0xff]
    %v2003 = vld [vmem:[%s15 + $0x70] sm:$0xff]
    %v2004 = vld [vmem:[%s15 + $0x78] sm:$0xff]
    %v2005 = vld [vmem:[%s15 + $0x80] sm:$0xff]
    %v2006 = vld [vmem:[%s15 + $0x88] sm:$0xff]
    %v2007 = vld [vmem:[%s15 + $0x90] sm:$0xff]
    %v2008 = vld [vmem:[%s15 + $0x98] sm:$0xff]
    %v2009 = vld [vmem:[%s15 + $0xa0] sm:$0xff]
    %v2010 = vld [vmem:[%s15 + $0xa8] sm:$0xff]
    %v2011 = vld [vmem:[%s15 + $0xb0] sm:$0xff]
    %v2012 = vld [vmem:[%s15 + $0xb8] sm:$0xff]
    %v2013 = vld [vmem:[%s15 + $0xc0] sm:$0xff]
    %v2014 = vld [vmem:[%s15 + $0xc8] sm:$0xff]
    %v2015 = vld [vmem:[%s15 + $0xd0] sm:$0xff]
    %v2016 = vld [vmem:[%s15 + $0xd8] sm:$0xff]
    %v2017 = vld [vmem:[%s15 + $0xe0] sm:$0xff]
    %v2018 = vld [vmem:[%s15 + $0xe8] sm:$0xff]
    %v2019 = vld [vmem:[%s15 + $0xf0] sm:$0xff]
    %v2020 = vld [vmem:[%s15 + $0xf8] sm:$0xff]
    %v2021 = vld [vmem:[%s15 + $0x100] sm:$0xff]
    %v2022 = vld [vmem:[%s15 + $0x108] sm:$0xff]
    %v2023 = vld [vmem:[%s15 + $0x110] sm:$0xff]
    %v2024 = vld [vmem:[%s15 + $0x118] sm:$0xff]
    %v2025 = vld [vmem:[%s15 + $0x120] sm:$0xff]
    %v2026 = vld [vmem:[%s15 + $0x128] sm:$0xff]
    %v2027 = vld [vmem:[%s15 + $0x130] sm:$0xff]
    %v2028 = vld [vmem:[%s15 + $0x138] sm:$0xff]
    %v2029 = vld [vmem:[%s15 + $0x140] sm:$0xff]
    %v2030 = vld [vmem:[%s15 + $0x148] sm:$0xff]
    %v2031 = vld [vmem:[%s15 + $0x150] sm:$0xff]
    %v2032 = vld [vmem:[%s15 + $0x158] sm:$0xff]
    %v2033 = vld [vmem:[%s15 + $0x160] sm:$0xff]
    %v2034 = vld [vmem:[%s15 + $0x168] sm:$0xff]
    %v2035 = vld [vmem:[%s15 + $0x170] sm:$0xff]
    %v2036 = vld [vmem:[%s15 + $0x178] sm:$0xff]
    %v2037 = vld [vmem:[%s16] sm:$0xff]
    %v2038 = vld [vmem:[%s16 + $0x8] sm:$0xff]
    %v2041 = vlaneseq
    %v2042 = vshrl.u32 %v2041, 7
    %v2043 = vsub.s32 0, %v2042
    %v2044 = vrot.slane %v2037, %v2043
    %v2045 = vlaneseq
    %v2046 = vshrl.u32 %v2045, 7
    %v2047 = vsub.s32 1, %v2046
    %v2048 = vrot.slane %v2037, %v2047
    %v2049 = vlaneseq
    %v2050 = vshrl.u32 %v2049, 7
    %v2051 = vsub.s32 2, %v2050
    %v2052 = vrot.slane %v2037, %v2051
    %v2053 = vlaneseq
    %v2054 = vshrl.u32 %v2053, 7
    %v2055 = vsub.s32 3, %v2054
    %v2056 = vrot.slane %v2037, %v2055
    %v2057 = vlaneseq
    %v2058 = vshrl.u32 %v2057, 7
    %v2059 = vsub.s32 4, %v2058
    %v2060 = vrot.slane %v2037, %v2059
    %v2061 = vlaneseq
    %v2062 = vshrl.u32 %v2061, 7
    %v2063 = vsub.s32 5, %v2062
    %v2064 = vrot.slane %v2037, %v2063
    %v2065 = vlaneseq
    %v2066 = vshrl.u32 %v2065, 7
    %v2067 = vsub.s32 6, %v2066
    %v2068 = vrot.slane %v2037, %v2067
    %v2069 = vlaneseq
    %v2070 = vshrl.u32 %v2069, 7
    %v2071 = vsub.s32 7, %v2070
    %v2072 = vrot.slane %v2037, %v2071
    %v2073 = vlaneseq
    %v2074 = vshrl.u32 %v2073, 7
    %v2075 = vsub.s32 0, %v2074
    %v2076 = vrot.slane %v2038, %v2075
    %v2077 = vlaneseq
    %v2078 = vshrl.u32 %v2077, 7
    %v2079 = vsub.s32 1, %v2078
    %v2080 = vrot.slane %v2038, %v2079
    %v2081 = vlaneseq
    %v2082 = vshrl.u32 %v2081, 7
    %v2083 = vsub.s32 2, %v2082
    %v2084 = vrot.slane %v2038, %v2083
    %v2085 = vlaneseq
    %v2086 = vshrl.u32 %v2085, 7
    %v2087 = vsub.s32 3, %v2086
    %v2088 = vrot.slane %v2038, %v2087
    %v2089 = vlaneseq
    %v2090 = vshrl.u32 %v2089, 7
    %v2091 = vsub.s32 4, %v2090
    %v2092 = vrot.slane %v2038, %v2091
    %v2093 = vlaneseq
    %v2094 = vshrl.u32 %v2093, 7
    %v2095 = vsub.s32 5, %v2094
    %v2096 = vrot.slane %v2038, %v2095
    %v2097 = vlaneseq
    %v2098 = vshrl.u32 %v2097, 7
    %v2099 = vsub.s32 6, %v2098
    %v2100 = vrot.slane %v2038, %v2099
    %v2101 = vlaneseq
    %v2102 = vshrl.u32 %v2101, 7
    %v2103 = vsub.s32 7, %v2102
    %v2104 = vrot.slane %v2038, %v2103
    %v2122 = vsel %vm106, %v1986, 0
    %v2125 = vsel %vm106, %v1987, 0
    %v2128 = vsel %vm106, %v1988, 0
    %2130 = vmatprep.subr.mxu0 %v1990
    %2131 = vmatpush1.msra.mxu0 %v1989
    %2132 = vmatprep.subr.mxu0 %v2006
    %2133 = vmatpush1.msra.mxu0 %v2005
    %2134 = vmatprep.subr.mxu0 %v2022
    %2135 = vmatpush1.msra.mxu0 %v2021
    %2136 = vmatprep.subr.mxu0 0.0
    %2137 = vmatpush1.msra.mxu0 0.0
    %2138 = vmatprep.subr.mxu0 0.0
    %2139 = vmatpush1.msra.mxu0 0.0
    %2140 = vmatprep.subr.mxu0 0.0
    %2141 = vmatpush1.msra.mxu0 0.0
    %2142 = vmatprep.subr.mxu0 0.0
    %2143 = vmatpush1.msra.mxu0 0.0
    %2144 = vmatprep.subr.mxu0 0.0
    %2145 = vmatpush1.msra.mxu0 0.0
    %2146 = vmatprep.subr.mxu0 0.0
    %2147 = vmatpush1.msra.mxu0 0.0
    %2148 = vmatprep.subr.mxu0 0.0
    %2149 = vmatpush1.msra.mxu0 0.0
    %2150 = vmatprep.subr.mxu0 0.0
    %2151 = vmatpush1.msra.mxu0 0.0
    %2152 = vmatprep.subr.mxu0 0.0
    %2153 = vmatpush1.msra.mxu0 0.0
    %2154 = vmatprep.subr.mxu0 0.0
    %2155 = vmatpush1.msra.mxu0 0.0
    %2156 = vmatprep.subr.mxu0 0.0
    %2157 = vmatpush1.msra.mxu0 0.0
    %2158 = vmatprep.subr.mxu0 0.0
    %2159 = vmatpush1.msra.mxu0 0.0
    %2160 = vmatprep.subr.mxu0 0.0
    %2161 = vmatpush1.msra.mxu0 0.0
    %2162 = vmatprep.subr.mxu0 0.0
    %2163 = vmatpush1.msra.mxu0 0.0
    %2164 = vmatprep.subr.mxu0 0.0
    %2165 = vmatpush1.msra.mxu0 0.0
    %2166 = vmatprep.subr.mxu0 0.0
    %2167 = vmatpush1.msra.mxu0 0.0
    %2168 = vmatprep.subr.mxu0 0.0
    %2169 = vmatpush1.msra.mxu0 0.0
    %2170 = vmatprep.subr.mxu0 0.0
    %2171 = vmatpush1.msra.mxu0 0.0
    %2172 = vmatprep.subr.mxu0 0.0
    %2173 = vmatpush1.msra.mxu0 0.0
    %2174 = vmatprep.subr.mxu0 0.0
    %2175 = vmatpush1.msra.mxu0 0.0
    %2176 = vmatprep.subr.mxu0 0.0
    %2177 = vmatpush1.msra.mxu0 0.0
    %2178 = vmatprep.subr.mxu0 0.0
    %2179 = vmatpush1.msra.mxu0 0.0
    %2180 = vmatprep.subr.mxu0 0.0
    %2181 = vmatpush1.msra.mxu0 0.0
    %2182 = vmatprep.subr.mxu0 0.0
    %2183 = vmatpush1.msra.mxu0 0.0
    %2184 = vmatprep.subr.mxu0 0.0
    %2185 = vmatpush1.msra.mxu0 0.0
    %2186 = vmatprep.subr.mxu0 0.0
    %2187 = vmatpush1.msra.mxu0 0.0
    %2188 = vmatprep.subr.mxu0 0.0
    %2189 = vmatpush1.msra.mxu0 0.0
    %2190 = vmatprep.subr.mxu0 0.0
    %2191 = vmatpush1.msra.mxu0 0.0
    %2192 = vmatprep.subr.mxu0 0.0
    %2193 = vmatpush1.msra.mxu0 0.0
    %2194 = vmatprep.mubr.f32.mxu0 0.0
    %2195 = vmatmul.mubr.f32.gmra.mrb[0].mxu0 %v2122
    %v2196 = vpop.f32.mrb[0].mxu0
    %v2197 = vadd.f32 %v2044, %v2196
    %v2198 = vpop.f32.mrb[0].mxu0
    %v2199 = vadd.f32 %v2048, %v2198
    %2200 = vmatprep.mubr.f32.mxu0 0.0
    %2201 = vmatmul.mubr.f32.gmra.mrb[0].mxu0 %v2125
    %v2202 = vpop.f32.mrb[0].mxu0
    %v2203 = vadd.f32 %v2044, %v2202
    %v2204 = vpop.f32.mrb[0].mxu0
    %v2205 = vadd.f32 %v2048, %v2204
    %2206 = vmatprep.mubr.f32.mxu0 0.0
    %2207 = vmatmul.mubr.f32.gmra.mrb[0].mxu0 %v2128
    %v2208 = vpop.f32.mrb[0].mxu0
    %v2209 = vadd.f32 %v2044, %v2208
    %v2210 = vpop.f32.mrb[0].mxu0
    %v2211 = vadd.f32 %v2048, %v2210
    %2212 = vdwg.mxu0
    %2213 = vmatprep.subr.mxu0 %v1992
    %2214 = vmatpush1.msra.mxu0 %v1991
    %2215 = vmatprep.subr.mxu0 %v2008
    %2216 = vmatpush1.msra.mxu0 %v2007
    %2217 = vmatprep.subr.mxu0 %v2024
    %2218 = vmatpush1.msra.mxu0 %v2023
    %2219 = vmatprep.subr.mxu0 0.0
    %2220 = vmatpush1.msra.mxu0 0.0
    %2221 = vmatprep.subr.mxu0 0.0
    %2222 = vmatpush1.msra.mxu0 0.0
    %2223 = vmatprep.subr.mxu0 0.0
    %2224 = vmatpush1.msra.mxu0 0.0
    %2225 = vmatprep.subr.mxu0 0.0
    %2226 = vmatpush1.msra.mxu0 0.0
    %2227 = vmatprep.subr.mxu0 0.0
    %2228 = vmatpush1.msra.mxu0 0.0
    %2229 = vmatprep.subr.mxu0 0.0
    %2230 = vmatpush1.msra.mxu0 0.0
    %2231 = vmatprep.subr.mxu0 0.0
    %2232 = vmatpush1.msra.mxu0 0.0
    %2233 = vmatprep.subr.mxu0 0.0
    %2234 = vmatpush1.msra.mxu0 0.0
    %2235 = vmatprep.subr.mxu0 0.0
    %2236 = vmatpush1.msra.mxu0 0.0
    %2237 = vmatprep.subr.mxu0 0.0
    %2238 = vmatpush1.msra.mxu0 0.0
    %2239 = vmatprep.subr.mxu0 0.0
    %2240 = vmatpush1.msra.mxu0 0.0
    %2241 = vmatprep.subr.mxu0 0.0
    %2242 = vmatpush1.msra.mxu0 0.0
    %2243 = vmatprep.subr.mxu0 0.0
    %2244 = vmatpush1.msra.mxu0 0.0
    %2245 = vmatprep.subr.mxu0 0.0
    %2246 = vmatpush1.msra.mxu0 0.0
    %2247 = vmatprep.subr.mxu0 0.0
    %2248 = vmatpush1.msra.mxu0 0.0
    %2249 = vmatprep.subr.mxu0 0.0
    %2250 = vmatpush1.msra.mxu0 0.0
    %2251 = vmatprep.subr.mxu0 0.0
    %2252 = vmatpush1.msra.mxu0 0.0
    %2253 = vmatprep.subr.mxu0 0.0
    %2254 = vmatpush1.msra.mxu0 0.0
    %2255 = vmatprep.subr.mxu0 0.0
    %2256 = vmatpush1.msra.mxu0 0.0
    %2257 = vmatprep.subr.mxu0 0.0
    %2258 = vmatpush1.msra.mxu0 0.0
    %2259 = vmatprep.subr.mxu0 0.0
    %2260 = vmatpush1.msra.mxu0 0.0
    %2261 = vmatprep.subr.mxu0 0.0
    %2262 = vmatpush1.msra.mxu0 0.0
    %2263 = vmatprep.subr.mxu0 0.0
    %2264 = vmatpush1.msra.mxu0 0.0
    %2265 = vmatprep.subr.mxu0 0.0
    %2266 = vmatpush1.msra.mxu0 0.0
    %2267 = vmatprep.subr.mxu0 0.0
    %2268 = vmatpush1.msra.mxu0 0.0
    %2269 = vmatprep.subr.mxu0 0.0
    %2270 = vmatpush1.msra.mxu0 0.0
    %2271 = vmatprep.subr.mxu0 0.0
    %2272 = vmatpush1.msra.mxu0 0.0
    %2273 = vmatprep.subr.mxu0 0.0
    %2274 = vmatpush1.msra.mxu0 0.0
    %2275 = vmatprep.subr.mxu0 0.0
    %2276 = vmatpush1.msra.mxu0 0.0
    %2277 = vmatprep.mubr.f32.mxu0 0.0
    %2278 = vmatmul.mubr.f32.gmra.mrb[0].mxu0 %v2122
    %v2279 = vpop.f32.mrb[0].mxu0
    %v2280 = vadd.f32 %v2052, %v2279
    %v2281 = vpop.f32.mrb[0].mxu0
    %v2282 = vadd.f32 %v2056, %v2281
    %2283 = vmatprep.mubr.f32.mxu0 0.0
    %2284 = vmatmul.mubr.f32.gmra.mrb[0].mxu0 %v2125
    %v2285 = vpop.f32.mrb[0].mxu0
    %v2286 = vadd.f32 %v2052, %v2285
    %v2287 = vpop.f32.mrb[0].mxu0
    %v2288 = vadd.f32 %v2056, %v2287
    %2289 = vmatprep.mubr.f32.mxu0 0.0
    %2290 = vmatmul.mubr.f32.gmra.mrb[0].mxu0 %v2128
    %v2291 = vpop.f32.mrb[0].mxu0
    %v2292 = vadd.f32 %v2052, %v2291
    %v2293 = vpop.f32.mrb[0].mxu0
    %v2294 = vadd.f32 %v2056, %v2293
    %2295 = vdwg.mxu0
    %2296 = vmatprep.subr.mxu0 %v1994
    %2297 = vmatpush1.msra.mxu0 %v1993
    %2298 = vmatprep.subr.mxu0 %v2010
    %2299 = vmatpush1.msra.mxu0 %v2009
    %2300 = vmatprep.subr.mxu0 %v2026
    %2301 = vmatpush1.msra.mxu0 %v2025
    %2302 = vmatprep.subr.mxu0 0.0
    %2303 = vmatpush1.msra.mxu0 0.0
    %2304 = vmatprep.subr.mxu0 0.0
    %2305 = vmatpush1.msra.mxu0 0.0
    %2306 = vmatprep.subr.mxu0 0.0
    %2307 = vmatpush1.msra.mxu0 0.0
    %2308 = vmatprep.subr.mxu0 0.0
    %2309 = vmatpush1.msra.mxu0 0.0
    %2310 = vmatprep.subr.mxu0 0.0
    %2311 = vmatpush1.msra.mxu0 0.0
    %2312 = vmatprep.subr.mxu0 0.0
    %2313 = vmatpush1.msra.mxu0 0.0
    %2314 = vmatprep.subr.mxu0 0.0
    %2315 = vmatpush1.msra.mxu0 0.0
    %2316 = vmatprep.subr.mxu0 0.0
    %2317 = vmatpush1.msra.mxu0 0.0
    %2318 = vmatprep.subr.mxu0 0.0
    %2319 = vmatpush1.msra.mxu0 0.0
    %2320 = vmatprep.subr.mxu0 0.0
    %2321 = vmatpush1.msra.mxu0 0.0
    %2322 = vmatprep.subr.mxu0 0.0
    %2323 = vmatpush1.msra.mxu0 0.0
    %2324 = vmatprep.subr.mxu0 0.0
    %2325 = vmatpush1.msra.mxu0 0.0
    %2326 = vmatprep.subr.mxu0 0.0
    %2327 = vmatpush1.msra.mxu0 0.0
    %2328 = vmatprep.subr.mxu0 0.0
    %2329 = vmatpush1.msra.mxu0 0.0
    %2330 = vmatprep.subr.mxu0 0.0
    %2331 = vmatpush1.msra.mxu0 0.0
    %2332 = vmatprep.subr.mxu0 0.0
    %2333 = vmatpush1.msra.mxu0 0.0
    %2334 = vmatprep.subr.mxu0 0.0
    %2335 = vmatpush1.msra.mxu0 0.0
    %2336 = vmatprep.subr.mxu0 0.0
    %2337 = vmatpush1.msra.mxu0 0.0
    %2338 = vmatprep.subr.mxu0 0.0
    %2339 = vmatpush1.msra.mxu0 0.0
    %2340 = vmatprep.subr.mxu0 0.0
    %2341 = vmatpush1.msra.mxu0 0.0
    %2342 = vmatprep.subr.mxu0 0.0
    %2343 = vmatpush1.msra.mxu0 0.0
    %2344 = vmatprep.subr.mxu0 0.0
    %2345 = vmatpush1.msra.mxu0 0.0
    %2346 = vmatprep.subr.mxu0 0.0
    %2347 = vmatpush1.msra.mxu0 0.0
    %2348 = vmatprep.subr.mxu0 0.0
    %2349 = vmatpush1.msra.mxu0 0.0
    %2350 = vmatprep.subr.mxu0 0.0
    %2351 = vmatpush1.msra.mxu0 0.0
    %2352 = vmatprep.subr.mxu0 0.0
    %2353 = vmatpush1.msra.mxu0 0.0
    %2354 = vmatprep.subr.mxu0 0.0
    %2355 = vmatpush1.msra.mxu0 0.0
    %2356 = vmatprep.subr.mxu0 0.0
    %2357 = vmatpush1.msra.mxu0 0.0
    %2358 = vmatprep.subr.mxu0 0.0
    %2359 = vmatpush1.msra.mxu0 0.0
    %2360 = vmatprep.mubr.f32.mxu0 0.0
    %2361 = vmatmul.mubr.f32.gmra.mrb[0].mxu0 %v2122
    %v2362 = vpop.f32.mrb[0].mxu0
    %v2363 = vadd.f32 %v2060, %v2362
    %v2364 = vpop.f32.mrb[0].mxu0
    %v2365 = vadd.f32 %v2064, %v2364
    %2366 = vmatprep.mubr.f32.mxu0 0.0
    %2367 = vmatmul.mubr.f32.gmra.mrb[0].mxu0 %v2125
    %v2368 = vpop.f32.mrb[0].mxu0
    %v2369 = vadd.f32 %v2060, %v2368
    %v2370 = vpop.f32.mrb[0].mxu0
    %v2371 = vadd.f32 %v2064, %v2370
    %2372 = vmatprep.mubr.f32.mxu0 0.0
    %2373 = vmatmul.mubr.f32.gmra.mrb[0].mxu0 %v2128
    %v2374 = vpop.f32.mrb[0].mxu0
    %v2375 = vadd.f32 %v2060, %v2374
    %v2376 = vpop.f32.mrb[0].mxu0
    %v2377 = vadd.f32 %v2064, %v2376
    %2378 = vdwg.mxu0
    %2379 = vmatprep.subr.mxu0 %v1996
    %2380 = vmatpush1.msra.mxu0 %v1995
    %2381 = vmatprep.subr.mxu0 %v2012
    %2382 = vmatpush1.msra.mxu0 %v2011
    %2383 = vmatprep.subr.mxu0 %v2028
    %2384 = vmatpush1.msra.mxu0 %v2027
    %2385 = vmatprep.subr.mxu0 0.0
    %2386 = vmatpush1.msra.mxu0 0.0
    %2387 = vmatprep.subr.mxu0 0.0
    %2388 = vmatpush1.msra.mxu0 0.0
    %2389 = vmatprep.subr.mxu0 0.0
    %2390 = vmatpush1.msra.mxu0 0.0
    %2391 = vmatprep.subr.mxu0 0.0
    %2392 = vmatpush1.msra.mxu0 0.0
    %2393 = vmatprep.subr.mxu0 0.0
    %2394 = vmatpush1.msra.mxu0 0.0
    %2395 = vmatprep.subr.mxu0 0.0
    %2396 = vmatpush1.msra.mxu0 0.0
    %2397 = vmatprep.subr.mxu0 0.0
    %2398 = vmatpush1.msra.mxu0 0.0
    %2399 = vmatprep.subr.mxu0 0.0
    %2400 = vmatpush1.msra.mxu0 0.0
    %2401 = vmatprep.subr.mxu0 0.0
    %2402 = vmatpush1.msra.mxu0 0.0
    %2403 = vmatprep.subr.mxu0 0.0
    %2404 = vmatpush1.msra.mxu0 0.0
    %2405 = vmatprep.subr.mxu0 0.0
    %2406 = vmatpush1.msra.mxu0 0.0
    %2407 = vmatprep.subr.mxu0 0.0
    %2408 = vmatpush1.msra.mxu0 0.0
    %2409 = vmatprep.subr.mxu0 0.0
    %2410 = vmatpush1.msra.mxu0 0.0
    %2411 = vmatprep.subr.mxu0 0.0
    %2412 = vmatpush1.msra.mxu0 0.0
    %2413 = vmatprep.subr.mxu0 0.0
    %2414 = vmatpush1.msra.mxu0 0.0
    %2415 = vmatprep.subr.mxu0 0.0
    %2416 = vmatpush1.msra.mxu0 0.0
    %2417 = vmatprep.subr.mxu0 0.0
    %2418 = vmatpush1.msra.mxu0 0.0
    %2419 = vmatprep.subr.mxu0 0.0
    %2420 = vmatpush1.msra.mxu0 0.0
    %2421 = vmatprep.subr.mxu0 0.0
    %2422 = vmatpush1.msra.mxu0 0.0
    %2423 = vmatprep.subr.mxu0 0.0
    %2424 = vmatpush1.msra.mxu0 0.0
    %2425 = vmatprep.subr.mxu0 0.0
    %2426 = vmatpush1.msra.mxu0 0.0
    %2427 = vmatprep.subr.mxu0 0.0
    %2428 = vmatpush1.msra.mxu0 0.0
    %2429 = vmatprep.subr.mxu0 0.0
    %2430 = vmatpush1.msra.mxu0 0.0
    %2431 = vmatprep.subr.mxu0 0.0
    %2432 = vmatpush1.msra.mxu0 0.0
    %2433 = vmatprep.subr.mxu0 0.0
    %2434 = vmatpush1.msra.mxu0 0.0
    %2435 = vmatprep.subr.mxu0 0.0
    %2436 = vmatpush1.msra.mxu0 0.0
    %2437 = vmatprep.subr.mxu0 0.0
    %2438 = vmatpush1.msra.mxu0 0.0
    %2439 = vmatprep.subr.mxu0 0.0
    %2440 = vmatpush1.msra.mxu0 0.0
    %2441 = vmatprep.subr.mxu0 0.0
    %2442 = vmatpush1.msra.mxu0 0.0
    %2443 = vmatprep.mubr.f32.mxu0 0.0
    %2444 = vmatmul.mubr.f32.gmra.mrb[0].mxu0 %v2122
    %v2445 = vpop.f32.mrb[0].mxu0
    %v2446 = vadd.f32 %v2068, %v2445
    %v2447 = vpop.f32.mrb[0].mxu0
    %v2448 = vadd.f32 %v2072, %v2447
    %2449 = vmatprep.mubr.f32.mxu0 0.0
    %2450 = vmatmul.mubr.f32.gmra.mrb[0].mxu0 %v2125
    %v2451 = vpop.f32.mrb[0].mxu0
    %v2452 = vadd.f32 %v2068, %v2451
    %v2453 = vpop.f32.mrb[0].mxu0
    %v2454 = vadd.f32 %v2072, %v2453
    %2455 = vmatprep.mubr.f32.mxu0 0.0
    %2456 = vmatmul.mubr.f32.gmra.mrb[0].mxu0 %v2128
    %v2457 = vpop.f32.mrb[0].mxu0
    %v2458 = vadd.f32 %v2068, %v2457
    %v2459 = vpop.f32.mrb[0].mxu0
    %v2460 = vadd.f32 %v2072, %v2459
    %2461 = vdwg.mxu0
    %2462 = vmatprep.subr.mxu0 %v1998
    %2463 = vmatpush1.msra.mxu0 %v1997
    %2464 = vmatprep.subr.mxu0 %v2014
    %2465 = vmatpush1.msra.mxu0 %v2013
    %2466 = vmatprep.subr.mxu0 %v2030
    %2467 = vmatpush1.msra.mxu0 %v2029
    %2468 = vmatprep.subr.mxu0 0.0
    %2469 = vmatpush1.msra.mxu0 0.0
    %2470 = vmatprep.subr.mxu0 0.0
    %2471 = vmatpush1.msra.mxu0 0.0
    %2472 = vmatprep.subr.mxu0 0.0
    %2473 = vmatpush1.msra.mxu0 0.0
    %2474 = vmatprep.subr.mxu0 0.0
    %2475 = vmatpush1.msra.mxu0 0.0
    %2476 = vmatprep.subr.mxu0 0.0
    %2477 = vmatpush1.msra.mxu0 0.0
    %2478 = vmatprep.subr.mxu0 0.0
    %2479 = vmatpush1.msra.mxu0 0.0
    %2480 = vmatprep.subr.mxu0 0.0
    %2481 = vmatpush1.msra.mxu0 0.0
    %2482 = vmatprep.subr.mxu0 0.0
    %2483 = vmatpush1.msra.mxu0 0.0
    %2484 = vmatprep.subr.mxu0 0.0
    %2485 = vmatpush1.msra.mxu0 0.0
    %2486 = vmatprep.subr.mxu0 0.0
    %2487 = vmatpush1.msra.mxu0 0.0
    %2488 = vmatprep.subr.mxu0 0.0
    %2489 = vmatpush1.msra.mxu0 0.0
    %2490 = vmatprep.subr.mxu0 0.0
    %2491 = vmatpush1.msra.mxu0 0.0
    %2492 = vmatprep.subr.mxu0 0.0
    %2493 = vmatpush1.msra.mxu0 0.0
    %2494 = vmatprep.subr.mxu0 0.0
    %2495 = vmatpush1.msra.mxu0 0.0
    %2496 = vmatprep.subr.mxu0 0.0
    %2497 = vmatpush1.msra.mxu0 0.0
    %2498 = vmatprep.subr.mxu0 0.0
    %2499 = vmatpush1.msra.mxu0 0.0
    %2500 = vmatprep.subr.mxu0 0.0
    %2501 = vmatpush1.msra.mxu0 0.0
    %2502 = vmatprep.subr.mxu0 0.0
    %2503 = vmatpush1.msra.mxu0 0.0
    %2504 = vmatprep.subr.mxu0 0.0
    %2505 = vmatpush1.msra.mxu0 0.0
    %2506 = vmatprep.subr.mxu0 0.0
    %2507 = vmatpush1.msra.mxu0 0.0
    %2508 = vmatprep.subr.mxu0 0.0
    %2509 = vmatpush1.msra.mxu0 0.0
    %2510 = vmatprep.subr.mxu0 0.0
    %2511 = vmatpush1.msra.mxu0 0.0
    %2512 = vmatprep.subr.mxu0 0.0
    %2513 = vmatpush1.msra.mxu0 0.0
    %2514 = vmatprep.subr.mxu0 0.0
    %2515 = vmatpush1.msra.mxu0 0.0
    %2516 = vmatprep.subr.mxu0 0.0
    %2517 = vmatpush1.msra.mxu0 0.0
    %2518 = vmatprep.subr.mxu0 0.0
    %2519 = vmatpush1.msra.mxu0 0.0
    %2520 = vmatprep.subr.mxu0 0.0
    %2521 = vmatpush1.msra.mxu0 0.0
    %2522 = vmatprep.subr.mxu0 0.0
    %2523 = vmatpush1.msra.mxu0 0.0
    %2524 = vmatprep.subr.mxu0 0.0
    %2525 = vmatpush1.msra.mxu0 0.0
    %2526 = vmatprep.mubr.f32.mxu0 0.0
    %2527 = vmatmul.mubr.f32.gmra.mrb[0].mxu0 %v2122
    %v2528 = vpop.f32.mrb[0].mxu0
    %v2529 = vadd.f32 %v2076, %v2528
    %v2530 = vpop.f32.mrb[0].mxu0
    %v2531 = vadd.f32 %v2080, %v2530
    %2532 = vmatprep.mubr.f32.mxu0 0.0
    %2533 = vmatmul.mubr.f32.gmra.mrb[0].mxu0 %v2125
    %v2534 = vpop.f32.mrb[0].mxu0
    %v2535 = vadd.f32 %v2076, %v2534
    %v2536 = vpop.f32.mrb[0].mxu0
    %v2537 = vadd.f32 %v2080, %v2536
    %2538 = vmatprep.mubr.f32.mxu0 0.0
    %2539 = vmatmul.mubr.f32.gmra.mrb[0].mxu0 %v2128
    %v2540 = vpop.f32.mrb[0].mxu0
    %v2541 = vadd.f32 %v2076, %v2540
    %v2542 = vpop.f32.mrb[0].mxu0
    %v2543 = vadd.f32 %v2080, %v2542
    %2544 = vdwg.mxu0
    %2545 = vmatprep.subr.mxu0 %v2000
    %2546 = vmatpush1.msra.mxu0 %v1999
    %2547 = vmatprep.subr.mxu0 %v2016
    %2548 = vmatpush1.msra.mxu0 %v2015
    %2549 = vmatprep.subr.mxu0 %v2032
    %2550 = vmatpush1.msra.mxu0 %v2031
    %2551 = vmatprep.subr.mxu0 0.0
    %2552 = vmatpush1.msra.mxu0 0.0
    %2553 = vmatprep.subr.mxu0 0.0
    %2554 = vmatpush1.msra.mxu0 0.0
    %2555 = vmatprep.subr.mxu0 0.0
    %2556 = vmatpush1.msra.mxu0 0.0
    %2557 = vmatprep.subr.mxu0 0.0
    %2558 = vmatpush1.msra.mxu0 0.0
    %2559 = vmatprep.subr.mxu0 0.0
    %2560 = vmatpush1.msra.mxu0 0.0
    %2561 = vmatprep.subr.mxu0 0.0
    %2562 = vmatpush1.msra.mxu0 0.0
    %2563 = vmatprep.subr.mxu0 0.0
    %2564 = vmatpush1.msra.mxu0 0.0
    %2565 = vmatprep.subr.mxu0 0.0
    %2566 = vmatpush1.msra.mxu0 0.0
    %2567 = vmatprep.subr.mxu0 0.0
    %2568 = vmatpush1.msra.mxu0 0.0
    %2569 = vmatprep.subr.mxu0 0.0
    %2570 = vmatpush1.msra.mxu0 0.0
    %2571 = vmatprep.subr.mxu0 0.0
    %2572 = vmatpush1.msra.mxu0 0.0
    %2573 = vmatprep.subr.mxu0 0.0
    %2574 = vmatpush1.msra.mxu0 0.0
    %2575 = vmatprep.subr.mxu0 0.0
    %2576 = vmatpush1.msra.mxu0 0.0
    %2577 = vmatprep.subr.mxu0 0.0
    %2578 = vmatpush1.msra.mxu0 0.0
    %2579 = vmatprep.subr.mxu0 0.0
    %2580 = vmatpush1.msra.mxu0 0.0
    %2581 = vmatprep.subr.mxu0 0.0
    %2582 = vmatpush1.msra.mxu0 0.0
    %2583 = vmatprep.subr.mxu0 0.0
    %2584 = vmatpush1.msra.mxu0 0.0
    %2585 = vmatprep.subr.mxu0 0.0
    %2586 = vmatpush1.msra.mxu0 0.0
    %2587 = vmatprep.subr.mxu0 0.0
    %2588 = vmatpush1.msra.mxu0 0.0
    %2589 = vmatprep.subr.mxu0 0.0
    %2590 = vmatpush1.msra.mxu0 0.0
    %2591 = vmatprep.subr.mxu0 0.0
    %2592 = vmatpush1.msra.mxu0 0.0
    %2593 = vmatprep.subr.mxu0 0.0
    %2594 = vmatpush1.msra.mxu0 0.0
    %2595 = vmatprep.subr.mxu0 0.0
    %2596 = vmatpush1.msra.mxu0 0.0
    %2597 = vmatprep.subr.mxu0 0.0
    %2598 = vmatpush1.msra.mxu0 0.0
    %2599 = vmatprep.subr.mxu0 0.0
    %2600 = vmatpush1.msra.mxu0 0.0
    %2601 = vmatprep.subr.mxu0 0.0
    %2602 = vmatpush1.msra.mxu0 0.0
    %2603 = vmatprep.subr.mxu0 0.0
    %2604 = vmatpush1.msra.mxu0 0.0
    %2605 = vmatprep.subr.mxu0 0.0
    %2606 = vmatpush1.msra.mxu0 0.0
    %2607 = vmatprep.subr.mxu0 0.0
    %2608 = vmatpush1.msra.mxu0 0.0
    %2609 = vmatprep.mubr.f32.mxu0 0.0
    %2610 = vmatmul.mubr.f32.gmra.mrb[0].mxu0 %v2122
    %v2611 = vpop.f32.mrb[0].mxu0
    %v2612 = vadd.f32 %v2084, %v2611
    %v2613 = vpop.f32.mrb[0].mxu0
    %v2614 = vadd.f32 %v2088, %v2613
    %2615 = vmatprep.mubr.f32.mxu0 0.0
    %2616 = vmatmul.mubr.f32.gmra.mrb[0].mxu0 %v2125
    %v2617 = vpop.f32.mrb[0].mxu0
    %v2618 = vadd.f32 %v2084, %v2617
    %v2619 = vpop.f32.mrb[0].mxu0
    %v2620 = vadd.f32 %v2088, %v2619
    %2621 = vmatprep.mubr.f32.mxu0 0.0
    %2622 = vmatmul.mubr.f32.gmra.mrb[0].mxu0 %v2128
    %v2623 = vpop.f32.mrb[0].mxu0
    %v2624 = vadd.f32 %v2084, %v2623
    %v2625 = vpop.f32.mrb[0].mxu0
    %v2626 = vadd.f32 %v2088, %v2625
    %2627 = vdwg.mxu0
    %2628 = vmatprep.subr.mxu0 %v2002
    %2629 = vmatpush1.msra.mxu0 %v2001
    %2630 = vmatprep.subr.mxu0 %v2018
    %2631 = vmatpush1.msra.mxu0 %v2017
    %2632 = vmatprep.subr.mxu0 %v2034
    %2633 = vmatpush1.msra.mxu0 %v2033
    %2634 = vmatprep.subr.mxu0 0.0
    %2635 = vmatpush1.msra.mxu0 0.0
    %2636 = vmatprep.subr.mxu0 0.0
    %2637 = vmatpush1.msra.mxu0 0.0
    %2638 = vmatprep.subr.mxu0 0.0
    %2639 = vmatpush1.msra.mxu0 0.0
    %2640 = vmatprep.subr.mxu0 0.0
    %2641 = vmatpush1.msra.mxu0 0.0
    %2642 = vmatprep.subr.mxu0 0.0
    %2643 = vmatpush1.msra.mxu0 0.0
    %2644 = vmatprep.subr.mxu0 0.0
    %2645 = vmatpush1.msra.mxu0 0.0
    %2646 = vmatprep.subr.mxu0 0.0
    %2647 = vmatpush1.msra.mxu0 0.0
    %2648 = vmatprep.subr.mxu0 0.0
    %2649 = vmatpush1.msra.mxu0 0.0
    %2650 = vmatprep.subr.mxu0 0.0
    %2651 = vmatpush1.msra.mxu0 0.0
    %2652 = vmatprep.subr.mxu0 0.0
    %2653 = vmatpush1.msra.mxu0 0.0
    %2654 = vmatprep.subr.mxu0 0.0
    %2655 = vmatpush1.msra.mxu0 0.0
    %2656 = vmatprep.subr.mxu0 0.0
    %2657 = vmatpush1.msra.mxu0 0.0
    %2658 = vmatprep.subr.mxu0 0.0
    %2659 = vmatpush1.msra.mxu0 0.0
    %2660 = vmatprep.subr.mxu0 0.0
    %2661 = vmatpush1.msra.mxu0 0.0
    %2662 = vmatprep.subr.mxu0 0.0
    %2663 = vmatpush1.msra.mxu0 0.0
    %2664 = vmatprep.subr.mxu0 0.0
    %2665 = vmatpush1.msra.mxu0 0.0
    %2666 = vmatprep.subr.mxu0 0.0
    %2667 = vmatpush1.msra.mxu0 0.0
    %2668 = vmatprep.subr.mxu0 0.0
    %2669 = vmatpush1.msra.mxu0 0.0
    %2670 = vmatprep.subr.mxu0 0.0
    %2671 = vmatpush1.msra.mxu0 0.0
    %2672 = vmatprep.subr.mxu0 0.0
    %2673 = vmatpush1.msra.mxu0 0.0
    %2674 = vmatprep.subr.mxu0 0.0
    %2675 = vmatpush1.msra.mxu0 0.0
    %2676 = vmatprep.subr.mxu0 0.0
    %2677 = vmatpush1.msra.mxu0 0.0
    %2678 = vmatprep.subr.mxu0 0.0
    %2679 = vmatpush1.msra.mxu0 0.0
    %2680 = vmatprep.subr.mxu0 0.0
    %2681 = vmatpush1.msra.mxu0 0.0
    %2682 = vmatprep.subr.mxu0 0.0
    %2683 = vmatpush1.msra.mxu0 0.0
    %2684 = vmatprep.subr.mxu0 0.0
    %2685 = vmatpush1.msra.mxu0 0.0
    %2686 = vmatprep.subr.mxu0 0.0
    %2687 = vmatpush1.msra.mxu0 0.0
    %2688 = vmatprep.subr.mxu0 0.0
    %2689 = vmatpush1.msra.mxu0 0.0
    %2690 = vmatprep.subr.mxu0 0.0
    %2691 = vmatpush1.msra.mxu0 0.0
    %2692 = vmatprep.mubr.f32.mxu0 0.0
    %2693 = vmatmul.mubr.f32.gmra.mrb[0].mxu0 %v2122
    %v2694 = vpop.f32.mrb[0].mxu0
    %v2695 = vadd.f32 %v2092, %v2694
    %v2696 = vpop.f32.mrb[0].mxu0
    %v2697 = vadd.f32 %v2096, %v2696
    %2698 = vmatprep.mubr.f32.mxu0 0.0
    %2699 = vmatmul.mubr.f32.gmra.mrb[0].mxu0 %v2125
    %v2700 = vpop.f32.mrb[0].mxu0
    %v2701 = vadd.f32 %v2092, %v2700
    %v2702 = vpop.f32.mrb[0].mxu0
    %v2703 = vadd.f32 %v2096, %v2702
    %2704 = vmatprep.mubr.f32.mxu0 0.0
    %2705 = vmatmul.mubr.f32.gmra.mrb[0].mxu0 %v2128
    %v2706 = vpop.f32.mrb[0].mxu0
    %v2707 = vadd.f32 %v2092, %v2706
    %v2708 = vpop.f32.mrb[0].mxu0
    %v2709 = vadd.f32 %v2096, %v2708
    %2710 = vdwg.mxu0
    %2711 = vmatprep.subr.mxu0 %v2004
    %2712 = vmatpush1.msra.mxu0 %v2003
    %2713 = vmatprep.subr.mxu0 %v2020
    %2714 = vmatpush1.msra.mxu0 %v2019
    %2715 = vmatprep.subr.mxu0 %v2036
    %2716 = vmatpush1.msra.mxu0 %v2035
    %2717 = vmatprep.subr.mxu0 0.0
    %2718 = vmatpush1.msra.mxu0 0.0
    %2719 = vmatprep.subr.mxu0 0.0
    %2720 = vmatpush1.msra.mxu0 0.0
    %2721 = vmatprep.subr.mxu0 0.0
    %2722 = vmatpush1.msra.mxu0 0.0
    %2723 = vmatprep.subr.mxu0 0.0
    %2724 = vmatpush1.msra.mxu0 0.0
    %2725 = vmatprep.subr.mxu0 0.0
    %2726 = vmatpush1.msra.mxu0 0.0
    %2727 = vmatprep.subr.mxu0 0.0
    %2728 = vmatpush1.msra.mxu0 0.0
    %2729 = vmatprep.subr.mxu0 0.0
    %2730 = vmatpush1.msra.mxu0 0.0
    %2731 = vmatprep.subr.mxu0 0.0
    %2732 = vmatpush1.msra.mxu0 0.0
    %2733 = vmatprep.subr.mxu0 0.0
    %2734 = vmatpush1.msra.mxu0 0.0
    %2735 = vmatprep.subr.mxu0 0.0
    %2736 = vmatpush1.msra.mxu0 0.0
    %2737 = vmatprep.subr.mxu0 0.0
    %2738 = vmatpush1.msra.mxu0 0.0
    %2739 = vmatprep.subr.mxu0 0.0
    %2740 = vmatpush1.msra.mxu0 0.0
    %2741 = vmatprep.subr.mxu0 0.0
    %2742 = vmatpush1.msra.mxu0 0.0
    %2743 = vmatprep.subr.mxu0 0.0
    %2744 = vmatpush1.msra.mxu0 0.0
    %2745 = vmatprep.subr.mxu0 0.0
    %2746 = vmatpush1.msra.mxu0 0.0
    %2747 = vmatprep.subr.mxu0 0.0
    %2748 = vmatpush1.msra.mxu0 0.0
    %2749 = vmatprep.subr.mxu0 0.0
    %2750 = vmatpush1.msra.mxu0 0.0
    %2751 = vmatprep.subr.mxu0 0.0
    %2752 = vmatpush1.msra.mxu0 0.0
    %2753 = vmatprep.subr.mxu0 0.0
    %2754 = vmatpush1.msra.mxu0 0.0
    %2755 = vmatprep.subr.mxu0 0.0
    %2756 = vmatpush1.msra.mxu0 0.0
    %2757 = vmatprep.subr.mxu0 0.0
    %2758 = vmatpush1.msra.mxu0 0.0
    %2759 = vmatprep.subr.mxu0 0.0
    %2760 = vmatpush1.msra.mxu0 0.0
    %2761 = vmatprep.subr.mxu0 0.0
    %2762 = vmatpush1.msra.mxu0 0.0
    %2763 = vmatprep.subr.mxu0 0.0
    %2764 = vmatpush1.msra.mxu0 0.0
    %2765 = vmatprep.subr.mxu0 0.0
    %2766 = vmatpush1.msra.mxu0 0.0
    %2767 = vmatprep.subr.mxu0 0.0
    %2768 = vmatpush1.msra.mxu0 0.0
    %2769 = vmatprep.subr.mxu0 0.0
    %2770 = vmatpush1.msra.mxu0 0.0
    %2771 = vmatprep.subr.mxu0 0.0
    %2772 = vmatpush1.msra.mxu0 0.0
    %2773 = vmatprep.subr.mxu0 0.0
    %2774 = vmatpush1.msra.mxu0 0.0
    %2775 = vmatprep.mubr.f32.mxu0 0.0
    %2776 = vmatmul.mubr.f32.gmra.mrb[0].mxu0 %v2122
    %v2777 = vpop.f32.mrb[0].mxu0
    %v2778 = vadd.f32 %v2100, %v2777
    %v2779 = vpop.f32.mrb[0].mxu0
    %v2780 = vadd.f32 %v2104, %v2779
    %2781 = vmatprep.mubr.f32.mxu0 0.0
    %2782 = vmatmul.mubr.f32.gmra.mrb[0].mxu0 %v2125
    %v2783 = vpop.f32.mrb[0].mxu0
    %v2784 = vadd.f32 %v2100, %v2783
    %v2785 = vpop.f32.mrb[0].mxu0
    %v2786 = vadd.f32 %v2104, %v2785
    %2787 = vmatprep.mubr.f32.mxu0 0.0
    %2788 = vmatmul.mubr.f32.gmra.mrb[0].mxu0 %v2128
    %v2789 = vpop.f32.mrb[0].mxu0
    %v2790 = vadd.f32 %v2100, %v2789
    %v2791 = vpop.f32.mrb[0].mxu0
    %v2792 = vadd.f32 %v2104, %v2791
    %2793 = vdwg.mxu0
    %v2794 = vmax.f32 %v2197, 0.0
    %v2795 = vmax.f32 %v2199, 0.0
    %v2796 = vmax.f32 %v2280, 0.0
    %v2797 = vmax.f32 %v2282, 0.0
    %v2798 = vmax.f32 %v2363, 0.0
    %v2799 = vmax.f32 %v2365, 0.0
    %v2800 = vmax.f32 %v2446, 0.0
    %v2801 = vmax.f32 %v2448, 0.0
    %v2802 = vmax.f32 %v2529, 0.0
    %v2803 = vmax.f32 %v2531, 0.0
    %v2804 = vmax.f32 %v2612, 0.0
    %v2805 = vmax.f32 %v2614, 0.0
    %v2806 = vmax.f32 %v2695, 0.0
    %v2807 = vmax.f32 %v2697, 0.0
    %v2808 = vmax.f32 %v2778, 0.0
    %v2809 = vmax.f32 %v2780, 0.0
    %v2810 = vmax.f32 %v2203, 0.0
    %v2811 = vmax.f32 %v2205, 0.0
    %v2812 = vmax.f32 %v2286, 0.0
    %v2813 = vmax.f32 %v2288, 0.0
    %v2814 = vmax.f32 %v2369, 0.0
    %v2815 = vmax.f32 %v2371, 0.0
    %v2816 = vmax.f32 %v2452, 0.0
    %v2817 = vmax.f32 %v2454, 0.0
    %v2818 = vmax.f32 %v2535, 0.0
    %v2819 = vmax.f32 %v2537, 0.0
    %v2820 = vmax.f32 %v2618, 0.0
    %v2821 = vmax.f32 %v2620, 0.0
    %v2822 = vmax.f32 %v2701, 0.0
    %v2823 = vmax.f32 %v2703, 0.0
    %v2824 = vmax.f32 %v2784, 0.0
    %v2825 = vmax.f32 %v2786, 0.0
    %v2826 = vmax.f32 %v2209, 0.0
    %v2827 = vmax.f32 %v2211, 0.0
    %v2828 = vmax.f32 %v2292, 0.0
    %v2829 = vmax.f32 %v2294, 0.0
    %v2830 = vmax.f32 %v2375, 0.0
    %v2831 = vmax.f32 %v2377, 0.0
    %v2832 = vmax.f32 %v2458, 0.0
    %v2833 = vmax.f32 %v2460, 0.0
    %v2834 = vmax.f32 %v2541, 0.0
    %v2835 = vmax.f32 %v2543, 0.0
    %v2836 = vmax.f32 %v2624, 0.0
    %v2837 = vmax.f32 %v2626, 0.0
    %v2838 = vmax.f32 %v2707, 0.0
    %v2839 = vmax.f32 %v2709, 0.0
    %v2840 = vmax.f32 %v2790, 0.0
    %v2841 = vmax.f32 %v2792, 0.0
    %v2842 = vld [vmem:[%s17] sm:$0xff]
    %v2843 = vld [vmem:[%s17 + $0x8] sm:$0xff]
    %v2844 = vld [vmem:[%s17 + $0x10] sm:$0xff]
    %v2845 = vld [vmem:[%s17 + $0x18] sm:$0xff]
    %v2846 = vld [vmem:[%s17 + $0x20] sm:$0xff]
    %v2847 = vld [vmem:[%s17 + $0x28] sm:$0xff]
    %v2848 = vld [vmem:[%s17 + $0x30] sm:$0xff]
    %v2849 = vld [vmem:[%s17 + $0x38] sm:$0xff]
    %v2850 = vld [vmem:[%s17 + $0x40] sm:$0xff]
    %v2851 = vld [vmem:[%s17 + $0x48] sm:$0xff]
    %v2852 = vld [vmem:[%s17 + $0x50] sm:$0xff]
    %v2853 = vld [vmem:[%s17 + $0x58] sm:$0xff]
    %v2854 = vld [vmem:[%s17 + $0x60] sm:$0xff]
    %v2855 = vld [vmem:[%s17 + $0x68] sm:$0xff]
    %v2856 = vld [vmem:[%s17 + $0x70] sm:$0xff]
    %v2857 = vld [vmem:[%s17 + $0x78] sm:$0xff]
    %v2858 = vld [vmem:[%s17 + $0x80] sm:$0xff]
    %v2859 = vld [vmem:[%s17 + $0x88] sm:$0xff]
    %v2860 = vld [vmem:[%s17 + $0x90] sm:$0xff]
    %v2861 = vld [vmem:[%s17 + $0x98] sm:$0xff]
    %v2862 = vld [vmem:[%s17 + $0xa0] sm:$0xff]
    %v2863 = vld [vmem:[%s17 + $0xa8] sm:$0xff]
    %v2864 = vld [vmem:[%s17 + $0xb0] sm:$0xff]
    %v2865 = vld [vmem:[%s17 + $0xb8] sm:$0xff]
    %v2866 = vld [vmem:[%s17 + $0xc0] sm:$0xff]
    %v2867 = vld [vmem:[%s17 + $0xc8] sm:$0xff]
    %v2868 = vld [vmem:[%s17 + $0xd0] sm:$0xff]
    %v2869 = vld [vmem:[%s17 + $0xd8] sm:$0xff]
    %v2870 = vld [vmem:[%s17 + $0xe0] sm:$0xff]
    %v2871 = vld [vmem:[%s17 + $0xe8] sm:$0xff]
    %v2872 = vld [vmem:[%s17 + $0xf0] sm:$0xff]
    %v2873 = vld [vmem:[%s17 + $0xf8] sm:$0xff]
    %v2874 = vld [vmem:[%s17 + $0x100] sm:$0xff]
    %v2875 = vld [vmem:[%s17 + $0x108] sm:$0xff]
    %v2876 = vld [vmem:[%s17 + $0x110] sm:$0xff]
    %v2877 = vld [vmem:[%s17 + $0x118] sm:$0xff]
    %v2878 = vld [vmem:[%s17 + $0x120] sm:$0xff]
    %v2879 = vld [vmem:[%s17 + $0x128] sm:$0xff]
    %v2880 = vld [vmem:[%s17 + $0x130] sm:$0xff]
    %v2881 = vld [vmem:[%s17 + $0x138] sm:$0xff]
    %v2882 = vld [vmem:[%s17 + $0x140] sm:$0xff]
    %v2883 = vld [vmem:[%s17 + $0x148] sm:$0xff]
    %v2884 = vld [vmem:[%s17 + $0x150] sm:$0xff]
    %v2885 = vld [vmem:[%s17 + $0x158] sm:$0xff]
    %v2886 = vld [vmem:[%s17 + $0x160] sm:$0xff]
    %v2887 = vld [vmem:[%s17 + $0x168] sm:$0xff]
    %v2888 = vld [vmem:[%s17 + $0x170] sm:$0xff]
    %v2889 = vld [vmem:[%s17 + $0x178] sm:$0xff]
    %v2890 = vld [vmem:[%s17 + $0x180] sm:$0xff]
    %v2891 = vld [vmem:[%s17 + $0x188] sm:$0xff]
    %v2892 = vld [vmem:[%s17 + $0x190] sm:$0xff]
    %v2893 = vld [vmem:[%s17 + $0x198] sm:$0xff]
    %v2894 = vld [vmem:[%s17 + $0x1a0] sm:$0xff]
    %v2895 = vld [vmem:[%s17 + $0x1a8] sm:$0xff]
    %v2896 = vld [vmem:[%s17 + $0x1b0] sm:$0xff]
    %v2897 = vld [vmem:[%s17 + $0x1b8] sm:$0xff]
    %v2898 = vld [vmem:[%s17 + $0x1c0] sm:$0xff]
    %v2899 = vld [vmem:[%s17 + $0x1c8] sm:$0xff]
    %v2900 = vld [vmem:[%s17 + $0x1d0] sm:$0xff]
    %v2901 = vld [vmem:[%s17 + $0x1d8] sm:$0xff]
    %v2902 = vld [vmem:[%s17 + $0x1e0] sm:$0xff]
    %v2903 = vld [vmem:[%s17 + $0x1e8] sm:$0xff]
    %v2904 = vld [vmem:[%s17 + $0x1f0] sm:$0xff]
    %v2905 = vld [vmem:[%s17 + $0x1f8] sm:$0xff]
    %v2906 = vld [vmem:[%s17 + $0x200] sm:$0xff]
    %v2907 = vld [vmem:[%s17 + $0x208] sm:$0xff]
    %v2908 = vld [vmem:[%s17 + $0x210] sm:$0xff]
    %v2909 = vld [vmem:[%s17 + $0x218] sm:$0xff]
    %v2910 = vld [vmem:[%s17 + $0x220] sm:$0xff]
    %v2911 = vld [vmem:[%s17 + $0x228] sm:$0xff]
    %v2912 = vld [vmem:[%s17 + $0x230] sm:$0xff]
    %v2913 = vld [vmem:[%s17 + $0x238] sm:$0xff]
    %v2914 = vld [vmem:[%s17 + $0x240] sm:$0xff]
    %v2915 = vld [vmem:[%s17 + $0x248] sm:$0xff]
    %v2916 = vld [vmem:[%s17 + $0x250] sm:$0xff]
    %v2917 = vld [vmem:[%s17 + $0x258] sm:$0xff]
    %v2918 = vld [vmem:[%s17 + $0x260] sm:$0xff]
    %v2919 = vld [vmem:[%s17 + $0x268] sm:$0xff]
    %v2920 = vld [vmem:[%s17 + $0x270] sm:$0xff]
    %v2921 = vld [vmem:[%s17 + $0x278] sm:$0xff]
    %v2922 = vld [vmem:[%s17 + $0x280] sm:$0xff]
    %v2923 = vld [vmem:[%s17 + $0x288] sm:$0xff]
    %v2924 = vld [vmem:[%s17 + $0x290] sm:$0xff]
    %v2925 = vld [vmem:[%s17 + $0x298] sm:$0xff]
    %v2926 = vld [vmem:[%s17 + $0x2a0] sm:$0xff]
    %v2927 = vld [vmem:[%s17 + $0x2a8] sm:$0xff]
    %v2928 = vld [vmem:[%s17 + $0x2b0] sm:$0xff]
    %v2929 = vld [vmem:[%s17 + $0x2b8] sm:$0xff]
    %v2930 = vld [vmem:[%s17 + $0x2c0] sm:$0xff]
    %v2931 = vld [vmem:[%s17 + $0x2c8] sm:$0xff]
    %v2932 = vld [vmem:[%s17 + $0x2d0] sm:$0xff]
    %v2933 = vld [vmem:[%s17 + $0x2d8] sm:$0xff]
    %v2934 = vld [vmem:[%s17 + $0x2e0] sm:$0xff]
    %v2935 = vld [vmem:[%s17 + $0x2e8] sm:$0xff]
    %v2936 = vld [vmem:[%s17 + $0x2f0] sm:$0xff]
    %v2937 = vld [vmem:[%s17 + $0x2f8] sm:$0xff]
    %v2938 = vld [vmem:[%s17 + $0x300] sm:$0xff]
    %v2939 = vld [vmem:[%s17 + $0x308] sm:$0xff]
    %v2940 = vld [vmem:[%s17 + $0x310] sm:$0xff]
    %v2941 = vld [vmem:[%s17 + $0x318] sm:$0xff]
    %v2942 = vld [vmem:[%s17 + $0x320] sm:$0xff]
    %v2943 = vld [vmem:[%s17 + $0x328] sm:$0xff]
    %v2944 = vld [vmem:[%s17 + $0x330] sm:$0xff]
    %v2945 = vld [vmem:[%s17 + $0x338] sm:$0xff]
    %v2946 = vld [vmem:[%s17 + $0x340] sm:$0xff]
    %v2947 = vld [vmem:[%s17 + $0x348] sm:$0xff]
    %v2948 = vld [vmem:[%s17 + $0x350] sm:$0xff]
    %v2949 = vld [vmem:[%s17 + $0x358] sm:$0xff]
    %v2950 = vld [vmem:[%s17 + $0x360] sm:$0xff]
    %v2951 = vld [vmem:[%s17 + $0x368] sm:$0xff]
    %v2952 = vld [vmem:[%s17 + $0x370] sm:$0xff]
    %v2953 = vld [vmem:[%s17 + $0x378] sm:$0xff]
    %v2954 = vld [vmem:[%s17 + $0x380] sm:$0xff]
    %v2955 = vld [vmem:[%s17 + $0x388] sm:$0xff]
    %v2956 = vld [vmem:[%s17 + $0x390] sm:$0xff]
    %v2957 = vld [vmem:[%s17 + $0x398] sm:$0xff]
    %v2958 = vld [vmem:[%s17 + $0x3a0] sm:$0xff]
    %v2959 = vld [vmem:[%s17 + $0x3a8] sm:$0xff]
    %v2960 = vld [vmem:[%s17 + $0x3b0] sm:$0xff]
    %v2961 = vld [vmem:[%s17 + $0x3b8] sm:$0xff]
    %v2962 = vld [vmem:[%s17 + $0x3c0] sm:$0xff]
    %v2963 = vld [vmem:[%s17 + $0x3c8] sm:$0xff]
    %v2964 = vld [vmem:[%s17 + $0x3d0] sm:$0xff]
    %v2965 = vld [vmem:[%s17 + $0x3d8] sm:$0xff]
    %v2966 = vld [vmem:[%s17 + $0x3e0] sm:$0xff]
    %v2967 = vld [vmem:[%s17 + $0x3e8] sm:$0xff]
    %v2968 = vld [vmem:[%s17 + $0x3f0] sm:$0xff]
    %v2969 = vld [vmem:[%s17 + $0x3f8] sm:$0xff]
    %v2970 = vld [vmem:[%s17 + $0x400] sm:$0xff]
    %v2971 = vld [vmem:[%s17 + $0x408] sm:$0xff]
    %v2972 = vld [vmem:[%s17 + $0x410] sm:$0xff]
    %v2973 = vld [vmem:[%s17 + $0x418] sm:$0xff]
    %v2974 = vld [vmem:[%s17 + $0x420] sm:$0xff]
    %v2975 = vld [vmem:[%s17 + $0x428] sm:$0xff]
    %v2976 = vld [vmem:[%s17 + $0x430] sm:$0xff]
    %v2977 = vld [vmem:[%s17 + $0x438] sm:$0xff]
    %v2978 = vld [vmem:[%s17 + $0x440] sm:$0xff]
    %v2979 = vld [vmem:[%s17 + $0x448] sm:$0xff]
    %v2980 = vld [vmem:[%s17 + $0x450] sm:$0xff]
    %v2981 = vld [vmem:[%s17 + $0x458] sm:$0xff]
    %v2982 = vld [vmem:[%s17 + $0x460] sm:$0xff]
    %v2983 = vld [vmem:[%s17 + $0x468] sm:$0xff]
    %v2984 = vld [vmem:[%s17 + $0x470] sm:$0xff]
    %v2985 = vld [vmem:[%s17 + $0x478] sm:$0xff]
    %v2986 = vld [vmem:[%s17 + $0x480] sm:$0xff]
    %v2987 = vld [vmem:[%s17 + $0x488] sm:$0xff]
    %v2988 = vld [vmem:[%s17 + $0x490] sm:$0xff]
    %v2989 = vld [vmem:[%s17 + $0x498] sm:$0xff]
    %v2990 = vld [vmem:[%s17 + $0x4a0] sm:$0xff]
    %v2991 = vld [vmem:[%s17 + $0x4a8] sm:$0xff]
    %v2992 = vld [vmem:[%s17 + $0x4b0] sm:$0xff]
    %v2993 = vld [vmem:[%s17 + $0x4b8] sm:$0xff]
    %v2994 = vld [vmem:[%s17 + $0x4c0] sm:$0xff]
    %v2995 = vld [vmem:[%s17 + $0x4c8] sm:$0xff]
    %v2996 = vld [vmem:[%s17 + $0x4d0] sm:$0xff]
    %v2997 = vld [vmem:[%s17 + $0x4d8] sm:$0xff]
    %v2998 = vld [vmem:[%s17 + $0x4e0] sm:$0xff]
    %v2999 = vld [vmem:[%s17 + $0x4e8] sm:$0xff]
    %v3000 = vld [vmem:[%s17 + $0x4f0] sm:$0xff]
    %v3001 = vld [vmem:[%s17 + $0x4f8] sm:$0xff]
    %v3002 = vld [vmem:[%s17 + $0x500] sm:$0xff]
    %v3003 = vld [vmem:[%s17 + $0x508] sm:$0xff]
    %v3004 = vld [vmem:[%s17 + $0x510] sm:$0xff]
    %v3005 = vld [vmem:[%s17 + $0x518] sm:$0xff]
    %v3006 = vld [vmem:[%s17 + $0x520] sm:$0xff]
    %v3007 = vld [vmem:[%s17 + $0x528] sm:$0xff]
    %v3008 = vld [vmem:[%s17 + $0x530] sm:$0xff]
    %v3009 = vld [vmem:[%s17 + $0x538] sm:$0xff]
    %v3010 = vld [vmem:[%s17 + $0x540] sm:$0xff]
    %v3011 = vld [vmem:[%s17 + $0x548] sm:$0xff]
    %v3012 = vld [vmem:[%s17 + $0x550] sm:$0xff]
    %v3013 = vld [vmem:[%s17 + $0x558] sm:$0xff]
    %v3014 = vld [vmem:[%s17 + $0x560] sm:$0xff]
    %v3015 = vld [vmem:[%s17 + $0x568] sm:$0xff]
    %v3016 = vld [vmem:[%s17 + $0x570] sm:$0xff]
    %v3017 = vld [vmem:[%s17 + $0x578] sm:$0xff]
    %v3018 = vld [vmem:[%s17 + $0x580] sm:$0xff]
    %v3019 = vld [vmem:[%s17 + $0x588] sm:$0xff]
    %v3020 = vld [vmem:[%s17 + $0x590] sm:$0xff]
    %v3021 = vld [vmem:[%s17 + $0x598] sm:$0xff]
    %v3022 = vld [vmem:[%s17 + $0x5a0] sm:$0xff]
    %v3023 = vld [vmem:[%s17 + $0x5a8] sm:$0xff]
    %v3024 = vld [vmem:[%s17 + $0x5b0] sm:$0xff]
    %v3025 = vld [vmem:[%s17 + $0x5b8] sm:$0xff]
    %v3026 = vld [vmem:[%s17 + $0x5c0] sm:$0xff]
    %v3027 = vld [vmem:[%s17 + $0x5c8] sm:$0xff]
    %v3028 = vld [vmem:[%s17 + $0x5d0] sm:$0xff]
    %v3029 = vld [vmem:[%s17 + $0x5d8] sm:$0xff]
    %v3030 = vld [vmem:[%s17 + $0x5e0] sm:$0xff]
    %v3031 = vld [vmem:[%s17 + $0x5e8] sm:$0xff]
    %v3032 = vld [vmem:[%s17 + $0x5f0] sm:$0xff]
    %v3033 = vld [vmem:[%s17 + $0x5f8] sm:$0xff]
    %v3034 = vld [vmem:[%s17 + $0x600] sm:$0xff]
    %v3035 = vld [vmem:[%s17 + $0x608] sm:$0xff]
    %v3036 = vld [vmem:[%s17 + $0x610] sm:$0xff]
    %v3037 = vld [vmem:[%s17 + $0x618] sm:$0xff]
    %v3038 = vld [vmem:[%s17 + $0x620] sm:$0xff]
    %v3039 = vld [vmem:[%s17 + $0x628] sm:$0xff]
    %v3040 = vld [vmem:[%s17 + $0x630] sm:$0xff]
    %v3041 = vld [vmem:[%s17 + $0x638] sm:$0xff]
    %v3042 = vld [vmem:[%s17 + $0x640] sm:$0xff]
    %v3043 = vld [vmem:[%s17 + $0x648] sm:$0xff]
    %v3044 = vld [vmem:[%s17 + $0x650] sm:$0xff]
    %v3045 = vld [vmem:[%s17 + $0x658] sm:$0xff]
    %v3046 = vld [vmem:[%s17 + $0x660] sm:$0xff]
    %v3047 = vld [vmem:[%s17 + $0x668] sm:$0xff]
    %v3048 = vld [vmem:[%s17 + $0x670] sm:$0xff]
    %v3049 = vld [vmem:[%s17 + $0x678] sm:$0xff]
    %v3050 = vld [vmem:[%s17 + $0x680] sm:$0xff]
    %v3051 = vld [vmem:[%s17 + $0x688] sm:$0xff]
    %v3052 = vld [vmem:[%s17 + $0x690] sm:$0xff]
    %v3053 = vld [vmem:[%s17 + $0x698] sm:$0xff]
    %v3054 = vld [vmem:[%s17 + $0x6a0] sm:$0xff]
    %v3055 = vld [vmem:[%s17 + $0x6a8] sm:$0xff]
    %v3056 = vld [vmem:[%s17 + $0x6b0] sm:$0xff]
    %v3057 = vld [vmem:[%s17 + $0x6b8] sm:$0xff]
    %v3058 = vld [vmem:[%s17 + $0x6c0] sm:$0xff]
    %v3059 = vld [vmem:[%s17 + $0x6c8] sm:$0xff]
    %v3060 = vld [vmem:[%s17 + $0x6d0] sm:$0xff]
    %v3061 = vld [vmem:[%s17 + $0x6d8] sm:$0xff]
    %v3062 = vld [vmem:[%s17 + $0x6e0] sm:$0xff]
    %v3063 = vld [vmem:[%s17 + $0x6e8] sm:$0xff]
    %v3064 = vld [vmem:[%s17 + $0x6f0] sm:$0xff]
    %v3065 = vld [vmem:[%s17 + $0x6f8] sm:$0xff]
    %v3066 = vld [vmem:[%s17 + $0x700] sm:$0xff]
    %v3067 = vld [vmem:[%s17 + $0x708] sm:$0xff]
    %v3068 = vld [vmem:[%s17 + $0x710] sm:$0xff]
    %v3069 = vld [vmem:[%s17 + $0x718] sm:$0xff]
    %v3070 = vld [vmem:[%s17 + $0x720] sm:$0xff]
    %v3071 = vld [vmem:[%s17 + $0x728] sm:$0xff]
    %v3072 = vld [vmem:[%s17 + $0x730] sm:$0xff]
    %v3073 = vld [vmem:[%s17 + $0x738] sm:$0xff]
    %v3074 = vld [vmem:[%s17 + $0x740] sm:$0xff]
    %v3075 = vld [vmem:[%s17 + $0x748] sm:$0xff]
    %v3076 = vld [vmem:[%s17 + $0x750] sm:$0xff]
    %v3077 = vld [vmem:[%s17 + $0x758] sm:$0xff]
    %v3078 = vld [vmem:[%s17 + $0x760] sm:$0xff]
    %v3079 = vld [vmem:[%s17 + $0x768] sm:$0xff]
    %v3080 = vld [vmem:[%s17 + $0x770] sm:$0xff]
    %v3081 = vld [vmem:[%s17 + $0x778] sm:$0xff]
    %v3082 = vld [vmem:[%s17 + $0x780] sm:$0xff]
    %v3083 = vld [vmem:[%s17 + $0x788] sm:$0xff]
    %v3084 = vld [vmem:[%s17 + $0x790] sm:$0xff]
    %v3085 = vld [vmem:[%s17 + $0x798] sm:$0xff]
    %v3086 = vld [vmem:[%s17 + $0x7a0] sm:$0xff]
    %v3087 = vld [vmem:[%s17 + $0x7a8] sm:$0xff]
    %v3088 = vld [vmem:[%s17 + $0x7b0] sm:$0xff]
    %v3089 = vld [vmem:[%s17 + $0x7b8] sm:$0xff]
    %v3090 = vld [vmem:[%s17 + $0x7c0] sm:$0xff]
    %v3091 = vld [vmem:[%s17 + $0x7c8] sm:$0xff]
    %v3092 = vld [vmem:[%s17 + $0x7d0] sm:$0xff]
    %v3093 = vld [vmem:[%s17 + $0x7d8] sm:$0xff]
    %v3094 = vld [vmem:[%s17 + $0x7e0] sm:$0xff]
    %v3095 = vld [vmem:[%s17 + $0x7e8] sm:$0xff]
    %v3096 = vld [vmem:[%s17 + $0x7f0] sm:$0xff]
    %v3097 = vld [vmem:[%s17 + $0x7f8] sm:$0xff]
    %v3098 = vld [vmem:[%s18] sm:$0x1]
    %v3100 = vlaneseq
    %v3101 = vshrl.u32 %v3100, 7
    %v3102 = vsub.s32 0, %v3101
    %v3103 = vrot.slane %v3098, %v3102
    %3105 = vmatprep.subr.mxu0 0.0
    %3106 = vmatpush1.msra.mxu0 %v2842
    %3107 = vmatprep.subr.mxu0 0.0
    %3108 = vmatpush1.msra.mxu0 %v2843
    %3109 = vmatprep.subr.mxu0 0.0
    %3110 = vmatpush1.msra.mxu0 %v2844
    %3111 = vmatprep.subr.mxu0 0.0
    %3112 = vmatpush1.msra.mxu0 %v2845
    %3113 = vmatprep.subr.mxu0 0.0
    %3114 = vmatpush1.msra.mxu0 %v2846
    %3115 = vmatprep.subr.mxu0 0.0
    %3116 = vmatpush1.msra.mxu0 %v2847
    %3117 = vmatprep.subr.mxu0 0.0
    %3118 = vmatpush1.msra.mxu0 %v2848
    %3119 = vmatprep.subr.mxu0 0.0
    %3120 = vmatpush1.msra.mxu0 %v2849
    %3121 = vmatprep.subr.mxu0 0.0
    %3122 = vmatpush1.msra.mxu0 %v2850
    %3123 = vmatprep.subr.mxu0 0.0
    %3124 = vmatpush1.msra.mxu0 %v2851
    %3125 = vmatprep.subr.mxu0 0.0
    %3126 = vmatpush1.msra.mxu0 %v2852
    %3127 = vmatprep.subr.mxu0 0.0
    %3128 = vmatpush1.msra.mxu0 %v2853
    %3129 = vmatprep.subr.mxu0 0.0
    %3130 = vmatpush1.msra.mxu0 %v2854
    %3131 = vmatprep.subr.mxu0 0.0
    %3132 = vmatpush1.msra.mxu0 %v2855
    %3133 = vmatprep.subr.mxu0 0.0
    %3134 = vmatpush1.msra.mxu0 %v2856
    %3135 = vmatprep.subr.mxu0 0.0
    %3136 = vmatpush1.msra.mxu0 %v2857
    %3137 = vmatprep.subr.mxu0 0.0
    %3138 = vmatpush1.msra.mxu0 %v2858
    %3139 = vmatprep.subr.mxu0 0.0
    %3140 = vmatpush1.msra.mxu0 %v2859
    %3141 = vmatprep.subr.mxu0 0.0
    %3142 = vmatpush1.msra.mxu0 %v2860
    %3143 = vmatprep.subr.mxu0 0.0
    %3144 = vmatpush1.msra.mxu0 %v2861
    %3145 = vmatprep.subr.mxu0 0.0
    %3146 = vmatpush1.msra.mxu0 %v2862
    %3147 = vmatprep.subr.mxu0 0.0
    %3148 = vmatpush1.msra.mxu0 %v2863
    %3149 = vmatprep.subr.mxu0 0.0
    %3150 = vmatpush1.msra.mxu0 %v2864
    %3151 = vmatprep.subr.mxu0 0.0
    %3152 = vmatpush1.msra.mxu0 %v2865
    %3153 = vmatprep.subr.mxu0 0.0
    %3154 = vmatpush1.msra.mxu0 %v2866
    %3155 = vmatprep.subr.mxu0 0.0
    %3156 = vmatpush1.msra.mxu0 %v2867
    %3157 = vmatprep.subr.mxu0 0.0
    %3158 = vmatpush1.msra.mxu0 %v2868
    %3159 = vmatprep.subr.mxu0 0.0
    %3160 = vmatpush1.msra.mxu0 %v2869
    %3161 = vmatprep.subr.mxu0 0.0
    %3162 = vmatpush1.msra.mxu0 %v2870
    %3163 = vmatprep.subr.mxu0 0.0
    %3164 = vmatpush1.msra.mxu0 %v2871
    %3165 = vmatprep.subr.mxu0 0.0
    %3166 = vmatpush1.msra.mxu0 %v2872
    %3167 = vmatprep.subr.mxu0 0.0
    %3168 = vmatpush1.msra.mxu0 %v2873
    %3169 = vmatprep.mubr.f32.mxu0 %v2795
    %3170 = vmatmul.mubr.f32.gmra.mrb[0].mxu0 %v2794
    %v3171 = vpop.f32.mrb[0].mxu0
    %v3172 = vpop.f32.mrb[0].mxu0
    %3173 = vmatprep.mubr.f32.mxu0 %v2811
    %3174 = vmatmul.mubr.f32.gmra.mrb[0].mxu0 %v2810
    %v3175 = vpop.f32.mrb[0].mxu0
    %v3176 = vadd.f32 %v3103, %v3175
    %v3177 = vpop.f32.mrb[0].mxu0
    %3178 = vmatprep.mubr.f32.mxu0 %v2827
    %3179 = vmatmul.mubr.f32.gmra.mrb[0].mxu0 %v2826
    %v3180 = vpop.f32.mrb[0].mxu0
    %v3181 = vadd.f32 %v3103, %v3180
    %v3182 = vpop.f32.mrb[0].mxu0
    %3183 = vdwg.mxu0
    %3184 = vmatprep.subr.mxu0 0.0
    %3185 = vmatpush1.msra.mxu0 %v2874
    %3186 = vmatprep.subr.mxu0 0.0
    %3187 = vmatpush1.msra.mxu0 %v2875
    %3188 = vmatprep.subr.mxu0 0.0
    %3189 = vmatpush1.msra.mxu0 %v2876
    %3190 = vmatprep.subr.mxu0 0.0
    %3191 = vmatpush1.msra.mxu0 %v2877
    %3192 = vmatprep.subr.mxu0 0.0
    %3193 = vmatpush1.msra.mxu0 %v2878
    %3194 = vmatprep.subr.mxu0 0.0
    %3195 = vmatpush1.msra.mxu0 %v2879
    %3196 = vmatprep.subr.mxu0 0.0
    %3197 = vmatpush1.msra.mxu0 %v2880
    %3198 = vmatprep.subr.mxu0 0.0
    %3199 = vmatpush1.msra.mxu0 %v2881
    %3200 = vmatprep.subr.mxu0 0.0
    %3201 = vmatpush1.msra.mxu0 %v2882
    %3202 = vmatprep.subr.mxu0 0.0
    %3203 = vmatpush1.msra.mxu0 %v2883
    %3204 = vmatprep.subr.mxu0 0.0
    %3205 = vmatpush1.msra.mxu0 %v2884
    %3206 = vmatprep.subr.mxu0 0.0
    %3207 = vmatpush1.msra.mxu0 %v2885
    %3208 = vmatprep.subr.mxu0 0.0
    %3209 = vmatpush1.msra.mxu0 %v2886
    %3210 = vmatprep.subr.mxu0 0.0
    %3211 = vmatpush1.msra.mxu0 %v2887
    %3212 = vmatprep.subr.mxu0 0.0
    %3213 = vmatpush1.msra.mxu0 %v2888
    %3214 = vmatprep.subr.mxu0 0.0
    %3215 = vmatpush1.msra.mxu0 %v2889
    %3216 = vmatprep.subr.mxu0 0.0
    %3217 = vmatpush1.msra.mxu0 %v2890
    %3218 = vmatprep.subr.mxu0 0.0
    %3219 = vmatpush1.msra.mxu0 %v2891
    %3220 = vmatprep.subr.mxu0 0.0
    %3221 = vmatpush1.msra.mxu0 %v2892
    %3222 = vmatprep.subr.mxu0 0.0
    %3223 = vmatpush1.msra.mxu0 %v2893
    %3224 = vmatprep.subr.mxu0 0.0
    %3225 = vmatpush1.msra.mxu0 %v2894
    %3226 = vmatprep.subr.mxu0 0.0
    %3227 = vmatpush1.msra.mxu0 %v2895
    %3228 = vmatprep.subr.mxu0 0.0
    %3229 = vmatpush1.msra.mxu0 %v2896
    %3230 = vmatprep.subr.mxu0 0.0
    %3231 = vmatpush1.msra.mxu0 %v2897
    %3232 = vmatprep.subr.mxu0 0.0
    %3233 = vmatpush1.msra.mxu0 %v2898
    %3234 = vmatprep.subr.mxu0 0.0
    %3235 = vmatpush1.msra.mxu0 %v2899
    %3236 = vmatprep.subr.mxu0 0.0
    %3237 = vmatpush1.msra.mxu0 %v2900
    %3238 = vmatprep.subr.mxu0 0.0
    %3239 = vmatpush1.msra.mxu0 %v2901
    %3240 = vmatprep.subr.mxu0 0.0
    %3241 = vmatpush1.msra.mxu0 %v2902
    %3242 = vmatprep.subr.mxu0 0.0
    %3243 = vmatpush1.msra.mxu0 %v2903
    %3244 = vmatprep.subr.mxu0 0.0
    %3245 = vmatpush1.msra.mxu0 %v2904
    %3246 = vmatprep.subr.mxu0 0.0
    %3247 = vmatpush1.msra.mxu0 %v2905
    %3248 = vmatprep.mubr.f32.mxu0 %v2797
    %3249 = vmatmul.mubr.f32.gmra.mrb[0].mxu0 %v2796
    %v3250 = vpop.f32.mrb[0].mxu0
    %v3251 = vpop.f32.mrb[0].mxu0
    %3252 = vmatprep.mubr.f32.mxu0 %v2813
    %3253 = vmatmul.mubr.f32.gmra.mrb[0].mxu0 %v2812
    %v3254 = vpop.f32.mrb[0].mxu0
    %v3255 = vadd.f32 %v3176, %v3254
    %v3256 = vpop.f32.mrb[0].mxu0
    %3257 = vmatprep.mubr.f32.mxu0 %v2829
    %3258 = vmatmul.mubr.f32.gmra.mrb[0].mxu0 %v2828
    %v3259 = vpop.f32.mrb[0].mxu0
    %v3260 = vadd.f32 %v3181, %v3259
    %v3261 = vpop.f32.mrb[0].mxu0
    %3262 = vdwg.mxu0
    %3263 = vmatprep.subr.mxu0 0.0
    %3264 = vmatpush1.msra.mxu0 %v2906
    %3265 = vmatprep.subr.mxu0 0.0
    %3266 = vmatpush1.msra.mxu0 %v2907
    %3267 = vmatprep.subr.mxu0 0.0
    %3268 = vmatpush1.msra.mxu0 %v2908
    %3269 = vmatprep.subr.mxu0 0.0
    %3270 = vmatpush1.msra.mxu0 %v2909
    %3271 = vmatprep.subr.mxu0 0.0
    %3272 = vmatpush1.msra.mxu0 %v2910
    %3273 = vmatprep.subr.mxu0 0.0
    %3274 = vmatpush1.msra.mxu0 %v2911
    %3275 = vmatprep.subr.mxu0 0.0
    %3276 = vmatpush1.msra.mxu0 %v2912
    %3277 = vmatprep.subr.mxu0 0.0
    %3278 = vmatpush1.msra.mxu0 %v2913
    %3279 = vmatprep.subr.mxu0 0.0
    %3280 = vmatpush1.msra.mxu0 %v2914
    %3281 = vmatprep.subr.mxu0 0.0
    %3282 = vmatpush1.msra.mxu0 %v2915
    %3283 = vmatprep.subr.mxu0 0.0
    %3284 = vmatpush1.msra.mxu0 %v2916
    %3285 = vmatprep.subr.mxu0 0.0
    %3286 = vmatpush1.msra.mxu0 %v2917
    %3287 = vmatprep.subr.mxu0 0.0
    %3288 = vmatpush1.msra.mxu0 %v2918
    %3289 = vmatprep.subr.mxu0 0.0
    %3290 = vmatpush1.msra.mxu0 %v2919
    %3291 = vmatprep.subr.mxu0 0.0
    %3292 = vmatpush1.msra.mxu0 %v2920
    %3293 = vmatprep.subr.mxu0 0.0
    %3294 = vmatpush1.msra.mxu0 %v2921
    %3295 = vmatprep.subr.mxu0 0.0
    %3296 = vmatpush1.msra.mxu0 %v2922
    %3297 = vmatprep.subr.mxu0 0.0
    %3298 = vmatpush1.msra.mxu0 %v2923
    %3299 = vmatprep.subr.mxu0 0.0
    %3300 = vmatpush1.msra.mxu0 %v2924
    %3301 = vmatprep.subr.mxu0 0.0
    %3302 = vmatpush1.msra.mxu0 %v2925
    %3303 = vmatprep.subr.mxu0 0.0
    %3304 = vmatpush1.msra.mxu0 %v2926
    %3305 = vmatprep.subr.mxu0 0.0
    %3306 = vmatpush1.msra.mxu0 %v2927
    %3307 = vmatprep.subr.mxu0 0.0
    %3308 = vmatpush1.msra.mxu0 %v2928
    %3309 = vmatprep.subr.mxu0 0.0
    %3310 = vmatpush1.msra.mxu0 %v2929
    %3311 = vmatprep.subr.mxu0 0.0
    %3312 = vmatpush1.msra.mxu0 %v2930
    %3313 = vmatprep.subr.mxu0 0.0
    %3314 = vmatpush1.msra.mxu0 %v2931
    %3315 = vmatprep.subr.mxu0 0.0
    %3316 = vmatpush1.msra.mxu0 %v2932
    %3317 = vmatprep.subr.mxu0 0.0
    %3318 = vmatpush1.msra.mxu0 %v2933
    %3319 = vmatprep.subr.mxu0 0.0
    %3320 = vmatpush1.msra.mxu0 %v2934
    %3321 = vmatprep.subr.mxu0 0.0
    %3322 = vmatpush1.msra.mxu0 %v2935
    %3323 = vmatprep.subr.mxu0 0.0
    %3324 = vmatpush1.msra.mxu0 %v2936
    %3325 = vmatprep.subr.mxu0 0.0
    %3326 = vmatpush1.msra.mxu0 %v2937
    %3327 = vmatprep.mubr.f32.mxu0 %v2799
    %3328 = vmatmul.mubr.f32.gmra.mrb[0].mxu0 %v2798
    %v3329 = vpop.f32.mrb[0].mxu0
    %v3330 = vpop.f32.mrb[0].mxu0
    %3331 = vmatprep.mubr.f32.mxu0 %v2815
    %3332 = vmatmul.mubr.f32.gmra.mrb[0].mxu0 %v2814
    %v3333 = vpop.f32.mrb[0].mxu0
    %v3334 = vadd.f32 %v3255, %v3333
    %v3335 = vpop.f32.mrb[0].mxu0
    %3336 = vmatprep.mubr.f32.mxu0 %v2831
    %3337 = vmatmul.mubr.f32.gmra.mrb[0].mxu0 %v2830
    %v3338 = vpop.f32.mrb[0].mxu0
    %v3339 = vadd.f32 %v3260, %v3338
    %v3340 = vpop.f32.mrb[0].mxu0
    %3341 = vdwg.mxu0
    %3342 = vmatprep.subr.mxu0 0.0
    %3343 = vmatpush1.msra.mxu0 %v2938
    %3344 = vmatprep.subr.mxu0 0.0
    %3345 = vmatpush1.msra.mxu0 %v2939
    %3346 = vmatprep.subr.mxu0 0.0
    %3347 = vmatpush1.msra.mxu0 %v2940
    %3348 = vmatprep.subr.mxu0 0.0
    %3349 = vmatpush1.msra.mxu0 %v2941
    %3350 = vmatprep.subr.mxu0 0.0
    %3351 = vmatpush1.msra.mxu0 %v2942
    %3352 = vmatprep.subr.mxu0 0.0
    %3353 = vmatpush1.msra.mxu0 %v2943
    %3354 = vmatprep.subr.mxu0 0.0
    %3355 = vmatpush1.msra.mxu0 %v2944
    %3356 = vmatprep.subr.mxu0 0.0
    %3357 = vmatpush1.msra.mxu0 %v2945
    %3358 = vmatprep.subr.mxu0 0.0
    %3359 = vmatpush1.msra.mxu0 %v2946
    %3360 = vmatprep.subr.mxu0 0.0
    %3361 = vmatpush1.msra.mxu0 %v2947
    %3362 = vmatprep.subr.mxu0 0.0
    %3363 = vmatpush1.msra.mxu0 %v2948
    %3364 = vmatprep.subr.mxu0 0.0
    %3365 = vmatpush1.msra.mxu0 %v2949
    %3366 = vmatprep.subr.mxu0 0.0
    %3367 = vmatpush1.msra.mxu0 %v2950
    %3368 = vmatprep.subr.mxu0 0.0
    %3369 = vmatpush1.msra.mxu0 %v2951
    %3370 = vmatprep.subr.mxu0 0.0
    %3371 = vmatpush1.msra.mxu0 %v2952
    %3372 = vmatprep.subr.mxu0 0.0
    %3373 = vmatpush1.msra.mxu0 %v2953
    %3374 = vmatprep.subr.mxu0 0.0
    %3375 = vmatpush1.msra.mxu0 %v2954
    %3376 = vmatprep.subr.mxu0 0.0
    %3377 = vmatpush1.msra.mxu0 %v2955
    %3378 = vmatprep.subr.mxu0 0.0
    %3379 = vmatpush1.msra.mxu0 %v2956
    %3380 = vmatprep.subr.mxu0 0.0
    %3381 = vmatpush1.msra.mxu0 %v2957
    %3382 = vmatprep.subr.mxu0 0.0
    %3383 = vmatpush1.msra.mxu0 %v2958
    %3384 = vmatprep.subr.mxu0 0.0
    %3385 = vmatpush1.msra.mxu0 %v2959
    %3386 = vmatprep.subr.mxu0 0.0
    %3387 = vmatpush1.msra.mxu0 %v2960
    %3388 = vmatprep.subr.mxu0 0.0
    %3389 = vmatpush1.msra.mxu0 %v2961
    %3390 = vmatprep.subr.mxu0 0.0
    %3391 = vmatpush1.msra.mxu0 %v2962
    %3392 = vmatprep.subr.mxu0 0.0
    %3393 = vmatpush1.msra.mxu0 %v2963
    %3394 = vmatprep.subr.mxu0 0.0
    %3395 = vmatpush1.msra.mxu0 %v2964
    %3396 = vmatprep.subr.mxu0 0.0
    %3397 = vmatpush1.msra.mxu0 %v2965
    %3398 = vmatprep.subr.mxu0 0.0
    %3399 = vmatpush1.msra.mxu0 %v2966
    %3400 = vmatprep.subr.mxu0 0.0
    %3401 = vmatpush1.msra.mxu0 %v2967
    %3402 = vmatprep.subr.mxu0 0.0
    %3403 = vmatpush1.msra.mxu0 %v2968
    %3404 = vmatprep.subr.mxu0 0.0
    %3405 = vmatpush1.msra.mxu0 %v2969
    %3406 = vmatprep.mubr.f32.mxu0 %v2801
    %3407 = vmatmul.mubr.f32.gmra.mrb[0].mxu0 %v2800
    %v3408 = vpop.f32.mrb[0].mxu0
    %v3409 = vpop.f32.mrb[0].mxu0
    %3410 = vmatprep.mubr.f32.mxu0 %v2817
    %3411 = vmatmul.mubr.f32.gmra.mrb[0].mxu0 %v2816
    %v3412 = vpop.f32.mrb[0].mxu0
    %v3413 = vadd.f32 %v3334, %v3412
    %v3414 = vpop.f32.mrb[0].mxu0
    %3415 = vmatprep.mubr.f32.mxu0 %v2833
    %3416 = vmatmul.mubr.f32.gmra.mrb[0].mxu0 %v2832
    %v3417 = vpop.f32.mrb[0].mxu0
    %v3418 = vadd.f32 %v3339, %v3417
    %v3419 = vpop.f32.mrb[0].mxu0
    %3420 = vdwg.mxu0
    %3421 = vmatprep.subr.mxu0 0.0
    %3422 = vmatpush1.msra.mxu0 %v2970
    %3423 = vmatprep.subr.mxu0 0.0
    %3424 = vmatpush1.msra.mxu0 %v2971
    %3425 = vmatprep.subr.mxu0 0.0
    %3426 = vmatpush1.msra.mxu0 %v2972
    %3427 = vmatprep.subr.mxu0 0.0
    %3428 = vmatpush1.msra.mxu0 %v2973
    %3429 = vmatprep.subr.mxu0 0.0
    %3430 = vmatpush1.msra.mxu0 %v2974
    %3431 = vmatprep.subr.mxu0 0.0
    %3432 = vmatpush1.msra.mxu0 %v2975
    %3433 = vmatprep.subr.mxu0 0.0
    %3434 = vmatpush1.msra.mxu0 %v2976
    %3435 = vmatprep.subr.mxu0 0.0
    %3436 = vmatpush1.msra.mxu0 %v2977
    %3437 = vmatprep.subr.mxu0 0.0
    %3438 = vmatpush1.msra.mxu0 %v2978
    %3439 = vmatprep.subr.mxu0 0.0
    %3440 = vmatpush1.msra.mxu0 %v2979
    %3441 = vmatprep.subr.mxu0 0.0
    %3442 = vmatpush1.msra.mxu0 %v2980
    %3443 = vmatprep.subr.mxu0 0.0
    %3444 = vmatpush1.msra.mxu0 %v2981
    %3445 = vmatprep.subr.mxu0 0.0
    %3446 = vmatpush1.msra.mxu0 %v2982
    %3447 = vmatprep.subr.mxu0 0.0
    %3448 = vmatpush1.msra.mxu0 %v2983
    %3449 = vmatprep.subr.mxu0 0.0
    %3450 = vmatpush1.msra.mxu0 %v2984
    %3451 = vmatprep.subr.mxu0 0.0
    %3452 = vmatpush1.msra.mxu0 %v2985
    %3453 = vmatprep.subr.mxu0 0.0
    %3454 = vmatpush1.msra.mxu0 %v2986
    %3455 = vmatprep.subr.mxu0 0.0
    %3456 = vmatpush1.msra.mxu0 %v2987
    %3457 = vmatprep.subr.mxu0 0.0
    %3458 = vmatpush1.msra.mxu0 %v2988
    %3459 = vmatprep.subr.mxu0 0.0
    %3460 = vmatpush1.msra.mxu0 %v2989
    %3461 = vmatprep.subr.mxu0 0.0
    %3462 = vmatpush1.msra.mxu0 %v2990
    %3463 = vmatprep.subr.mxu0 0.0
    %3464 = vmatpush1.msra.mxu0 %v2991
    %3465 = vmatprep.subr.mxu0 0.0
    %3466 = vmatpush1.msra.mxu0 %v2992
    %3467 = vmatprep.subr.mxu0 0.0
    %3468 = vmatpush1.msra.mxu0 %v2993
    %3469 = vmatprep.subr.mxu0 0.0
    %3470 = vmatpush1.msra.mxu0 %v2994
    %3471 = vmatprep.subr.mxu0 0.0
    %3472 = vmatpush1.msra.mxu0 %v2995
    %3473 = vmatprep.subr.mxu0 0.0
    %3474 = vmatpush1.msra.mxu0 %v2996
    %3475 = vmatprep.subr.mxu0 0.0
    %3476 = vmatpush1.msra.mxu0 %v2997
    %3477 = vmatprep.subr.mxu0 0.0
    %3478 = vmatpush1.msra.mxu0 %v2998
    %3479 = vmatprep.subr.mxu0 0.0
    %3480 = vmatpush1.msra.mxu0 %v2999
    %3481 = vmatprep.subr.mxu0 0.0
    %3482 = vmatpush1.msra.mxu0 %v3000
    %3483 = vmatprep.subr.mxu0 0.0
    %3484 = vmatpush1.msra.mxu0 %v3001
    %3485 = vmatprep.mubr.f32.mxu0 %v2803
    %3486 = vmatmul.mubr.f32.gmra.mrb[0].mxu0 %v2802
    %v3487 = vpop.f32.mrb[0].mxu0
    %v3488 = vpop.f32.mrb[0].mxu0
    %3489 = vmatprep.mubr.f32.mxu0 %v2819
    %3490 = vmatmul.mubr.f32.gmra.mrb[0].mxu0 %v2818
    %v3491 = vpop.f32.mrb[0].mxu0
    %v3492 = vadd.f32 %v3413, %v3491
    %v3493 = vpop.f32.mrb[0].mxu0
    %3494 = vmatprep.mubr.f32.mxu0 %v2835
    %3495 = vmatmul.mubr.f32.gmra.mrb[0].mxu0 %v2834
    %v3496 = vpop.f32.mrb[0].mxu0
    %v3497 = vadd.f32 %v3418, %v3496
    %v3498 = vpop.f32.mrb[0].mxu0
    %3499 = vdwg.mxu0
    %3500 = vmatprep.subr.mxu0 0.0
    %3501 = vmatpush1.msra.mxu0 %v3002
    %3502 = vmatprep.subr.mxu0 0.0
    %3503 = vmatpush1.msra.mxu0 %v3003
    %3504 = vmatprep.subr.mxu0 0.0
    %3505 = vmatpush1.msra.mxu0 %v3004
    %3506 = vmatprep.subr.mxu0 0.0
    %3507 = vmatpush1.msra.mxu0 %v3005
    %3508 = vmatprep.subr.mxu0 0.0
    %3509 = vmatpush1.msra.mxu0 %v3006
    %3510 = vmatprep.subr.mxu0 0.0
    %3511 = vmatpush1.msra.mxu0 %v3007
    %3512 = vmatprep.subr.mxu0 0.0
    %3513 = vmatpush1.msra.mxu0 %v3008
    %3514 = vmatprep.subr.mxu0 0.0
    %3515 = vmatpush1.msra.mxu0 %v3009
    %3516 = vmatprep.subr.mxu0 0.0
    %3517 = vmatpush1.msra.mxu0 %v3010
    %3518 = vmatprep.subr.mxu0 0.0
    %3519 = vmatpush1.msra.mxu0 %v3011
    %3520 = vmatprep.subr.mxu0 0.0
    %3521 = vmatpush1.msra.mxu0 %v3012
    %3522 = vmatprep.subr.mxu0 0.0
    %3523 = vmatpush1.msra.mxu0 %v3013
    %3524 = vmatprep.subr.mxu0 0.0
    %3525 = vmatpush1.msra.mxu0 %v3014
    %3526 = vmatprep.subr.mxu0 0.0
    %3527 = vmatpush1.msra.mxu0 %v3015
    %3528 = vmatprep.subr.mxu0 0.0
    %3529 = vmatpush1.msra.mxu0 %v3016
    %3530 = vmatprep.subr.mxu0 0.0
    %3531 = vmatpush1.msra.mxu0 %v3017
    %3532 = vmatprep.subr.mxu0 0.0
    %3533 = vmatpush1.msra.mxu0 %v3018
    %3534 = vmatprep.subr.mxu0 0.0
    %3535 = vmatpush1.msra.mxu0 %v3019
    %3536 = vmatprep.subr.mxu0 0.0
    %3537 = vmatpush1.msra.mxu0 %v3020
    %3538 = vmatprep.subr.mxu0 0.0
    %3539 = vmatpush1.msra.mxu0 %v3021
    %3540 = vmatprep.subr.mxu0 0.0
    %3541 = vmatpush1.msra.mxu0 %v3022
    %3542 = vmatprep.subr.mxu0 0.0
    %3543 = vmatpush1.msra.mxu0 %v3023
    %3544 = vmatprep.subr.mxu0 0.0
    %3545 = vmatpush1.msra.mxu0 %v3024
    %3546 = vmatprep.subr.mxu0 0.0
    %3547 = vmatpush1.msra.mxu0 %v3025
    %3548 = vmatprep.subr.mxu0 0.0
    %3549 = vmatpush1.msra.mxu0 %v3026
    %3550 = vmatprep.subr.mxu0 0.0
    %3551 = vmatpush1.msra.mxu0 %v3027
    %3552 = vmatprep.subr.mxu0 0.0
    %3553 = vmatpush1.msra.mxu0 %v3028
    %3554 = vmatprep.subr.mxu0 0.0
    %3555 = vmatpush1.msra.mxu0 %v3029
    %3556 = vmatprep.subr.mxu0 0.0
    %3557 = vmatpush1.msra.mxu0 %v3030
    %3558 = vmatprep.subr.mxu0 0.0
    %3559 = vmatpush1.msra.mxu0 %v3031
    %3560 = vmatprep.subr.mxu0 0.0
    %3561 = vmatpush1.msra.mxu0 %v3032
    %3562 = vmatprep.subr.mxu0 0.0
    %3563 = vmatpush1.msra.mxu0 %v3033
    %3564 = vmatprep.mubr.f32.mxu0 %v2805
    %3565 = vmatmul.mubr.f32.gmra.mrb[0].mxu0 %v2804
    %v3566 = vpop.f32.mrb[0].mxu0
    %v3567 = vpop.f32.mrb[0].mxu0
    %3568 = vmatprep.mubr.f32.mxu0 %v2821
    %3569 = vmatmul.mubr.f32.gmra.mrb[0].mxu0 %v2820
    %v3570 = vpop.f32.mrb[0].mxu0
    %v3571 = vadd.f32 %v3492, %v3570
    %v3572 = vpop.f32.mrb[0].mxu0
    %3573 = vmatprep.mubr.f32.mxu0 %v2837
    %3574 = vmatmul.mubr.f32.gmra.mrb[0].mxu0 %v2836
    %v3575 = vpop.f32.mrb[0].mxu0
    %v3576 = vadd.f32 %v3497, %v3575
    %v3577 = vpop.f32.mrb[0].mxu0
    %3578 = vdwg.mxu0
    %3579 = vmatprep.subr.mxu0 0.0
    %3580 = vmatpush1.msra.mxu0 %v3034
    %3581 = vmatprep.subr.mxu0 0.0
    %3582 = vmatpush1.msra.mxu0 %v3035
    %3583 = vmatprep.subr.mxu0 0.0
    %3584 = vmatpush1.msra.mxu0 %v3036
    %3585 = vmatprep.subr.mxu0 0.0
    %3586 = vmatpush1.msra.mxu0 %v3037
    %3587 = vmatprep.subr.mxu0 0.0
    %3588 = vmatpush1.msra.mxu0 %v3038
    %3589 = vmatprep.subr.mxu0 0.0
    %3590 = vmatpush1.msra.mxu0 %v3039
    %3591 = vmatprep.subr.mxu0 0.0
    %3592 = vmatpush1.msra.mxu0 %v3040
    %3593 = vmatprep.subr.mxu0 0.0
    %3594 = vmatpush1.msra.mxu0 %v3041
    %3595 = vmatprep.subr.mxu0 0.0
    %3596 = vmatpush1.msra.mxu0 %v3042
    %3597 = vmatprep.subr.mxu0 0.0
    %3598 = vmatpush1.msra.mxu0 %v3043
    %3599 = vmatprep.subr.mxu0 0.0
    %3600 = vmatpush1.msra.mxu0 %v3044
    %3601 = vmatprep.subr.mxu0 0.0
    %3602 = vmatpush1.msra.mxu0 %v3045
    %3603 = vmatprep.subr.mxu0 0.0
    %3604 = vmatpush1.msra.mxu0 %v3046
    %3605 = vmatprep.subr.mxu0 0.0
    %3606 = vmatpush1.msra.mxu0 %v3047
    %3607 = vmatprep.subr.mxu0 0.0
    %3608 = vmatpush1.msra.mxu0 %v3048
    %3609 = vmatprep.subr.mxu0 0.0
    %3610 = vmatpush1.msra.mxu0 %v3049
    %3611 = vmatprep.subr.mxu0 0.0
    %3612 = vmatpush1.msra.mxu0 %v3050
    %3613 = vmatprep.subr.mxu0 0.0
    %3614 = vmatpush1.msra.mxu0 %v3051
    %3615 = vmatprep.subr.mxu0 0.0
    %3616 = vmatpush1.msra.mxu0 %v3052
    %3617 = vmatprep.subr.mxu0 0.0
    %3618 = vmatpush1.msra.mxu0 %v3053
    %3619 = vmatprep.subr.mxu0 0.0
    %3620 = vmatpush1.msra.mxu0 %v3054
    %3621 = vmatprep.subr.mxu0 0.0
    %3622 = vmatpush1.msra.mxu0 %v3055
    %3623 = vmatprep.subr.mxu0 0.0
    %3624 = vmatpush1.msra.mxu0 %v3056
    %3625 = vmatprep.subr.mxu0 0.0
    %3626 = vmatpush1.msra.mxu0 %v3057
    %3627 = vmatprep.subr.mxu0 0.0
    %3628 = vmatpush1.msra.mxu0 %v3058
    %3629 = vmatprep.subr.mxu0 0.0
    %3630 = vmatpush1.msra.mxu0 %v3059
    %3631 = vmatprep.subr.mxu0 0.0
    %3632 = vmatpush1.msra.mxu0 %v3060
    %3633 = vmatprep.subr.mxu0 0.0
    %3634 = vmatpush1.msra.mxu0 %v3061
    %3635 = vmatprep.subr.mxu0 0.0
    %3636 = vmatpush1.msra.mxu0 %v3062
    %3637 = vmatprep.subr.mxu0 0.0
    %3638 = vmatpush1.msra.mxu0 %v3063
    %3639 = vmatprep.subr.mxu0 0.0
    %3640 = vmatpush1.msra.mxu0 %v3064
    %3641 = vmatprep.subr.mxu0 0.0
    %3642 = vmatpush1.msra.mxu0 %v3065
    %3643 = vmatprep.mubr.f32.mxu0 %v2807
    %3644 = vmatmul.mubr.f32.gmra.mrb[0].mxu0 %v2806
    %v3645 = vpop.f32.mrb[0].mxu0
    %v3646 = vpop.f32.mrb[0].mxu0
    %3647 = vmatprep.mubr.f32.mxu0 %v2823
    %3648 = vmatmul.mubr.f32.gmra.mrb[0].mxu0 %v2822
    %v3649 = vpop.f32.mrb[0].mxu0
    %v3650 = vadd.f32 %v3571, %v3649
    %v3651 = vpop.f32.mrb[0].mxu0
    %3652 = vmatprep.mubr.f32.mxu0 %v2839
    %3653 = vmatmul.mubr.f32.gmra.mrb[0].mxu0 %v2838
    %v3654 = vpop.f32.mrb[0].mxu0
    %v3655 = vadd.f32 %v3576, %v3654
    %v3656 = vpop.f32.mrb[0].mxu0
    %3657 = vdwg.mxu0
    %3658 = vmatprep.subr.mxu0 0.0
    %3659 = vmatpush1.msra.mxu0 %v3066
    %3660 = vmatprep.subr.mxu0 0.0
    %3661 = vmatpush1.msra.mxu0 %v3067
    %3662 = vmatprep.subr.mxu0 0.0
    %3663 = vmatpush1.msra.mxu0 %v3068
    %3664 = vmatprep.subr.mxu0 0.0
    %3665 = vmatpush1.msra.mxu0 %v3069
    %3666 = vmatprep.subr.mxu0 0.0
    %3667 = vmatpush1.msra.mxu0 %v3070
    %3668 = vmatprep.subr.mxu0 0.0
    %3669 = vmatpush1.msra.mxu0 %v3071
    %3670 = vmatprep.subr.mxu0 0.0
    %3671 = vmatpush1.msra.mxu0 %v3072
    %3672 = vmatprep.subr.mxu0 0.0
    %3673 = vmatpush1.msra.mxu0 %v3073
    %3674 = vmatprep.subr.mxu0 0.0
    %3675 = vmatpush1.msra.mxu0 %v3074
    %3676 = vmatprep.subr.mxu0 0.0
    %3677 = vmatpush1.msra.mxu0 %v3075
    %3678 = vmatprep.subr.mxu0 0.0
    %3679 = vmatpush1.msra.mxu0 %v3076
    %3680 = vmatprep.subr.mxu0 0.0
    %3681 = vmatpush1.msra.mxu0 %v3077
    %3682 = vmatprep.subr.mxu0 0.0
    %3683 = vmatpush1.msra.mxu0 %v3078
    %3684 = vmatprep.subr.mxu0 0.0
    %3685 = vmatpush1.msra.mxu0 %v3079
    %3686 = vmatprep.subr.mxu0 0.0
    %3687 = vmatpush1.msra.mxu0 %v3080
    %3688 = vmatprep.subr.mxu0 0.0
    %3689 = vmatpush1.msra.mxu0 %v3081
    %3690 = vmatprep.subr.mxu0 0.0
    %3691 = vmatpush1.msra.mxu0 %v3082
    %3692 = vmatprep.subr.mxu0 0.0
    %3693 = vmatpush1.msra.mxu0 %v3083
    %3694 = vmatprep.subr.mxu0 0.0
    %3695 = vmatpush1.msra.mxu0 %v3084
    %3696 = vmatprep.subr.mxu0 0.0
    %3697 = vmatpush1.msra.mxu0 %v3085
    %3698 = vmatprep.subr.mxu0 0.0
    %3699 = vmatpush1.msra.mxu0 %v3086
    %3700 = vmatprep.subr.mxu0 0.0
    %3701 = vmatpush1.msra.mxu0 %v3087
    %3702 = vmatprep.subr.mxu0 0.0
    %3703 = vmatpush1.msra.mxu0 %v3088
    %3704 = vmatprep.subr.mxu0 0.0
    %3705 = vmatpush1.msra.mxu0 %v3089
    %3706 = vmatprep.subr.mxu0 0.0
    %3707 = vmatpush1.msra.mxu0 %v3090
    %3708 = vmatprep.subr.mxu0 0.0
    %3709 = vmatpush1.msra.mxu0 %v3091
    %3710 = vmatprep.subr.mxu0 0.0
    %3711 = vmatpush1.msra.mxu0 %v3092
    %3712 = vmatprep.subr.mxu0 0.0
    %3713 = vmatpush1.msra.mxu0 %v3093
    %3714 = vmatprep.subr.mxu0 0.0
    %3715 = vmatpush1.msra.mxu0 %v3094
    %3716 = vmatprep.subr.mxu0 0.0
    %3717 = vmatpush1.msra.mxu0 %v3095
    %3718 = vmatprep.subr.mxu0 0.0
    %3719 = vmatpush1.msra.mxu0 %v3096
    %3720 = vmatprep.subr.mxu0 0.0
    %3721 = vmatpush1.msra.mxu0 %v3097
    %3722 = vmatprep.mubr.f32.mxu0 %v2809
    %3723 = vmatmul.mubr.f32.gmra.mrb[0].mxu0 %v2808
    %v3724 = vpop.f32.mrb[0].mxu0
    %v3725 = vpop.f32.mrb[0].mxu0
    %3726 = vmatprep.mubr.f32.mxu0 %v2825
    %3727 = vmatmul.mubr.f32.gmra.mrb[0].mxu0 %v2824
    %v3728 = vpop.f32.mrb[0].mxu0
    %v3729 = vadd.f32 %v3650, %v3728
    %v3730 = vpop.f32.mrb[0].mxu0
    %3731 = vmatprep.mubr.f32.mxu0 %v2841
    %3732 = vmatmul.mubr.f32.gmra.mrb[0].mxu0 %v2840
    %v3733 = vpop.f32.mrb[0].mxu0
    %v3734 = vadd.f32 %v3655, %v3733
    %v3735 = vpop.f32.mrb[0].mxu0
    %3736 = vdwg.mxu0
    %v3737 = vadd.f32 %v1987, %v3729
    %v3738 = vadd.f32 %v1988, %v3734
    %v3739 = vld [vmem:[%s13] sm:$0x1]
    %v3740 = vld [vmem:[%s14] sm:$0x1]
    %v3741 = vsel %vm106, %v3737, 0.0
    %3742 = vadd.xlane.f32.xlu0 %v3741
    %v3743 = vpop.xlane.xlu0 %3742
    %v3744 = vsel %vm1261, %v3738, 0.0
    %3745 = vadd.xlane.f32.xlu0 %v3744
    %v3746 = vpop.xlane.xlu0 %3745
    %v3747 = vmul.f32 %v3743, %v1940
    %v3748 = vmul.f32 %v3746, %v1940
    %v3749 = vsub.f32 %v3737, %v3747
    %v3750 = vsub.f32 %v3738, %v3748
    %v3751 = vmul.f32 %v3749, %v3749
    %v3752 = vmul.f32 %v3750, %v3750
    %v3753 = vsel %vm106, %v3751, 0.0
    %3754 = vadd.xlane.f32.xlu0 %v3753
    %v3755 = vpop.xlane.xlu0 %3754
    %v3756 = vsel %vm1261, %v3752, 0.0
    %3757 = vadd.xlane.f32.xlu0 %v3756
    %v3758 = vpop.xlane.xlu0 %3757
    %v3759 = vmul.f32 %v3755, %v1940
    %v3760 = vmul.f32 %v3758, %v1940
    %v3761 = vadd.f32 %v3759, 1e-05
    %v3762 = vadd.f32 %v3760, 1e-05
    %v3763 = vrsqrt.pop %v3761
    %v3764 = vrsqrt.pop %v3762
    %v3765 = vmul.f32 %v3749, %v3763
    %v3766 = vmul.f32 %v3750, %v3764
    %v3768 = vlaneseq
    %v3769 = vshrl.u32 %v3768, 7
    %v3770 = vsub.s32 0, %v3769
    %v3771 = vrot.slane %v3739, %v3770
    %v3773 = vmul.f32 %v3765, %v3771
    %v3774 = vmul.f32 %v3766, %v3771
    %v3776 = vlaneseq
    %v3777 = vshrl.u32 %v3776, 7
    %v3778 = vsub.s32 0, %v3777
    %v3779 = vrot.slane %v3740, %v3778
    %v3781 = vadd.f32 %v3773, %v3779
    %v3782 = vadd.f32 %v3774, %v3779
    %v3783 = vmax.f32 %v3781, 0.0
    %v3784 = vmax.f32 %v3782, 0.0
    %s3785 = sld [smem:[#allocation2 + $0x80]]
    %v3786 = vstv %s3785
    %v3787 = vmul.f32 %v3786, %v3783
    %s3788 = sld [smem:[#allocation2 + $0x81]]
    %v3789 = vstv %s3788
    %v3790 = vmul.f32 %v3789, %v3784
    %v3792 = vrot.slane %v3790, 2
    %v3794 = vadd.f32 %v3787, %v3792
    %s3795 = sld [smem:[#allocation5 + $0x1]]
    %v3796 = vstv %s3795
    %v3797 = vadd.f32 %v3794, %v3796
    %v3798 = vmax.f32 %v3797, 0.0
    %v3799 = vld [vmem:[%s19] sm:$0xff]
    %v3800 = vld [vmem:[%s19 + $0x8] sm:$0xff]
    %v3801 = vld [vmem:[%s19 + $0x10] sm:$0xff]
    %v3802 = vld [vmem:[%s20] sm:$0x1]
    %v3804 = vrot.slane %v3798, 1
    %v3805 = vsel %vm106, %v3804, 0
    %3807 = vmatprep.subr.mxu0 0.0
    %3808 = vmatpush1.msra.mxu0 %v3799
    %3809 = vmatprep.subr.mxu0 0.0
    %3810 = vmatpush1.msra.mxu0 %v3800
    %3811 = vmatprep.subr.mxu0 0.0
    %3812 = vmatpush1.msra.mxu0 %v3801
    %3813 = vmatprep.subr.mxu0 0.0
    %3814 = vmatpush1.msra.mxu0 0.0
    %3815 = vmatprep.subr.mxu0 0.0
    %3816 = vmatpush1.msra.mxu0 0.0
    %3817 = vmatprep.subr.mxu0 0.0
    %3818 = vmatpush1.msra.mxu0 0.0
    %3819 = vmatprep.subr.mxu0 0.0
    %3820 = vmatpush1.msra.mxu0 0.0
    %3821 = vmatprep.subr.mxu0 0.0
    %3822 = vmatpush1.msra.mxu0 0.0
    %3823 = vmatprep.subr.mxu0 0.0
    %3824 = vmatpush1.msra.mxu0 0.0
    %3825 = vmatprep.subr.mxu0 0.0
    %3826 = vmatpush1.msra.mxu0 0.0
    %3827 = vmatprep.subr.mxu0 0.0
    %3828 = vmatpush1.msra.mxu0 0.0
    %3829 = vmatprep.subr.mxu0 0.0
    %3830 = vmatpush1.msra.mxu0 0.0
    %3831 = vmatprep.subr.mxu0 0.0
    %3832 = vmatpush1.msra.mxu0 0.0
    %3833 = vmatprep.subr.mxu0 0.0
    %3834 = vmatpush1.msra.mxu0 0.0
    %3835 = vmatprep.subr.mxu0 0.0
    %3836 = vmatpush1.msra.mxu0 0.0
    %3837 = vmatprep.subr.mxu0 0.0
    %3838 = vmatpush1.msra.mxu0 0.0
    %3839 = vmatprep.subr.mxu0 0.0
    %3840 = vmatpush1.msra.mxu0 0.0
    %3841 = vmatprep.subr.mxu0 0.0
    %3842 = vmatpush1.msra.mxu0 0.0
    %3843 = vmatprep.subr.mxu0 0.0
    %3844 = vmatpush1.msra.mxu0 0.0
    %3845 = vmatprep.subr.mxu0 0.0
    %3846 = vmatpush1.msra.mxu0 0.0
    %3847 = vmatprep.subr.mxu0 0.0
    %3848 = vmatpush1.msra.mxu0 0.0
    %3849 = vmatprep.subr.mxu0 0.0
    %3850 = vmatpush1.msra.mxu0 0.0
    %3851 = vmatprep.subr.mxu0 0.0
    %3852 = vmatpush1.msra.mxu0 0.0
    %3853 = vmatprep.subr.mxu0 0.0
    %3854 = vmatpush1.msra.mxu0 0.0
    %3855 = vmatprep.subr.mxu0 0.0
    %3856 = vmatpush1.msra.mxu0 0.0
    %3857 = vmatprep.subr.mxu0 0.0
    %3858 = vmatpush1.msra.mxu0 0.0
    %3859 = vmatprep.subr.mxu0 0.0
    %3860 = vmatpush1.msra.mxu0 0.0
    %3861 = vmatprep.subr.mxu0 0.0
    %3862 = vmatpush1.msra.mxu0 0.0
    %3863 = vmatprep.subr.mxu0 0.0
    %3864 = vmatpush1.msra.mxu0 0.0
    %3865 = vmatprep.subr.mxu0 0.0
    %3866 = vmatpush1.msra.mxu0 0.0
    %3867 = vmatprep.subr.mxu0 0.0
    %3868 = vmatpush1.msra.mxu0 0.0
    %3869 = vmatprep.subr.mxu0 0.0
    %3870 = vmatpush1.msra.mxu0 0.0
    %3871 = vmatprep.mubr.f32.mxu0 0.0
    %3872 = vmatmul.mubr.f32.gmra.mrb[0].mxu0 %v3805
    %v3873 = vpop.f32.mrb[0].mxu0
    %v3874 = vadd.f32 %v3802, %v3873
    %v3875 = vpop.f32.mrb[0].mxu0
    %3876 = vdwg.mxu0
    %v3877 = vmax.f32 %v3874, 0.0
    %vm3878 = vcmask 155648
    %3879 = vst.msk [vmem:[#allocation7] sm:$0x1] %vm3878, %v3877
    // Predicated region
    $region102: #{transformer_forward.1} parent=1 // pred_check
      _
    $region103: #{transformer_forward.1} parent=1 // pred_check_branch
      %3881 = sbr.rel (0) target = $region105
    $region104: #{transformer_forward.1} parent=1 // pred_region
      %s3883 = ssub.s32 16, 16
      %3884 = vsyncadd [#allocation3], %s3883
      %s3886 = sshll.u32 [#allocation7], 4
      %s3887 = int_to_ptr.vmem [resolvable:$true] %s3886
      %3889 = dma.vmem_to_hbm [thread:$0]  %s3887, 16, %s23, [#allocation3]
    $region105: #{transformer_forward.1} parent=1 // pred_fallthru
      _
    // Predicated region
    $region106: #{transformer_forward.1} parent=1 // pred_check
      _
    $region107: #{transformer_forward.1} parent=1 // pred_check_branch
      %3891 = sbr.rel (0) target = $region109
    $region108: #{transformer_forward.1} parent=1 // pred_region
      %3892 = dma.done [#allocation3], 16
    $region109: #{transformer_forward.1} parent=1 // pred_fallthru
      _
    %3893 = vsyncpa [#allocation3], 1
    %3894 = vsyncpa [#allocation4], 1
    %3895 = vsyncpa [#allocation6], 1

</llo_original>
